<compile_context>
chip_gen: v5e
topology: v5e:2x2
jax: 0.10.0
libtpu: 0.0.40
codegen_flags: <defaults>
</compile_context>

<pallas_src>
import functools
import math

import jax
import jax.numpy as jnp
from jax import lax
from jax.experimental import pallas as pl
from jax.experimental.pallas import tpu as pltpu

# ----------------- scaled-down config (vit-large values in comments) -----------------
PATCH = 16            # same as vit_large_patch16_224
EMBED = 128           # vit-large: 1024
DEPTH = 2             # vit-large: 24
HEADS = 4             # vit-large: 16
MLP_RATIO = 4         # vit-large: 4
NUM_CLASSES = 10
LN_EPS = 1e-6
HEAD_DIM = EMBED // HEADS
HEAD_PAD = 128        # lane-dense padded width for the classification head output


def _round_up(x, m):
    return (x + m - 1) // m * m


def _pick_tile(dim, prefs):
    for t in prefs:
        if dim >= t and dim % t == 0:
            return t
    return dim   # fall back to the full axis (legal: block equals full array dim)


@functools.lru_cache(maxsize=None)
def _vmem_limit_bytes():
    # Per-generation scoped-VMEM budget: ~3/4 of physical capacity
    # (≈96 MiB on v5e/v6e's 128 MiB, ≈48 MiB on v7x's 64 MiB).
    try:
        cap = pltpu.get_tpu_info().vmem_capacity_bytes
    except Exception:
        cap = 64 * 1024 * 1024
    lim = (cap * 3) // 4
    return int(min(max(lim, 32 * 1024 * 1024), 112 * 1024 * 1024))


# ----------------------------- in-kernel math helpers -----------------------------
def _layernorm_f32(x, g, b):
    mu = jnp.mean(x, axis=-1, keepdims=True)
    var = jnp.mean((x - mu) * (x - mu), axis=-1, keepdims=True)
    return (x - mu) * lax.rsqrt(var + LN_EPS) * g + b


def _gelu_tanh(x):
    # tanh-form GELU: tanh runs on the EUP (its own VLIW slot), unlike a ~10-VALU-op erf poly.
    return 0.5 * x * (1.0 + jnp.tanh(0.7978845608028654 * (x + 0.044715 * x * x * x)))


# ----------------------------- tiled matmul + bias -----------------------------
def matmul_bias_kernel(x_ref, w_ref, b_ref, o_ref, acc_ref):
    @pl.when(pl.program_id(2) == 0)
    def _():
        acc_ref[...] = jnp.zeros_like(acc_ref)

    acc_ref[...] += jnp.dot(x_ref[...], w_ref[...], preferred_element_type=jnp.float32)

    @pl.when(pl.program_id(2) == pl.num_programs(2) - 1)
    def _():
        o_ref[...] = (acc_ref[...] + b_ref[...]).astype(o_ref.dtype)


def matmul_bias(x, w, b, out_dtype=jnp.float32):
    M, K = x.shape
    K2, N = w.shape
    assert K == K2
    b = b.reshape(1, N)

    # Row tile: never below 16 (bf16 packs 16 rows per vreg); pad M up to the tile so the
    # real patch-embed (M = B*196 -> e.g. 392) runs full 256-row MXU passes instead of the
    # old tm=8 fallback.
    if M >= 256:
        tm = 256
    elif M >= 128:
        tm = 128
    else:
        tm = _round_up(max(M, 16), 16)
    M_pad = _round_up(M, tm)
    if M_pad != M:
        x = jnp.pad(x, ((0, M_pad - M), (0, 0)))

    tn = _pick_tile(N, (512, 256, 128))
    tk = _pick_tile(K, (512, 256, 128))
    grid = (M_pad // tm, N // tn, K // tk)
    cost = pl.CostEstimate(flops=2 * M_pad * N * K, transcendentals=0,
                           bytes_accessed=2 * (M_pad * K + K * N) + 4 * M_pad * N)
    out = pl.pallas_call(
        matmul_bias_kernel,
        out_shape=jax.ShapeDtypeStruct((M_pad, N), out_dtype),
        grid=grid,
        in_specs=[
            pl.BlockSpec((tm, tk), lambda i, j, k: (i, k)),
            pl.BlockSpec((tk, tn), lambda i, j, k: (k, j)),
            pl.BlockSpec((1, tn), lambda i, j, k: (0, j)),
        ],
        out_specs=pl.BlockSpec((tm, tn), lambda i, j, k: (i, j)),
        scratch_shapes=[pltpu.VMEM((tm, tn), jnp.float32)],
        compiler_params=pltpu.CompilerParams(
            dimension_semantics=("parallel", "parallel", "arbitrary"),
            vmem_limit_bytes=_vmem_limit_bytes()),
        cost_estimate=cost,
    )(x, w, b)
    return out[:M] if M_pad != M else out


# ----------------------------- fused transformer block -----------------------------
def block_kernel(h_ref, ln1_g_ref, ln1_b_ref, qkv_w_ref, qkv_b_ref,
                 proj_w_ref, proj_b_ref, ln2_g_ref, ln2_b_ref,
                 fc1_w_ref, fc1_b_ref, fc2_w_ref, fc2_b_ref,
                 o_ref, attn_ref,
                 *, scale, seq_valid, heads, head_dim, mlp_chunk):
    S_pad = h_ref.shape[1]
    E = h_ref.shape[2]

    # Residual stream is f32 end-to-end; bf16 only for MXU operands.
    h = h_ref[0].astype(jnp.float32)                                    # (S_pad, E)

    # ---- LN1 fused as QKV prologue (f32 VPU math) ----
    y = _layernorm_f32(h, ln1_g_ref[...], ln1_b_ref[...])

    # ---- fused QKV projection: bf16 MXU inputs, f32 accumulation ----
    qkv = jnp.dot(y.astype(jnp.bfloat16), qkv_w_ref[...],
                  preferred_element_type=jnp.float32) + qkv_b_ref[...]  # (S_pad, 3E)

    # Mask zero-padded key tokens (sequence padded to a 128-lane multiple).
    # NOTE: padded *query* rows still produce finite (garbage) values; this is safe only
    # because (a) padded key columns are masked in every block and (b) only the cls row
    # is read by the head. Do not read padded rows elsewhere.
    col = lax.broadcasted_iota(jnp.int32, (S_pad, S_pad), 1)
    key_valid = col < seq_valid

    # ---- attention: all heads inside one kernel, heads sliced on the feature axis.
    #      Each head's PV output goes straight into an (S_pad, E) f32 VMEM scratch slice
    #      (no concat relayout, head outputs not all live at once).
    # TODO(synk): on v6e/v7x (256-deep MXU) group 2 heads per PV output slab so stores are
    # 128 lanes wide and the Dh=64 contraction amortizes better.
    for hh in range(heads):
        q = qkv[:, hh * head_dim:(hh + 1) * head_dim].astype(jnp.bfloat16)
        k = qkv[:, E + hh * head_dim:E + (hh + 1) * head_dim].astype(jnp.bfloat16)
        v = qkv[:, 2 * E + hh * head_dim:2 * E + (hh + 1) * head_dim].astype(jnp.bfloat16)
        s = jnp.einsum("qd,kd->qk", q, k, preferred_element_type=jnp.float32) * scale
        s = jnp.where(key_valid, s, -1e30)
        s = s - jnp.max(s, axis=-1, keepdims=True)
        p = jnp.exp(s)
        p = p * pl.reciprocal(jnp.sum(p, axis=-1, keepdims=True), approx=True)
        attn_ref[:, hh * head_dim:(hh + 1) * head_dim] = jnp.dot(
            p.astype(jnp.bfloat16), v, preferred_element_type=jnp.float32)

    # ---- output projection with the residual add fused as an epilogue ----
    h = h + jnp.dot(attn_ref[...].astype(jnp.bfloat16), proj_w_ref[...],
                    preferred_element_type=jnp.float32) + proj_b_ref[...]

    # ---- LN2 -> fc1 + tanh GELU (EUP) -> fc2 + residual, chunked over the hidden axis
    #      so the (S_pad, hidden) intermediate never exists in full (v7x VMEM headroom).
    y = _layernorm_f32(h, ln2_g_ref[...], ln2_b_ref[...]).astype(jnp.bfloat16)
    hidden = fc1_w_ref.shape[1]
    mlp = jnp.zeros((S_pad, E), jnp.float32)
    for lo in range(0, hidden, mlp_chunk):
        hi = lo + mlp_chunk
        u = jnp.dot(y, fc1_w_ref[:, lo:hi],
                    preferred_element_type=jnp.float32) + fc1_b_ref[:, lo:hi]
        u = _gelu_tanh(u)
        mlp = mlp + jnp.dot(u.astype(jnp.bfloat16), fc2_w_ref[lo:hi, :],
                            preferred_element_type=jnp.float32)
    h = h + mlp + fc2_b_ref[...]

    o_ref[0] = h.astype(o_ref.dtype)


def transformer_block(h, blk, *, seq_valid):
    B, S_pad, E = h.shape
    hidden = blk["fc1_w"].shape[1]
    mlp_chunk = hidden if hidden <= 1024 else 1024
    assert hidden % mlp_chunk == 0

    tok_spec = pl.BlockSpec((1, S_pad, E), lambda b: (b, 0, 0))
    # Constant index maps -> block weights stay resident in VMEM across the batch grid.
    # TODO(synk): at real ViT-L dims on v7x (64 MiB VMEM) add pipeline_mode=pl.Buffered(1)
    # to these weight specs (or split attention / MLP into two pallas_calls) so the ~24 MiB
    # of bf16 block weights are not double-buffered.
    res = lambda shape: pl.BlockSpec(shape, lambda b: (0, 0))

    return pl.pallas_call(
        functools.partial(block_kernel, scale=1.0 / math.sqrt(HEAD_DIM),
                          seq_valid=seq_valid, heads=HEADS, head_dim=HEAD_DIM,
                          mlp_chunk=mlp_chunk),
        out_shape=jax.ShapeDtypeStruct((B, S_pad, E), jnp.float32),
        grid=(B,),
        in_specs=[
            tok_spec,
            res((1, E)), res((1, E)),                 # ln1 gamma/beta (f32)
            res((E, 3 * E)), res((1, 3 * E)),         # qkv w (bf16) / b (f32)
            res((E, E)), res((1, E)),                 # proj w / b
            res((1, E)), res((1, E)),                 # ln2 gamma/beta
            res((E, hidden)), res((1, hidden)),       # fc1 w / b
            res((hidden, E)), res((1, E)),            # fc2 w / b
        ],
        out_specs=tok_spec,
        scratch_shapes=[pltpu.VMEM((S_pad, E), jnp.float32)],   # per-head attention slab
        compiler_params=pltpu.CompilerParams(
            dimension_semantics=("parallel",),
            vmem_limit_bytes=_vmem_limit_bytes()),
    )(h,
      blk["ln1_g"], blk["ln1_b"], blk["qkv_w"], blk["qkv_b"],
      blk["proj_w"], blk["proj_b"], blk["ln2_g"], blk["ln2_b"],
      blk["fc1_w"], blk["fc1_b"], blk["fc2_w"], blk["fc2_b"])


# ----------------------------- final LayerNorm + classifier head -----------------------------
def ln_head_kernel(x_ref, g_ref, b_ref, w_ref, hb_ref, o_ref):
    x = x_ref[...].astype(jnp.float32)                                  # (B, E)
    y = _layernorm_f32(x, g_ref[...], b_ref[...])
    o_ref[...] = (jnp.dot(y.astype(jnp.bfloat16), w_ref[...],
                          preferred_element_type=jnp.float32) + hb_ref[...]).astype(o_ref.dtype)


def ln_head(cls_tok, ln_g, ln_b, head_w, head_b):
    # head_w / head_b are pre-padded to HEAD_PAD lanes at init time (lane-dense stores).
    B, E = cls_tok.shape
    return pl.pallas_call(
        ln_head_kernel,
        out_shape=jax.ShapeDtypeStruct((B, HEAD_PAD), jnp.float32),
        grid=(1,),
        in_specs=[
            pl.BlockSpec((B, E), lambda i: (0, 0)),
            pl.BlockSpec((1, E), lambda i: (0, 0)),
            pl.BlockSpec((1, E), lambda i: (0, 0)),
            pl.BlockSpec((E, HEAD_PAD), lambda i: (0, 0)),
            pl.BlockSpec((1, HEAD_PAD), lambda i: (0, 0)),
        ],
        out_specs=pl.BlockSpec((B, HEAD_PAD), lambda i: (0, 0)),
        compiler_params=pltpu.CompilerParams(vmem_limit_bytes=_vmem_limit_bytes()),
    )(cls_tok, ln_g, ln_b, head_w, head_b)


# ----------------------------- parameters -----------------------------
def init_params(key, in_chans=3, img_size=32):
    n_patches = (img_size // PATCH) ** 2
    seq = n_patches + 1
    hidden = EMBED * MLP_RATIO

    def normal(k, shape, std=0.02, dtype=jnp.bfloat16):
        return (std * jax.random.normal(k, shape, jnp.float32)).astype(dtype)

    keys = iter(jax.random.split(key, 16 + DEPTH * 8))
    head_w = normal(next(keys), (EMBED, NUM_CLASSES))
    head_b = jnp.zeros((1, NUM_CLASSES), jnp.float32)
    params = {
        # matmul weights in bf16 (MXU operands); LN params / biases / embeddings in f32.
        "patch_w": normal(next(keys), (in_chans * PATCH * PATCH, EMBED)),
        "patch_b": jnp.zeros((1, EMBED), jnp.float32),
        "cls_token": normal(next(keys), (1, 1, EMBED), dtype=jnp.float32),
        "pos_embed": normal(next(keys), (1, seq, EMBED), dtype=jnp.float32),
        "ln_g": jnp.ones((1, EMBED), jnp.float32),
        "ln_b": jnp.zeros((1, EMBED), jnp.float32),
        # Pad the head once here (not per-forward) so its output store is 128 lanes wide.
        "head_w": jnp.pad(head_w, ((0, 0), (0, HEAD_PAD - NUM_CLASSES))),
        "head_b": jnp.pad(head_b, ((0, 0), (0, HEAD_PAD - NUM_CLASSES))),
        "blocks": [],
    }
    for _ in range(DEPTH):
        params["blocks"].append({
            "ln1_g": jnp.ones((1, EMBED), jnp.float32),
            "ln1_b": jnp.zeros((1, EMBED), jnp.float32),
            "qkv_w": normal(next(keys), (EMBED, 3 * EMBED)),
            "qkv_b": jnp.zeros((1, 3 * EMBED), jnp.float32),
            "proj_w": normal(next(keys), (EMBED, EMBED)),
            "proj_b": jnp.zeros((1, EMBED), jnp.float32),
            "ln2_g": jnp.ones((1, EMBED), jnp.float32),
            "ln2_b": jnp.zeros((1, EMBED), jnp.float32),
            "fc1_w": normal(next(keys), (EMBED, hidden)),
            "fc1_b": jnp.zeros((1, hidden), jnp.float32),
            "fc2_w": normal(next(keys), (hidden, EMBED)),
            "fc2_b": jnp.zeros((1, EMBED), jnp.float32),
        })
    return params


# ----------------------------- forward pass -----------------------------
def vit_forward(x, params):
    B, C, H, W = x.shape
    Hn, Wn = H // PATCH, W // PATCH
    n_patches = Hn * Wn
    S = n_patches + 1
    S_pad = _round_up(S, 128)   # lane-dense sequence: 197 -> 256 at real dims, 5 -> 128 here

    # Patch embedding (== Conv2d(C, EMBED, kernel=16, stride=16) on NCHW).
    # TODO(synk): patch unfold stays as an XLA reshape/transpose (no clean Pallas gather needed).
    patches = x.reshape(B, C, Hn, PATCH, Wn, PATCH)
    patches = patches.transpose(0, 2, 4, 1, 3, 5).reshape(B * n_patches, C * PATCH * PATCH)
    tok = matmul_bias(patches.astype(jnp.bfloat16), params["patch_w"], params["patch_b"])
    tok = tok.reshape(B, n_patches, EMBED)

    # cls token + positional embedding (pos_drop is identity in eval mode), then zero-pad
    # the sequence to a 128 multiple; padded keys are masked inside the attention kernel.
    cls = jnp.broadcast_to(params["cls_token"], (B, 1, EMBED))
    h = jnp.concatenate([cls, tok], axis=1) + params["pos_embed"]       # (B, S, E) f32
    h = jnp.pad(h, ((0, 0), (0, S_pad - S), (0, 0)))                    # f32 residual stream

    # Fused pre-norm transformer blocks (one pallas_call per block, weights VMEM-resident).
    # TODO(synk): for v7x with tiny B, add a 'parallel' query-tile grid axis so both
    # TensorCores get work.
    for blk in params["blocks"]:
        h = transformer_block(h, blk, seq_valid=S)

    # Final LayerNorm + classification head on the cls token (lane-padded output).
    logits_pad = ln_head(h[:, 0, :], params["ln_g"], params["ln_b"],
                         params["head_w"], params["head_b"])            # (B, 128) f32
    return logits_pad[:, :NUM_CLASSES]


if __name__ == "__main__":
    key = jax.random.PRNGKey(0)
    k_params, k_x = jax.random.split(key)
    params = init_params(k_params, in_chans=3, img_size=32)
    x = jax.random.normal(k_x, (2, 3, 32, 32), jnp.float32)  # NCHW, like the PyTorch module

    logits = jax.jit(vit_forward)(x, params)
    logits = jax.block_until_ready(logits)
    assert logits.shape == (2, NUM_CLASSES)
    assert bool(jnp.all(jnp.isfinite(logits)))
    print("KERNEL_OK")
</pallas_src>

<mosaic_0001>
module attributes {stable_mosaic.version = 11 : i64} {
  func.func @matmul_bias_kernel(%arg0: i32, %arg1: i32, %arg2: i32, %arg3: memref<16x256xbf16, #tpu.memory_space<vmem>>, %arg4: memref<256x128xbf16, #tpu.memory_space<vmem>>, %arg5: memref<1x128xf32, #tpu.memory_space<vmem>>, %arg6: memref<16x128xf32, #tpu.memory_space<vmem>>, %arg7: memref<16x128xf32, #tpu.memory_space<vmem>>) attributes {dimension_semantics = [#tpu.dimension_semantics<parallel>, #tpu.dimension_semantics<parallel>, #tpu.dimension_semantics<arbitrary>], iteration_bounds = array<i64: 1, 1, 3>, scalar_prefetch = 0 : i64, scratch_operands = 1 : i64, tpu.core_type = #tpu.core_type<tc>, window_params = [{transform_indices = @transform_0, window_bounds = array<i64: 16, 256>}, {transform_indices = @transform_1, window_bounds = array<i64: 256, 128>}, {transform_indices = @transform_2, window_bounds = array<i64: 1, 128>}, {transform_indices = @transform_3, window_bounds = array<i64: 16, 128>}]} {
    %c0_i32 = arith.constant 0 : i32
    %0 = arith.cmpi eq, %arg2, %c0_i32 : i32
    %1 = arith.extui %0 : i1 to i32
    %c0_i32_0 = arith.constant 0 : i32
    %2 = arith.cmpi ne, %1, %c0_i32_0 : i32
    scf.if %2 {
      %cst_9 = arith.constant 0.000000e+00 : f32
      %12 = vector.broadcast %cst_9 : f32 to vector<16x128xf32>
      %c0_10 = arith.constant 0 : index
      %c0_11 = arith.constant 0 : index
      %13 = vector.load %arg7[%c0_10, %c0_11] : memref<16x128xf32, #tpu.memory_space<vmem>>, vector<16x128xf32>
      tpu.vector_store %arg7[%c0_10, %c0_11], %12 {strides = array<i32>} : memref<16x128xf32, #tpu.memory_space<vmem>>, vector<16x128xf32>,
    } else {
    }
    %c0 = arith.constant 0 : index
    %c0_1 = arith.constant 0 : index
    %3 = vector.load %arg7[%c0, %c0_1] : memref<16x128xf32, #tpu.memory_space<vmem>>, vector<16x128xf32>
    %c0_2 = arith.constant 0 : index
    %c0_3 = arith.constant 0 : index
    %4 = vector.load %arg3[%c0_2, %c0_3] : memref<16x256xbf16, #tpu.memory_space<vmem>>, vector<16x256xbf16>
    %c0_4 = arith.constant 0 : index
    %c0_5 = arith.constant 0 : index
    %5 = vector.load %arg4[%c0_4, %c0_5] : memref<256x128xbf16, #tpu.memory_space<vmem>>, vector<256x128xbf16>
    %cst = arith.constant dense<0.000000e+00> : vector<16x128xf32>
    %6 = tpu.matmul %4, %5, %cst {dimension_numbers = #tpu.dot_dimension_numbers<[1], [0], [0], [1], [0, 0, 1, 1], [], []>} : vector<16x256xbf16>, vector<256x128xbf16>, vector<16x128xf32> -> vector<16x128xf32>
    %7 = arith.addf %3, %6 : vector<16x128xf32>
    %c0_6 = arith.constant 0 : index
    %c0_7 = arith.constant 0 : index
    %8 = vector.load %arg7[%c0_6, %c0_7] : memref<16x128xf32, #tpu.memory_space<vmem>>, vector<16x128xf32>
    tpu.vector_store %arg7[%c0_6, %c0_7], %7 {strides = array<i32>} : memref<16x128xf32, #tpu.memory_space<vmem>>, vector<16x128xf32>,
    %c2_i32 = arith.constant 2 : i32
    %9 = arith.cmpi eq, %arg2, %c2_i32 : i32
    %10 = arith.extui %9 : i1 to i32
    %c0_i32_8 = arith.constant 0 : i32
    %11 = arith.cmpi ne, %10, %c0_i32_8 : i32
    scf.if %11 {
      %c0_9 = arith.constant 0 : index
      %c0_10 = arith.constant 0 : index
      %12 = vector.load %arg7[%c0_9, %c0_10] : memref<16x128xf32, #tpu.memory_space<vmem>>, vector<16x128xf32>
      %c0_11 = arith.constant 0 : index
      %c0_12 = arith.constant 0 : index
      %13 = vector.load %arg5[%c0_11, %c0_12] : memref<1x128xf32, #tpu.memory_space<vmem>>, vector<1x128xf32>
      %14 = vector.broadcast %13 : vector<1x128xf32> to vector<16x128xf32>
      %15 = arith.addf %12, %14 : vector<16x128xf32>
      %c0_13 = arith.constant 0 : index
      %c0_14 = arith.constant 0 : index
      %16 = vector.load %arg6[%c0_13, %c0_14] : memref<16x128xf32, #tpu.memory_space<vmem>>, vector<16x128xf32>
      tpu.vector_store %arg6[%c0_13, %c0_14], %15 {strides = array<i32>} : memref<16x128xf32, #tpu.memory_space<vmem>>, vector<16x128xf32>,
    } else {
    }
    return
  }
  func.func @transform_0(%arg0: i32, %arg1: i32, %arg2: i32) -> (i32, i32) {
    %c0_i32 = arith.constant 0 : i32
    return %arg0, %arg2 : i32, i32
  }
  func.func @transform_1(%arg0: i32, %arg1: i32, %arg2: i32) -> (i32, i32) {
    %c0_i32 = arith.constant 0 : i32
    return %arg2, %arg1 : i32, i32
  }
  func.func @transform_2(%arg0: i32, %arg1: i32, %arg2: i32) -> (i32, i32) {
    %c0_i32 = arith.constant 0 : i32
    %c0_i32_0 = arith.constant 0 : i32
    return %c0_i32, %arg1 : i32, i32
  }
  func.func @transform_3(%arg0: i32, %arg1: i32, %arg2: i32) -> (i32, i32) {
    %c0_i32 = arith.constant 0 : i32
    return %arg0, %arg1 : i32, i32
  }
}

module attributes {stable_mosaic.version = 11 : i64} {
  func.func @block_kernel(%arg0: i32, %arg1: memref<1x128x128xf32, #tpu.memory_space<vmem>>, %arg2: memref<1x128xf32, #tpu.memory_space<vmem>>, %arg3: memref<1x128xf32, #tpu.memory_space<vmem>>, %arg4: memref<128x384xbf16, #tpu.memory_space<vmem>>, %arg5: memref<1x384xf32, #tpu.memory_space<vmem>>, %arg6: memref<128x128xbf16, #tpu.memory_space<vmem>>, %arg7: memref<1x128xf32, #tpu.memory_space<vmem>>, %arg8: memref<1x128xf32, #tpu.memory_space<vmem>>, %arg9: memref<1x128xf32, #tpu.memory_space<vmem>>, %arg10: memref<128x512xbf16, #tpu.memory_space<vmem>>, %arg11: memref<1x512xf32, #tpu.memory_space<vmem>>, %arg12: memref<512x128xbf16, #tpu.memory_space<vmem>>, %arg13: memref<1x128xf32, #tpu.memory_space<vmem>>, %arg14: memref<1x128x128xf32, #tpu.memory_space<vmem>>, %arg15: memref<128x128xf32, #tpu.memory_space<vmem>>) attributes {dimension_semantics = [#tpu.dimension_semantics<parallel>], iteration_bounds = array<i64: 2>, scalar_prefetch = 0 : i64, scratch_operands = 1 : i64, tpu.core_type = #tpu.core_type<tc>, window_params = [{transform_indices = @transform_0, window_bounds = array<i64: 1, 128, 128>}, {pipeline_mode = #tpu.pipeline_mode<synchronous>, transform_indices = @transform_1, window_bounds = array<i64: 1, 128>}, {pipeline_mode = #tpu.pipeline_mode<synchronous>, transform_indices = @transform_2, window_bounds = array<i64: 1, 128>}, {pipeline_mode = #tpu.pipeline_mode<synchronous>, transform_indices = @transform_3, window_bounds = array<i64: 128, 384>}, {pipeline_mode = #tpu.pipeline_mode<synchronous>, transform_indices = @transform_4, window_bounds = array<i64: 1, 384>}, {pipeline_mode = #tpu.pipeline_mode<synchronous>, transform_indices = @transform_5, window_bounds = array<i64: 128, 128>}, {pipeline_mode = #tpu.pipeline_mode<synchronous>, transform_indices = @transform_6, window_bounds = array<i64: 1, 128>}, {pipeline_mode = #tpu.pipeline_mode<synchronous>, transform_indices = @transform_7, window_bounds = array<i64: 1, 128>}, {pipeline_mode = #tpu.pipeline_mode<synchronous>, transform_indices = @transform_8, window_bounds = array<i64: 1, 128>}, {pipeline_mode = #tpu.pipeline_mode<synchronous>, transform_indices = @transform_9, window_bounds = array<i64: 128, 512>}, {pipeline_mode = #tpu.pipeline_mode<synchronous>, transform_indices = @transform_10, window_bounds = array<i64: 1, 512>}, {pipeline_mode = #tpu.pipeline_mode<synchronous>, transform_indices = @transform_11, window_bounds = array<i64: 512, 128>}, {pipeline_mode = #tpu.pipeline_mode<synchronous>, transform_indices = @transform_12, window_bounds = array<i64: 1, 128>}, {transform_indices = @transform_13, window_bounds = array<i64: 1, 128, 128>}]} {
    %c0 = arith.constant 0 : index
    %c0_0 = arith.constant 0 : index
    %c0_1 = arith.constant 0 : index
    %0 = vector.load %arg1[%c0, %c0_0, %c0_1] : memref<1x128x128xf32, #tpu.memory_space<vmem>>, vector<1x128x128xf32>
    %1 = vector.shape_cast %0 : vector<1x128x128xf32> to vector<128x128xf32>
    %c0_2 = arith.constant 0 : index
    %c0_3 = arith.constant 0 : index
    %2 = vector.load %arg2[%c0_2, %c0_3] : memref<1x128xf32, #tpu.memory_space<vmem>>, vector<1x128xf32>
    %c0_4 = arith.constant 0 : index
    %c0_5 = arith.constant 0 : index
    %3 = vector.load %arg3[%c0_4, %c0_5] : memref<1x128xf32, #tpu.memory_space<vmem>>, vector<1x128xf32>
    %cst = arith.constant dense<0.000000e+00> : vector<128xf32>
    %4 = vector.multi_reduction <add>, %1, %cst [1] : vector<128x128xf32> to vector<128xf32>
    %5 = vector.shape_cast %4 : vector<128xf32> to vector<128x1xf32>
    %cst_6 = arith.constant 1.280000e+02 : f32
    %6 = vector.broadcast %cst_6 : f32 to vector<128x1xf32>
    %7 = arith.divf %5, %6 : vector<128x1xf32>
    %8 = vector.broadcast %7 : vector<128x1xf32> to vector<128x128xf32>
    %9 = arith.subf %1, %8 : vector<128x128xf32>
    %10 = vector.broadcast %7 : vector<128x1xf32> to vector<128x128xf32>
    %11 = arith.subf %1, %10 : vector<128x128xf32>
    %12 = arith.mulf %9, %11 : vector<128x128xf32>
    %cst_7 = arith.constant dense<0.000000e+00> : vector<128xf32>
    %13 = vector.multi_reduction <add>, %12, %cst_7 [1] : vector<128x128xf32> to vector<128xf32>
    %14 = vector.shape_cast %13 : vector<128xf32> to vector<128x1xf32>
    %cst_8 = arith.constant 1.280000e+02 : f32
    %15 = vector.broadcast %cst_8 : f32 to vector<128x1xf32>
    %16 = arith.divf %14, %15 : vector<128x1xf32>
    %17 = vector.broadcast %7 : vector<128x1xf32> to vector<128x128xf32>
    %18 = arith.subf %1, %17 : vector<128x128xf32>
    %cst_9 = arith.constant 9.99999997E-7 : f32
    %19 = vector.broadcast %cst_9 : f32 to vector<128x1xf32>
    %20 = arith.addf %16, %19 : vector<128x1xf32>
    %21 = math.rsqrt %20 : vector<128x1xf32>
    %22 = vector.broadcast %21 : vector<128x1xf32> to vector<128x128xf32>
    %23 = arith.mulf %18, %22 : vector<128x128xf32>
    %24 = vector.broadcast %2 : vector<1x128xf32> to vector<128x128xf32>
    %25 = arith.mulf %23, %24 : vector<128x128xf32>
    %26 = vector.broadcast %3 : vector<1x128xf32> to vector<128x128xf32>
    %27 = arith.addf %25, %26 : vector<128x128xf32>
    %28 = arith.truncf %27 : vector<128x128xf32> to vector<128x128xbf16>
    %c0_10 = arith.constant 0 : index
    %c0_11 = arith.constant 0 : index
    %29 = vector.load %arg4[%c0_10, %c0_11] : memref<128x384xbf16, #tpu.memory_space<vmem>>, vector<128x384xbf16>
    %cst_12 = arith.constant dense<0.000000e+00> : vector<128x384xf32>
    %30 = tpu.matmul %28, %29, %cst_12 {dimension_numbers = #tpu.dot_dimension_numbers<[1], [0], [0], [1], [0, 0, 1, 1], [], []>} : vector<128x128xbf16>, vector<128x384xbf16>, vector<128x384xf32> -> vector<128x384xf32>
    %c0_13 = arith.constant 0 : index
    %c0_14 = arith.constant 0 : index
    %31 = vector.load %arg5[%c0_13, %c0_14] : memref<1x384xf32, #tpu.memory_space<vmem>>, vector<1x384xf32>
    %32 = vector.broadcast %31 : vector<1x384xf32> to vector<128x384xf32>
    %33 = arith.addf %30, %32 : vector<128x384xf32>
    %34 = tpu.iota {dimensions = array<i32: 1>} : vector<128x128xi32>
    %c5_i32 = arith.constant 5 : i32
    %35 = vector.broadcast %c5_i32 : i32 to vector<128x128xi32>
    %36 = arith.cmpi slt, %34, %35 : vector<128x128xi32>
    %37 = vector.extract_strided_slice %33 {offsets = [0, 0], sizes = [128, 32], strides = [1, 1]} : vector<128x384xf32> to vector<128x32xf32>
    %38 = arith.truncf %37 : vector<128x32xf32> to vector<128x32xbf16>
    %39 = vector.extract_strided_slice %33 {offsets = [0, 128], sizes = [128, 32], strides = [1, 1]} : vector<128x384xf32> to vector<128x32xf32>
    %40 = arith.truncf %39 : vector<128x32xf32> to vector<128x32xbf16>
    %41 = vector.extract_strided_slice %33 {offsets = [0, 256], sizes = [128, 32], strides = [1, 1]} : vector<128x384xf32> to vector<128x32xf32>
    %42 = arith.truncf %41 : vector<128x32xf32> to vector<128x32xbf16>
    "tpu.trace_start"() <{level = 10 : i32, message = "qd,kd->qk"}> : () -> ()
    %cst_15 = arith.constant dense<0.000000e+00> : vector<128x128xf32>
    %43 = tpu.matmul %38, %40, %cst_15 {dimension_numbers = #tpu.dot_dimension_numbers<[1], [1], [0], [0], [0, 0, 1, 0], [], []>} : vector<128x32xbf16>, vector<128x32xbf16>, vector<128x128xf32> -> vector<128x128xf32>
    "tpu.trace_stop"() : () -> ()
    %cst_16 = arith.constant 0.176776692 : f32
    %44 = vector.broadcast %cst_16 : f32 to vector<128x128xf32>
    %45 = arith.mulf %43, %44 : vector<128x128xf32>
    %cst_17 = arith.constant -1.000000e+30 : f32
    %46 = vector.broadcast %cst_17 : f32 to vector<128x128xf32>
    %47 = arith.select %36, %45, %46 : vector<128x128xi1>, vector<128x128xf32>
    %cst_18 = arith.constant dense<0xFF800000> : vector<128xf32>
    %48 = vector.multi_reduction <maximumf>, %47, %cst_18 [1] : vector<128x128xf32> to vector<128xf32>
    %49 = vector.shape_cast %48 : vector<128xf32> to vector<128x1xf32>
    %50 = vector.broadcast %49 : vector<128x1xf32> to vector<128x128xf32>
    %51 = arith.subf %47, %50 : vector<128x128xf32>
    %52 = math.exp %51 : vector<128x128xf32>
    %cst_19 = arith.constant dense<0.000000e+00> : vector<128xf32>
    %53 = vector.multi_reduction <add>, %52, %cst_19 [1] : vector<128x128xf32> to vector<128xf32>
    %54 = vector.shape_cast %53 : vector<128xf32> to vector<128x1xf32>
    %55 = tpu.reciprocal %54 {approx = true} : vector<128x1xf32> -> vector<128x1xf32>
    %56 = vector.broadcast %55 : vector<128x1xf32> to vector<128x128xf32>
    %57 = arith.mulf %52, %56 : vector<128x128xf32>
    %58 = arith.truncf %57 : vector<128x128xf32> to vector<128x128xbf16>
    %cst_20 = arith.constant dense<0.000000e+00> : vector<128x32xf32>
    %59 = tpu.matmul %58, %42, %cst_20 {dimension_numbers = #tpu.dot_dimension_numbers<[1], [0], [0], [1], [0, 0, 1, 1], [], []>} : vector<128x128xbf16>, vector<128x32xbf16>, vector<128x32xf32> -> vector<128x32xf32>
    %c0_21 = arith.constant 0 : index
    %c0_22 = arith.constant 0 : index
    %60 = vector.load %arg15[%c0_21, %c0_22] : memref<128x128xf32, #tpu.memory_space<vmem>>, vector<128x32xf32>
    tpu.vector_store %arg15[%c0_21, %c0_22], %59 {strides = array<i32>} : memref<128x128xf32, #tpu.memory_space<vmem>>, vector<128x32xf32>,
    %61 = vector.extract_strided_slice %33 {offsets = [0, 32], sizes = [128, 32], strides = [1, 1]} : vector<128x384xf32> to vector<128x32xf32>
    %62 = arith.truncf %61 : vector<128x32xf32> to vector<128x32xbf16>
    %63 = vector.extract_strided_slice %33 {offsets = [0, 160], sizes = [128, 32], strides = [1, 1]} : vector<128x384xf32> to vector<128x32xf32>
    %64 = arith.truncf %63 : vector<128x32xf32> to vector<128x32xbf16>
    %65 = vector.extract_strided_slice %33 {offsets = [0, 288], sizes = [128, 32], strides = [1, 1]} : vector<128x384xf32> to vector<128x32xf32>
    %66 = arith.truncf %65 : vector<128x32xf32> to vector<128x32xbf16>
    "tpu.trace_start"() <{level = 10 : i32, message = "qd,kd->qk"}> : () -> ()
    %cst_23 = arith.constant dense<0.000000e+00> : vector<128x128xf32>
    %67 = tpu.matmul %62, %64, %cst_23 {dimension_numbers = #tpu.dot_dimension_numbers<[1], [1], [0], [0], [0, 0, 1, 0], [], []>} : vector<128x32xbf16>, vector<128x32xbf16>, vector<128x128xf32> -> vector<128x128xf32>
    "tpu.trace_stop"() : () -> ()
    %cst_24 = arith.constant 0.176776692 : f32
    %68 = vector.broadcast %cst_24 : f32 to vector<128x128xf32>
    %69 = arith.mulf %67, %68 : vector<128x128xf32>
    %cst_25 = arith.constant -1.000000e+30 : f32
    %70 = vector.broadcast %cst_25 : f32 to vector<128x128xf32>
    %71 = arith.select %36, %69, %70 : vector<128x128xi1>, vector<128x128xf32>
    %cst_26 = arith.constant dense<0xFF800000> : vector<128xf32>
    %72 = vector.multi_reduction <maximumf>, %71, %cst_26 [1] : vector<128x128xf32> to vector<128xf32>
    %73 = vector.shape_cast %72 : vector<128xf32> to vector<128x1xf32>
    %74 = vector.broadcast %73 : vector<128x1xf32> to vector<128x128xf32>
    %75 = arith.subf %71, %74 : vector<128x128xf32>
    %76 = math.exp %75 : vector<128x128xf32>
    %cst_27 = arith.constant dense<0.000000e+00> : vector<128xf32>
    %77 = vector.multi_reduction <add>, %76, %cst_27 [1] : vector<128x128xf32> to vector<128xf32>
    %78 = vector.shape_cast %77 : vector<128xf32> to vector<128x1xf32>
    %79 = tpu.reciprocal %78 {approx = true} : vector<128x1xf32> -> vector<128x1xf32>
    %80 = vector.broadcast %79 : vector<128x1xf32> to vector<128x128xf32>
    %81 = arith.mulf %76, %80 : vector<128x128xf32>
    %82 = arith.truncf %81 : vector<128x128xf32> to vector<128x128xbf16>
    %cst_28 = arith.constant dense<0.000000e+00> : vector<128x32xf32>
    %83 = tpu.matmul %82, %66, %cst_28 {dimension_numbers = #tpu.dot_dimension_numbers<[1], [0], [0], [1], [0, 0, 1, 1], [], []>} : vector<128x128xbf16>, vector<128x32xbf16>, vector<128x32xf32> -> vector<128x32xf32>
    %c0_29 = arith.constant 0 : index
    %c32 = arith.constant 32 : index
    %84 = vector.load %arg15[%c0_29, %c32] : memref<128x128xf32, #tpu.memory_space<vmem>>, vector<128x32xf32>
    tpu.vector_store %arg15[%c0_29, %c32], %83 {strides = array<i32>} : memref<128x128xf32, #tpu.memory_space<vmem>>, vector<128x32xf32>,
    %85 = vector.extract_strided_slice %33 {offsets = [0, 64], sizes = [128, 32], strides = [1, 1]} : vector<128x384xf32> to vector<128x32xf32>
    %86 = arith.truncf %85 : vector<128x32xf32> to vector<128x32xbf16>
    %87 = vector.extract_strided_slice %33 {offsets = [0, 192], sizes = [128, 32], strides = [1, 1]} : vector<128x384xf32> to vector<128x32xf32>
    %88 = arith.truncf %87 : vector<128x32xf32> to vector<128x32xbf16>
    %89 = vector.extract_strided_slice %33 {offsets = [0, 320], sizes = [128, 32], strides = [1, 1]} : vector<128x384xf32> to vector<128x32xf32>
    %90 = arith.truncf %89 : vector<128x32xf32> to vector<128x32xbf16>
    "tpu.trace_start"() <{level = 10 : i32, message = "qd,kd->qk"}> : () -> ()
    %cst_30 = arith.constant dense<0.000000e+00> : vector<128x128xf32>
    %91 = tpu.matmul %86, %88, %cst_30 {dimension_numbers = #tpu.dot_dimension_numbers<[1], [1], [0], [0], [0, 0, 1, 0], [], []>} : vector<128x32xbf16>, vector<128x32xbf16>, vector<128x128xf32> -> vector<128x128xf32>
    "tpu.trace_stop"() : () -> ()
    %cst_31 = arith.constant 0.176776692 : f32
    %92 = vector.broadcast %cst_31 : f32 to vector<128x128xf32>
    %93 = arith.mulf %91, %92 : vector<128x128xf32>
    %cst_32 = arith.constant -1.000000e+30 : f32
    %94 = vector.broadcast %cst_32 : f32 to vector<128x128xf32>
    %95 = arith.select %36, %93, %94 : vector<128x128xi1>, vector<128x128xf32>
    %cst_33 = arith.constant dense<0xFF800000> : vector<128xf32>
    %96 = vector.multi_reduction <maximumf>, %95, %cst_33 [1] : vector<128x128xf32> to vector<128xf32>
    %97 = vector.shape_cast %96 : vector<128xf32> to vector<128x1xf32>
    %98 = vector.broadcast %97 : vector<128x1xf32> to vector<128x128xf32>
    %99 = arith.subf %95, %98 : vector<128x128xf32>
    %100 = math.exp %99 : vector<128x128xf32>
    %cst_34 = arith.constant dense<0.000000e+00> : vector<128xf32>
    %101 = vector.multi_reduction <add>, %100, %cst_34 [1] : vector<128x128xf32> to vector<128xf32>
    %102 = vector.shape_cast %101 : vector<128xf32> to vector<128x1xf32>
    %103 = tpu.reciprocal %102 {approx = true} : vector<128x1xf32> -> vector<128x1xf32>
    %104 = vector.broadcast %103 : vector<128x1xf32> to vector<128x128xf32>
    %105 = arith.mulf %100, %104 : vector<128x128xf32>
    %106 = arith.truncf %105 : vector<128x128xf32> to vector<128x128xbf16>
    %cst_35 = arith.constant dense<0.000000e+00> : vector<128x32xf32>
    %107 = tpu.matmul %106, %90, %cst_35 {dimension_numbers = #tpu.dot_dimension_numbers<[1], [0], [0], [1], [0, 0, 1, 1], [], []>} : vector<128x128xbf16>, vector<128x32xbf16>, vector<128x32xf32> -> vector<128x32xf32>
    %c0_36 = arith.constant 0 : index
    %c64 = arith.constant 64 : index
    %108 = vector.load %arg15[%c0_36, %c64] : memref<128x128xf32, #tpu.memory_space<vmem>>, vector<128x32xf32>
    tpu.vector_store %arg15[%c0_36, %c64], %107 {strides = array<i32>} : memref<128x128xf32, #tpu.memory_space<vmem>>, vector<128x32xf32>,
    %109 = vector.extract_strided_slice %33 {offsets = [0, 96], sizes = [128, 32], strides = [1, 1]} : vector<128x384xf32> to vector<128x32xf32>
    %110 = arith.truncf %109 : vector<128x32xf32> to vector<128x32xbf16>
    %111 = vector.extract_strided_slice %33 {offsets = [0, 224], sizes = [128, 32], strides = [1, 1]} : vector<128x384xf32> to vector<128x32xf32>
    %112 = arith.truncf %111 : vector<128x32xf32> to vector<128x32xbf16>
    %113 = vector.extract_strided_slice %33 {offsets = [0, 352], sizes = [128, 32], strides = [1, 1]} : vector<128x384xf32> to vector<128x32xf32>
    %114 = arith.truncf %113 : vector<128x32xf32> to vector<128x32xbf16>
    "tpu.trace_start"() <{level = 10 : i32, message = "qd,kd->qk"}> : () -> ()
    %cst_37 = arith.constant dense<0.000000e+00> : vector<128x128xf32>
    %115 = tpu.matmul %110, %112, %cst_37 {dimension_numbers = #tpu.dot_dimension_numbers<[1], [1], [0], [0], [0, 0, 1, 0], [], []>} : vector<128x32xbf16>, vector<128x32xbf16>, vector<128x128xf32> -> vector<128x128xf32>
    "tpu.trace_stop"() : () -> ()
    %cst_38 = arith.constant 0.176776692 : f32
    %116 = vector.broadcast %cst_38 : f32 to vector<128x128xf32>
    %117 = arith.mulf %115, %116 : vector<128x128xf32>
    %cst_39 = arith.constant -1.000000e+30 : f32
    %118 = vector.broadcast %cst_39 : f32 to vector<128x128xf32>
    %119 = arith.select %36, %117, %118 : vector<128x128xi1>, vector<128x128xf32>
    %cst_40 = arith.constant dense<0xFF800000> : vector<128xf32>
    %120 = vector.multi_reduction <maximumf>, %119, %cst_40 [1] : vector<128x128xf32> to vector<128xf32>
    %121 = vector.shape_cast %120 : vector<128xf32> to vector<128x1xf32>
    %122 = vector.broadcast %121 : vector<128x1xf32> to vector<128x128xf32>
    %123 = arith.subf %119, %122 : vector<128x128xf32>
    %124 = math.exp %123 : vector<128x128xf32>
    %cst_41 = arith.constant dense<0.000000e+00> : vector<128xf32>
    %125 = vector.multi_reduction <add>, %124, %cst_41 [1] : vector<128x128xf32> to vector<128xf32>
    %126 = vector.shape_cast %125 : vector<128xf32> to vector<128x1xf32>
    %127 = tpu.reciprocal %126 {approx = true} : vector<128x1xf32> -> vector<128x1xf32>
    %128 = vector.broadcast %127 : vector<128x1xf32> to vector<128x128xf32>
    %129 = arith.mulf %124, %128 : vector<128x128xf32>
    %130 = arith.truncf %129 : vector<128x128xf32> to vector<128x128xbf16>
    %cst_42 = arith.constant dense<0.000000e+00> : vector<128x32xf32>
    %131 = tpu.matmul %130, %114, %cst_42 {dimension_numbers = #tpu.dot_dimension_numbers<[1], [0], [0], [1], [0, 0, 1, 1], [], []>} : vector<128x128xbf16>, vector<128x32xbf16>, vector<128x32xf32> -> vector<128x32xf32>
    %c0_43 = arith.constant 0 : index
    %c96 = arith.constant 96 : index
    %132 = vector.load %arg15[%c0_43, %c96] : memref<128x128xf32, #tpu.memory_space<vmem>>, vector<128x32xf32>
    tpu.vector_store %arg15[%c0_43, %c96], %131 {strides = array<i32>} : memref<128x128xf32, #tpu.memory_space<vmem>>, vector<128x32xf32>,
    %c0_44 = arith.constant 0 : index
    %c0_45 = arith.constant 0 : index
    %133 = vector.load %arg15[%c0_44, %c0_45] : memref<128x128xf32, #tpu.memory_space<vmem>>, vector<128x128xf32>
    %134 = arith.truncf %133 : vector<128x128xf32> to vector<128x128xbf16>
    %c0_46 = arith.constant 0 : index
    %c0_47 = arith.constant 0 : index
    %135 = vector.load %arg6[%c0_46, %c0_47] : memref<128x128xbf16, #tpu.memory_space<vmem>>, vector<128x128xbf16>
    %cst_48 = arith.constant dense<0.000000e+00> : vector<128x128xf32>
    %136 = tpu.matmul %134, %135, %cst_48 {dimension_numbers = #tpu.dot_dimension_numbers<[1], [0], [0], [1], [0, 0, 1, 1], [], []>} : vector<128x128xbf16>, vector<128x128xbf16>, vector<128x128xf32> -> vector<128x128xf32>
    %137 = arith.addf %1, %136 : vector<128x128xf32>
    %c0_49 = arith.constant 0 : index
    %c0_50 = arith.constant 0 : index
    %138 = vector.load %arg7[%c0_49, %c0_50] : memref<1x128xf32, #tpu.memory_space<vmem>>, vector<1x128xf32>
    %139 = vector.broadcast %138 : vector<1x128xf32> to vector<128x128xf32>
    %140 = arith.addf %137, %139 : vector<128x128xf32>
    %c0_51 = arith.constant 0 : index
    %c0_52 = arith.constant 0 : index
    %141 = vector.load %arg8[%c0_51, %c0_52] : memref<1x128xf32, #tpu.memory_space<vmem>>, vector<1x128xf32>
    %c0_53 = arith.constant 0 : index
    %c0_54 = arith.constant 0 : index
    %142 = vector.load %arg9[%c0_53, %c0_54] : memref<1x128xf32, #tpu.memory_space<vmem>>, vector<1x128xf32>
    %cst_55 = arith.constant dense<0.000000e+00> : vector<128xf32>
    %143 = vector.multi_reduction <add>, %140, %cst_55 [1] : vector<128x128xf32> to vector<128xf32>
    %144 = vector.shape_cast %143 : vector<128xf32> to vector<128x1xf32>
    %cst_56 = arith.constant 1.280000e+02 : f32
    %145 = vector.broadcast %cst_56 : f32 to vector<128x1xf32>
    %146 = arith.divf %144, %145 : vector<128x1xf32>
    %147 = vector.broadcast %146 : vector<128x1xf32> to vector<128x128xf32>
    %148 = arith.subf %140, %147 : vector<128x128xf32>
    %149 = vector.broadcast %146 : vector<128x1xf32> to vector<128x128xf32>
    %150 = arith.subf %140, %149 : vector<128x128xf32>
    %151 = arith.mulf %148, %150 : vector<128x128xf32>
    %cst_57 = arith.constant dense<0.000000e+00> : vector<128xf32>
    %152 = vector.multi_reduction <add>, %151, %cst_57 [1] : vector<128x128xf32> to vector<128xf32>
    %153 = vector.shape_cast %152 : vector<128xf32> to vector<128x1xf32>
    %cst_58 = arith.constant 1.280000e+02 : f32
    %154 = vector.broadcast %cst_58 : f32 to vector<128x1xf32>
    %155 = arith.divf %153, %154 : vector<128x1xf32>
    %156 = vector.broadcast %146 : vector<128x1xf32> to vector<128x128xf32>
    %157 = arith.subf %140, %156 : vector<128x128xf32>
    %cst_59 = arith.constant 9.99999997E-7 : f32
    %158 = vector.broadcast %cst_59 : f32 to vector<128x1xf32>
    %159 = arith.addf %155, %158 : vector<128x1xf32>
    %160 = math.rsqrt %159 : vector<128x1xf32>
    %161 = vector.broadcast %160 : vector<128x1xf32> to vector<128x128xf32>
    %162 = arith.mulf %157, %161 : vector<128x128xf32>
    %163 = vector.broadcast %141 : vector<1x128xf32> to vector<128x128xf32>
    %164 = arith.mulf %162, %163 : vector<128x128xf32>
    %165 = vector.broadcast %142 : vector<1x128xf32> to vector<128x128xf32>
    %166 = arith.addf %164, %165 : vector<128x128xf32>
    %167 = arith.truncf %166 : vector<128x128xf32> to vector<128x128xbf16>
    %cst_60 = arith.constant 0.000000e+00 : f32
    %168 = vector.broadcast %cst_60 : f32 to vector<128x128xf32>
    %c0_61 = arith.constant 0 : index
    %c0_62 = arith.constant 0 : index
    %169 = vector.load %arg10[%c0_61, %c0_62] : memref<128x512xbf16, #tpu.memory_space<vmem>>, vector<128x512xbf16>
    %cst_63 = arith.constant dense<0.000000e+00> : vector<128x512xf32>
    %170 = tpu.matmul %167, %169, %cst_63 {dimension_numbers = #tpu.dot_dimension_numbers<[1], [0], [0], [1], [0, 0, 1, 1], [], []>} : vector<128x128xbf16>, vector<128x512xbf16>, vector<128x512xf32> -> vector<128x512xf32>
    %c0_64 = arith.constant 0 : index
    %c0_65 = arith.constant 0 : index
    %171 = vector.load %arg11[%c0_64, %c0_65] : memref<1x512xf32, #tpu.memory_space<vmem>>, vector<1x512xf32>
    %172 = vector.broadcast %171 : vector<1x512xf32> to vector<128x512xf32>
    %173 = arith.addf %170, %172 : vector<128x512xf32>
    %cst_66 = arith.constant 5.000000e-01 : f32
    %174 = vector.broadcast %cst_66 : f32 to vector<128x512xf32>
    %175 = arith.mulf %174, %173 : vector<128x512xf32>
    %cst_67 = arith.constant 4.471500e-02 : f32
    %176 = vector.broadcast %cst_67 : f32 to vector<128x512xf32>
    %177 = arith.mulf %176, %173 : vector<128x512xf32>
    %178 = arith.mulf %177, %173 : vector<128x512xf32>
    %179 = arith.mulf %178, %173 : vector<128x512xf32>
    %180 = arith.addf %173, %179 : vector<128x512xf32>
    %cst_68 = arith.constant 0.797884583 : f32
    %181 = vector.broadcast %cst_68 : f32 to vector<128x512xf32>
    %182 = arith.mulf %181, %180 : vector<128x512xf32>
    %183 = math.tanh %182 : vector<128x512xf32>
    %cst_69 = arith.constant 1.000000e+00 : f32
    %184 = vector.broadcast %cst_69 : f32 to vector<128x512xf32>
    %185 = arith.addf %184, %183 : vector<128x512xf32>
    %186 = arith.mulf %175, %185 : vector<128x512xf32>
    %187 = arith.truncf %186 : vector<128x512xf32> to vector<128x512xbf16>
    %c0_70 = arith.constant 0 : index
    %c0_71 = arith.constant 0 : index
    %188 = vector.load %arg12[%c0_70, %c0_71] : memref<512x128xbf16, #tpu.memory_space<vmem>>, vector<512x128xbf16>
    %cst_72 = arith.constant dense<0.000000e+00> : vector<128x128xf32>
    %189 = tpu.matmul %187, %188, %cst_72 {dimension_numbers = #tpu.dot_dimension_numbers<[1], [0], [0], [1], [0, 0, 1, 1], [], []>} : vector<128x512xbf16>, vector<512x128xbf16>, vector<128x128xf32> -> vector<128x128xf32>
    %190 = arith.addf %168, %189 : vector<128x128xf32>
    %191 = arith.addf %140, %190 : vector<128x128xf32>
    %c0_73 = arith.constant 0 : index
    %c0_74 = arith.constant 0 : index
    %192 = vector.load %arg13[%c0_73, %c0_74] : memref<1x128xf32, #tpu.memory_space<vmem>>, vector<1x128xf32>
    %193 = vector.broadcast %192 : vector<1x128xf32> to vector<128x128xf32>
    %194 = arith.addf %191, %193 : vector<128x128xf32>
    %c0_75 = arith.constant 0 : index
    %c0_76 = arith.constant 0 : index
    %c0_77 = arith.constant 0 : index
    %195 = vector.load %arg14[%c0_75, %c0_76, %c0_77] : memref<1x128x128xf32, #tpu.memory_space<vmem>>, vector<1x128x128xf32>
    %196 = vector.shape_cast %195 : vector<1x128x128xf32> to vector<128x128xf32>
    %197 = vector.shape_cast %194 : vector<128x128xf32> to vector<1x128x128xf32>
    tpu.vector_store %arg14[%c0_75, %c0_76, %c0_77], %197 {strides = array<i32>} : memref<1x128x128xf32, #tpu.memory_space<vmem>>, vector<1x128x128xf32>,
    return
  }
  func.func @transform_0(%arg0: i32) -> (i32, i32, i32) {
    %c0_i32 = arith.constant 0 : i32
    %c0_i32_0 = arith.constant 0 : i32
    %c0_i32_1 = arith.constant 0 : i32
    return %arg0, %c0_i32, %c0_i32_0 : i32, i32, i32
  }
  func.func @transform_1(%arg0: i32) -> (i32, i32) {
    %c0_i32 = arith.constant 0 : i32
    %c0_i32_0 = arith.constant 0 : i32
    %c0_i32_1 = arith.constant 0 : i32
    return %c0_i32, %c0_i32_0 : i32, i32
  }
  func.func @transform_2(%arg0: i32) -> (i32, i32) {
    %c0_i32 = arith.constant 0 : i32
    %c0_i32_0 = arith.constant 0 : i32
    %c0_i32_1 = arith.constant 0 : i32
    return %c0_i32, %c0_i32_0 : i32, i32
  }
  func.func @transform_3(%arg0: i32) -> (i32, i32) {
    %c0_i32 = arith.constant 0 : i32
    %c0_i32_0 = arith.constant 0 : i32
    %c0_i32_1 = arith.constant 0 : i32
    return %c0_i32, %c0_i32_0 : i32, i32
  }
  func.func @transform_4(%arg0: i32) -> (i32, i32) {
    %c0_i32 = arith.constant 0 : i32
    %c0_i32_0 = arith.constant 0 : i32
    %c0_i32_1 = arith.constant 0 : i32
    return %c0_i32, %c0_i32_0 : i32, i32
  }
  func.func @transform_5(%arg0: i32) -> (i32, i32) {
    %c0_i32 = arith.constant 0 : i32
    %c0_i32_0 = arith.constant 0 : i32
    %c0_i32_1 = arith.constant 0 : i32
    return %c0_i32, %c0_i32_0 : i32, i32
  }
  func.func @transform_6(%arg0: i32) -> (i32, i32) {
    %c0_i32 = arith.constant 0 : i32
    %c0_i32_0 = arith.constant 0 : i32
    %c0_i32_1 = arith.constant 0 : i32
    return %c0_i32, %c0_i32_0 : i32, i32
  }
  func.func @transform_7(%arg0: i32) -> (i32, i32) {
    %c0_i32 = arith.constant 0 : i32
    %c0_i32_0 = arith.constant 0 : i32
    %c0_i32_1 = arith.constant 0 : i32
    return %c0_i32, %c0_i32_0 : i32, i32
  }
  func.func @transform_8(%arg0: i32) -> (i32, i32) {
    %c0_i32 = arith.constant 0 : i32
    %c0_i32_0 = arith.constant 0 : i32
    %c0_i32_1 = arith.constant 0 : i32
    return %c0_i32, %c0_i32_0 : i32, i32
  }
  func.func @transform_9(%arg0: i32) -> (i32, i32) {
    %c0_i32 = arith.constant 0 : i32
    %c0_i32_0 = arith.constant 0 : i32
    %c0_i32_1 = arith.constant 0 : i32
    return %c0_i32, %c0_i32_0 : i32, i32
  }
  func.func @transform_10(%arg0: i32) -> (i32, i32) {
    %c0_i32 = arith.constant 0 : i32
    %c0_i32_0 = arith.constant 0 : i32
    %c0_i32_1 = arith.constant 0 : i32
    return %c0_i32, %c0_i32_0 : i32, i32
  }
  func.func @transform_11(%arg0: i32) -> (i32, i32) {
    %c0_i32 = arith.constant 0 : i32
    %c0_i32_0 = arith.constant 0 : i32
    %c0_i32_1 = arith.constant 0 : i32
    return %c0_i32, %c0_i32_0 : i32, i32
  }
  func.func @transform_12(%arg0: i32) -> (i32, i32) {
    %c0_i32 = arith.constant 0 : i32
    %c0_i32_0 = arith.constant 0 : i32
    %c0_i32_1 = arith.constant 0 : i32
    return %c0_i32, %c0_i32_0 : i32, i32
  }
  func.func @transform_13(%arg0: i32) -> (i32, i32, i32) {
    %c0_i32 = arith.constant 0 : i32
    %c0_i32_0 = arith.constant 0 : i32
    %c0_i32_1 = arith.constant 0 : i32
    return %arg0, %c0_i32, %c0_i32_0 : i32, i32, i32
  }
}

module attributes {stable_mosaic.version = 11 : i64} {
  func.func @ln_head_kernel(%arg0: i32, %arg1: memref<2x128xf32, #tpu.memory_space<vmem>>, %arg2: memref<1x128xf32, #tpu.memory_space<vmem>>, %arg3: memref<1x128xf32, #tpu.memory_space<vmem>>, %arg4: memref<128x128xbf16, #tpu.memory_space<vmem>>, %arg5: memref<1x128xf32, #tpu.memory_space<vmem>>, %arg6: memref<2x128xf32, #tpu.memory_space<vmem>>) attributes {dimension_semantics = [#tpu.dimension_semantics<arbitrary>], iteration_bounds = array<i64: 1>, scalar_prefetch = 0 : i64, scratch_operands = 0 : i64, tpu.core_type = #tpu.core_type<tc>, window_params = [{pipeline_mode = #tpu.pipeline_mode<synchronous>, transform_indices = @transform_0, window_bounds = array<i64: 2, 128>}, {pipeline_mode = #tpu.pipeline_mode<synchronous>, transform_indices = @transform_1, window_bounds = array<i64: 1, 128>}, {pipeline_mode = #tpu.pipeline_mode<synchronous>, transform_indices = @transform_2, window_bounds = array<i64: 1, 128>}, {pipeline_mode = #tpu.pipeline_mode<synchronous>, transform_indices = @transform_3, window_bounds = array<i64: 128, 128>}, {pipeline_mode = #tpu.pipeline_mode<synchronous>, transform_indices = @transform_4, window_bounds = array<i64: 1, 128>}, {pipeline_mode = #tpu.pipeline_mode<synchronous>, transform_indices = @transform_5, window_bounds = array<i64: 2, 128>}]} {
    %c0 = arith.constant 0 : index
    %c0_0 = arith.constant 0 : index
    %0 = vector.load %arg1[%c0, %c0_0] : memref<2x128xf32, #tpu.memory_space<vmem>>, vector<2x128xf32>
    %c0_1 = arith.constant 0 : index
    %c0_2 = arith.constant 0 : index
    %1 = vector.load %arg2[%c0_1, %c0_2] : memref<1x128xf32, #tpu.memory_space<vmem>>, vector<1x128xf32>
    %c0_3 = arith.constant 0 : index
    %c0_4 = arith.constant 0 : index
    %2 = vector.load %arg3[%c0_3, %c0_4] : memref<1x128xf32, #tpu.memory_space<vmem>>, vector<1x128xf32>
    %cst = arith.constant dense<0.000000e+00> : vector<2xf32>
    %3 = vector.multi_reduction <add>, %0, %cst [1] : vector<2x128xf32> to vector<2xf32>
    %4 = vector.shape_cast %3 : vector<2xf32> to vector<2x1xf32>
    %cst_5 = arith.constant 1.280000e+02 : f32
    %5 = vector.broadcast %cst_5 : f32 to vector<2x1xf32>
    %6 = arith.divf %4, %5 : vector<2x1xf32>
    %7 = vector.broadcast %6 : vector<2x1xf32> to vector<2x128xf32>
    %8 = arith.subf %0, %7 : vector<2x128xf32>
    %9 = vector.broadcast %6 : vector<2x1xf32> to vector<2x128xf32>
    %10 = arith.subf %0, %9 : vector<2x128xf32>
    %11 = arith.mulf %8, %10 : vector<2x128xf32>
    %cst_6 = arith.constant dense<0.000000e+00> : vector<2xf32>
    %12 = vector.multi_reduction <add>, %11, %cst_6 [1] : vector<2x128xf32> to vector<2xf32>
    %13 = vector.shape_cast %12 : vector<2xf32> to vector<2x1xf32>
    %cst_7 = arith.constant 1.280000e+02 : f32
    %14 = vector.broadcast %cst_7 : f32 to vector<2x1xf32>
    %15 = arith.divf %13, %14 : vector<2x1xf32>
    %16 = vector.broadcast %6 : vector<2x1xf32> to vector<2x128xf32>
    %17 = arith.subf %0, %16 : vector<2x128xf32>
    %cst_8 = arith.constant 9.99999997E-7 : f32
    %18 = vector.broadcast %cst_8 : f32 to vector<2x1xf32>
    %19 = arith.addf %15, %18 : vector<2x1xf32>
    %20 = math.rsqrt %19 : vector<2x1xf32>
    %21 = vector.broadcast %20 : vector<2x1xf32> to vector<2x128xf32>
    %22 = arith.mulf %17, %21 : vector<2x128xf32>
    %23 = vector.broadcast %1 : vector<1x128xf32> to vector<2x128xf32>
    %24 = arith.mulf %22, %23 : vector<2x128xf32>
    %25 = vector.broadcast %2 : vector<1x128xf32> to vector<2x128xf32>
    %26 = arith.addf %24, %25 : vector<2x128xf32>
    %27 = arith.truncf %26 : vector<2x128xf32> to vector<2x128xbf16>
    %c0_9 = arith.constant 0 : index
    %c0_10 = arith.constant 0 : index
    %28 = vector.load %arg4[%c0_9, %c0_10] : memref<128x128xbf16, #tpu.memory_space<vmem>>, vector<128x128xbf16>
    %cst_11 = arith.constant dense<0.000000e+00> : vector<2x128xf32>
    %29 = tpu.matmul %27, %28, %cst_11 {dimension_numbers = #tpu.dot_dimension_numbers<[1], [0], [0], [1], [0, 0, 1, 1], [], []>} : vector<2x128xbf16>, vector<128x128xbf16>, vector<2x128xf32> -> vector<2x128xf32>
    %c0_12 = arith.constant 0 : index
    %c0_13 = arith.constant 0 : index
    %30 = vector.load %arg5[%c0_12, %c0_13] : memref<1x128xf32, #tpu.memory_space<vmem>>, vector<1x128xf32>
    %31 = vector.broadcast %30 : vector<1x128xf32> to vector<2x128xf32>
    %32 = arith.addf %29, %31 : vector<2x128xf32>
    %c0_14 = arith.constant 0 : index
    %c0_15 = arith.constant 0 : index
    %33 = vector.load %arg6[%c0_14, %c0_15] : memref<2x128xf32, #tpu.memory_space<vmem>>, vector<2x128xf32>
    tpu.vector_store %arg6[%c0_14, %c0_15], %32 {strides = array<i32>} : memref<2x128xf32, #tpu.memory_space<vmem>>, vector<2x128xf32>,
    return
  }
  func.func @transform_0(%arg0: i32) -> (i32, i32) {
    %c0_i32 = arith.constant 0 : i32
    %c0_i32_0 = arith.constant 0 : i32
    %c0_i32_1 = arith.constant 0 : i32
    return %c0_i32, %c0_i32_0 : i32, i32
  }
  func.func @transform_1(%arg0: i32) -> (i32, i32) {
    %c0_i32 = arith.constant 0 : i32
    %c0_i32_0 = arith.constant 0 : i32
    %c0_i32_1 = arith.constant 0 : i32
    return %c0_i32, %c0_i32_0 : i32, i32
  }
  func.func @transform_2(%arg0: i32) -> (i32, i32) {
    %c0_i32 = arith.constant 0 : i32
    %c0_i32_0 = arith.constant 0 : i32
    %c0_i32_1 = arith.constant 0 : i32
    return %c0_i32, %c0_i32_0 : i32, i32
  }
  func.func @transform_3(%arg0: i32) -> (i32, i32) {
    %c0_i32 = arith.constant 0 : i32
    %c0_i32_0 = arith.constant 0 : i32
    %c0_i32_1 = arith.constant 0 : i32
    return %c0_i32, %c0_i32_0 : i32, i32
  }
  func.func @transform_4(%arg0: i32) -> (i32, i32) {
    %c0_i32 = arith.constant 0 : i32
    %c0_i32_0 = arith.constant 0 : i32
    %c0_i32_1 = arith.constant 0 : i32
    return %c0_i32, %c0_i32_0 : i32, i32
  }
  func.func @transform_5(%arg0: i32) -> (i32, i32) {
    %c0_i32 = arith.constant 0 : i32
    %c0_i32_0 = arith.constant 0 : i32
    %c0_i32_1 = arith.constant 0 : i32
    return %c0_i32, %c0_i32_0 : i32, i32
  }
}

</mosaic_0001>

<llo_original>
// kernel: vit_forward.4
$region0: #{vit_forward.4}
  #allocation0 [shape = 'u32[]', space=smem, size = 0x4, offset = 0x4, fixed_abs, tag = 'smem constant byte address 0x4 - core index']
  #allocation1 [shape = 'u32[72,128]{1,0:T(1,128)}', space=vmem, size = 0x9000, scoped, tag = 'internal scratch']
  #allocation2 [shape = 'f32[16,128]{1,0:T(8,128)}', space=vmem, size = 0x2000, scoped, tag = 'scratch operand']
  %s0 = inlined_call_operand.vmem [shape: bf16[16,768], index: 0, kind: input, shape index: {}]
  %s1 = inlined_call_operand.vmem [shape: bf16[768,128], index: 1, kind: input, shape index: {}]
  %s2 = inlined_call_operand.vmem [shape: f32[1,128], index: 2, kind: input, shape index: {}]
  %s3 = inlined_call_operand.vmem [shape: f32[16,128], index: 3, kind: output, shape index: {}]
  %s4 = sld [smem:[#allocation0]]
  $region91: #{vit_forward.4} parent=0
    _
  %s6 = ssub.s32 1, %s4
  %s7 = scalar_select 0, %s6, %s4
  $region1: #{vit_forward.4} parent=0
    #allocation3 [shape = 'u8[16384]{0}', space=vmem, size = 0x4000, scoped, tag = 'input window, operand 0']
    loop: start=0, step=1, limit=5
    $region2: #{vit_forward.4} parent=1 // loop_pre_header
      _
    $region3: #{vit_forward.4} parent=1 // loop_header
      %s9 = sphi 0, %s13
      %p10 = scmp.ge.s32.totalorder %s9, 5
      %s16 = sphi 0, %s35
      %s17 = sphi 0, %s31
      %s18 = sphi 0, %s27
      %s19 = sphi 0, %s16
      %s20 = sphi 0, %s17
      %s21 = sphi 0, %s18
      %s22 = sphi 0, %s19
      %s23 = sphi 0, %s20
      %s24 = sphi 0, %s21
      %s40 = sphi 0, %s42
      %s43 = sphi 0, %s40
      %s44 = sphi 0, %s43
      %s60 = sphi 0, %s44
      %s68 = sphi 0, %s70
      %s71 = sphi 0, %s68
      %s72 = sphi 0, %s71
      %s88 = sphi 0, %s72
      %s94 = sphi 0, %s96
      %s97 = sphi 0, %s94
      %s98 = sphi 0, %s97
      %s114 = sphi 0, %s98
      %s122 = sphi 0, %s124
      %s125 = sphi 0, %s122
      %s126 = sphi 0, %s125
      %s142 = sphi 0, %s126
    $region4: #{vit_forward.4} parent=1 // loop_header_branch
      %12 = sbr.rel (%p10) target = $region8
    $region5: #{vit_forward.4} parent=1 // loop_body
      %s14 = ssub.s32 %s9, 1
      %s15 = ssub.s32 %s9, 2
      %s25 = sadd.s32 1, %s18
      %p26 = scmp.ge.s32.totalorder %s25, 3
      %s27 = scalar_select %p26, 0, %s25
      %s28 = sadd.s32 1, %s17
      %s29 = scalar_select %p26, %s28, %s17
      %p30 = scmp.ge.s32.totalorder %s29, 1
      %s31 = scalar_select %p30, 0, %s29
      %s32 = sadd.s32 1, %s16
      %s33 = scalar_select %p30, %s32, %s16
      %p34 = scmp.ge.s32.totalorder %s33, 1
      %s35 = scalar_select %p34, 0, %s33
      %s36 = ssub.s32 %s16, %s35
      %s37 = ssub.s32 %s18, %s27
      %s38 = sor.u32 %s36, %s37
      %p39 = scmp.eq.s32.totalorder %s38, 0
      %s41 = sadd.s32 %s40, 1
      %s42 = scalar_select %p39, %s40, %s41
      %p45 = pneg %p39
      %p46 = scmp.eq.s32.totalorder %s9, 2
      %p47 = por %p45, %p46
      %p48 = scmp.ne.s32.totalorder %s40, %s43
      %p49 = scmp.eq.s32.totalorder %s9, 0
      %p50 = por %p48, %p49
      %p51 = scmp.ne.s32.totalorder %s40, %s43
      %p52 = scmp.eq.s32.totalorder %s14, 2
      %p53 = por %p51, %p52
      %p54 = scmp.ne.s32.totalorder %s43, %s44
      %p55 = scmp.eq.s32.totalorder %s14, 0
      %p56 = por %p54, %p55
      %p57 = scmp.ne.s32.totalorder %s43, %s44
      %p58 = scmp.eq.s32.totalorder %s15, 2
      %p59 = por %p57, %p58
      %p61 = scmp.ne.s32.totalorder %s44, %s60
      %p62 = scmp.eq.s32.totalorder %s15, 0
      %p63 = por %p61, %p62
      %s64 = ssub.s32 %s18, %s27
      %s65 = ssub.s32 %s17, %s31
      %s66 = sor.u32 %s64, %s65
      %p67 = scmp.eq.s32.totalorder %s66, 0
      %s69 = sadd.s32 %s68, 1
      %s70 = scalar_select %p67, %s68, %s69
      %p73 = pneg %p67
      %p74 = scmp.eq.s32.totalorder %s9, 2
      %p75 = por %p73, %p74
      %p76 = scmp.ne.s32.totalorder %s68, %s71
      %p77 = scmp.eq.s32.totalorder %s9, 0
      %p78 = por %p76, %p77
      %p79 = scmp.ne.s32.totalorder %s68, %s71
      %p80 = scmp.eq.s32.totalorder %s14, 2
      %p81 = por %p79, %p80
      %p82 = scmp.ne.s32.totalorder %s71, %s72
      %p83 = scmp.eq.s32.totalorder %s14, 0
      %p84 = por %p82, %p83
      %p85 = scmp.ne.s32.totalorder %s71, %s72
      %p86 = scmp.eq.s32.totalorder %s15, 2
      %p87 = por %p85, %p86
      %p89 = scmp.ne.s32.totalorder %s72, %s88
      %p90 = scmp.eq.s32.totalorder %s15, 0
      %p91 = por %p89, %p90
      %s92 = ssub.s32 %s17, %s31
      %p93 = scmp.eq.s32.totalorder %s92, 0
      %s95 = sadd.s32 %s94, 1
      %s96 = scalar_select %p93, %s94, %s95
      %p99 = pneg %p93
      %p100 = scmp.eq.s32.totalorder %s9, 2
      %p101 = por %p99, %p100
      %p102 = scmp.ne.s32.totalorder %s94, %s97
      %p103 = scmp.eq.s32.totalorder %s9, 0
      %p104 = por %p102, %p103
      %p105 = scmp.ne.s32.totalorder %s94, %s97
      %p106 = scmp.eq.s32.totalorder %s14, 2
      %p107 = por %p105, %p106
      %p108 = scmp.ne.s32.totalorder %s97, %s98
      %p109 = scmp.eq.s32.totalorder %s14, 0
      %p110 = por %p108, %p109
      %p111 = scmp.ne.s32.totalorder %s97, %s98
      %p112 = scmp.eq.s32.totalorder %s15, 2
      %p113 = por %p111, %p112
      %p115 = scmp.ne.s32.totalorder %s98, %s114
      %p116 = scmp.eq.s32.totalorder %s15, 0
      %p117 = por %p115, %p116
      %s118 = ssub.s32 %s16, %s35
      %s119 = ssub.s32 %s17, %s31
      %s120 = sor.u32 %s118, %s119
      %p121 = scmp.eq.s32.totalorder %s120, 0
      %s123 = sadd.s32 %s122, 1
      %s124 = scalar_select %p121, %s122, %s123
      %p127 = pneg %p121
      %p128 = scmp.eq.s32.totalorder %s9, 2
      %p129 = por %p127, %p128
      %p130 = scmp.ne.s32.totalorder %s122, %s125
      %p131 = scmp.eq.s32.totalorder %s9, 0
      %p132 = por %p130, %p131
      %p133 = scmp.ne.s32.totalorder %s122, %s125
      %p134 = scmp.eq.s32.totalorder %s14, 2
      %p135 = por %p133, %p134
      %p136 = scmp.ne.s32.totalorder %s125, %s126
      %p137 = scmp.eq.s32.totalorder %s14, 0
      %p138 = por %p136, %p137
      %p139 = scmp.ne.s32.totalorder %s125, %s126
      %p140 = scmp.eq.s32.totalorder %s15, 2
      %p141 = por %p139, %p140
      %p143 = scmp.ne.s32.totalorder %s126, %s142
      %p144 = scmp.eq.s32.totalorder %s15, 0
      %p145 = por %p143, %p144
      %p146 = scmp.le.s32.totalorder 1, %s9
      %p147 = scmp.lt.s32.totalorder %s9, 4
      %p148 = pnand %p146, %p147
      %p149 = pneg %p148
      // Predicated region
      $region9: #{vit_forward.4} parent=5 // pred_check
        _
      $region10: #{vit_forward.4} parent=5 // pred_check_branch
        %151 = sbr.rel (%p148) target = $region12
      $region11: #{vit_forward.4} parent=5 // pred_region
        %s152 = ssub.s32 %s9, 1
        // Predicated region
        $region13: #{vit_forward.4} parent=11 // pred_check
          %p153 = pneg %p110
        $region14: #{vit_forward.4} parent=11 // pred_check_branch
          %155 = sbr.rel (%p153) target = $region16
        $region15: #{vit_forward.4} parent=11 // pred_region
          %p156 = scmp.lt.s32.totalorder %s20, 0
          %s157 = scalar_select %p156, %s20, 0
          %s158 = scalar_lea.vmem %s2, %s157
        $region16: #{vit_forward.4} parent=11 // pred_fallthru
          _
      $region12: #{vit_forward.4} parent=5 // pred_fallthru
        _
      %p159 = scmp.lt.s32.totalorder %s9, 3
      // Predicated region
      $region17: #{vit_forward.4} parent=5 // pred_check
        %p160 = pneg %p159
      $region18: #{vit_forward.4} parent=5 // pred_check_branch
        %162 = sbr.rel (%p160) target = $region20
      $region19: #{vit_forward.4} parent=5 // pred_region
        // Predicated region
        $region21: #{vit_forward.4} parent=19 // pred_check
          %p163 = pneg %p50
        $region22: #{vit_forward.4} parent=19 // pred_check_branch
          %165 = sbr.rel (%p163) target = $region24
        $region23: #{vit_forward.4} parent=19 // pred_region
          %s166 = sand.u32 %s40, 1
          %s167 = sand.u32 %s40, 1
          %s168 = smul.addr %s167, 16
          %s169 = scalar_lea.vmem [#allocation3], %s168
          %s170 = smul.u32 2, %s16
          %s171 = smul.u32 2, %s18
          %s172 = smul.addr %s170, 6
          %s173 = sadd.s32 %s171, %s172
          %s174 = smul.addr %s173, 4
          %s175 = scalar_lea.vmem %s0, %s174
          // Predicated region
          $region25: #{vit_forward.4} parent=23 // pred_check
            _
          $region26: #{vit_forward.4} parent=23 // pred_check_branch
            %177 = sbr.rel (0) target = $region28
          $region27: #{vit_forward.4} parent=23 // pred_region
            // Predicated region
            $region29: #{vit_forward.4} parent=27 // pred_check
              _
            $region30: #{vit_forward.4} parent=27 // pred_check_branch
              %179 = sbr.rel (0) target = $region32
            $region31: #{vit_forward.4} parent=27 // pred_region
              // Predicated region
              $region44: #{vit_forward.4} parent=31 // pred_check
                _
              $region45: #{vit_forward.4} parent=31 // pred_check_branch
                %197 = sbr.rel (0) target = $region47
              $region46: #{vit_forward.4} parent=31 // pred_region
                loop: start=0, step=1, limit=1
                $region48: #{vit_forward.4} parent=46 // loop_pre_header
                  _
                $region49: #{vit_forward.4} parent=46 // loop_header
                  %s199 = sphi 0, %s203
                  %p200 = scmp.ge.s32.totalorder %s199, 1
                  %s204 = sphi %s175, %s175
                  %s205 = sphi %s169, %s169
                $region50: #{vit_forward.4} parent=46 // loop_header_branch
                  %202 = sbr.rel (%p200) target = $region54
                $region51: #{vit_forward.4} parent=46 // loop_body
                  %v206 = vld [vmem:[%s204] sm:$0xff]
                  %207 = vst [vmem:[%s205] sm:$0xff] %v206
                  %v208 = vld [vmem:[%s204 + $0x18] sm:$0xff]
                  %209 = vst [vmem:[%s205 + $0x8] sm:$0xff] %v208
                $region52: #{vit_forward.4} parent=46 // loop_footer
                  %s203 = sadd.s32 1, %s199
                $region53: #{vit_forward.4} parent=46 // loop_footer_branch
                  %198 = sbr.rel target = $region49
                $region54: #{vit_forward.4} parent=46 // loop_exit
                  _
              $region47: #{vit_forward.4} parent=31 // pred_fallthru
                _
              // Predicated region
              $region55: #{vit_forward.4} parent=31 // pred_check
                _
              $region56: #{vit_forward.4} parent=31 // pred_check_branch
                %211 = sbr.rel target = $region58
              $region57: #{vit_forward.4} parent=31 // pred_region
                _
              $region58: #{vit_forward.4} parent=31 // pred_fallthru
                _
            $region32: #{vit_forward.4} parent=27 // pred_fallthru
              _
            // Predicated region
            $region33: #{vit_forward.4} parent=27 // pred_check
              _
            $region34: #{vit_forward.4} parent=27 // pred_check_branch
              %181 = sbr.rel target = $region36
            $region35: #{vit_forward.4} parent=27 // pred_region
              %s183 = ssub.s32 256, 1
              loop: start=0, step=1, limit=1
              $region37: #{vit_forward.4} parent=35 // loop_pre_header
                _
              $region38: #{vit_forward.4} parent=35 // loop_header
                %s185 = sphi 0, %s189
                %p186 = scmp.ge.s32.totalorder %s185, 1
                %s190 = sphi %s175, %s175
                %s191 = sphi %s169, %s169
              $region39: #{vit_forward.4} parent=35 // loop_header_branch
                %188 = sbr.rel (%p186) target = $region43
              $region40: #{vit_forward.4} parent=35 // loop_body
                %v192 = vld [vmem:[%s190] sm:%s183]
                %193 = vst [vmem:[%s191] sm:%s183] %v192
                %v194 = vld [vmem:[%s190 + $0x18] sm:%s183]
                %195 = vst [vmem:[%s191 + $0x8] sm:%s183] %v194
              $region41: #{vit_forward.4} parent=35 // loop_footer
                %s189 = sadd.s32 1, %s185
              $region42: #{vit_forward.4} parent=35 // loop_footer_branch
                %184 = sbr.rel target = $region38
              $region43: #{vit_forward.4} parent=35 // loop_exit
                _
            $region36: #{vit_forward.4} parent=27 // pred_fallthru
              _
          $region28: #{vit_forward.4} parent=23 // pred_fallthru
            _
          %212 = vnop
        $region24: #{vit_forward.4} parent=19 // pred_fallthru
          _
        // Predicated region
        $region59: #{vit_forward.4} parent=19 // pred_check
          %p213 = pneg %p78
        $region60: #{vit_forward.4} parent=19 // pred_check_branch
          %215 = sbr.rel (%p213) target = $region62
        $region61: #{vit_forward.4} parent=19 // pred_region
          %s216 = smul.u32 32, %s18
          %p217 = scmp.lt.s32.totalorder %s216, 95
          %s218 = scalar_select %p217, %s216, 95
          %p219 = scmp.lt.s32.totalorder %s17, 0
          %s220 = scalar_select %p219, %s17, 0
          %s221 = sadd.s32 %s220, %s218
          %s222 = smul.addr %s221, 4
          %s223 = scalar_lea.vmem %s1, %s222
          %s224 = smul.u32 32, %s18
        $region62: #{vit_forward.4} parent=19 // pred_fallthru
          _
      $region20: #{vit_forward.4} parent=5 // pred_fallthru
        _
      %p225 = scmp.le.s32.totalorder 1, %s9
      %p226 = scmp.lt.s32.totalorder %s9, 4
      %p227 = pnand %p225, %p226
      %p228 = pneg %p227
      // Predicated region
      $region63: #{vit_forward.4} parent=5 // pred_check
        _
      $region64: #{vit_forward.4} parent=5 // pred_check_branch
        %230 = sbr.rel (%p227) target = $region66
      $region65: #{vit_forward.4} parent=5 // pred_region
        %s231 = ssub.s32 %s9, 1
        %s232 = sand.u32 %s43, 1
        %s233 = sand.u32 %s43, 1
        %s234 = smul.addr %s233, 16
        %s235 = scalar_lea.vmem [#allocation3], %s234
        // Predicated region
        $region67: #{vit_forward.4} parent=65 // pred_check
          %p236 = pneg %p56
        $region68: #{vit_forward.4} parent=65 // pred_check_branch
          %238 = sbr.rel (%p236) target = $region70
        $region69: #{vit_forward.4} parent=65 // pred_region
          _
        $region70: #{vit_forward.4} parent=65 // pred_fallthru
          _
        %s239 = sand.u32 %s43, 1
        %s240 = sand.u32 %s43, 1
        %s241 = smul.addr %s240, 16
        %s242 = scalar_lea.vmem [#allocation3], %s241
        %p243 = pneg %p56
        %p244 = pneg %p53
        %s245 = smul.u32 32, %s21
        %p246 = scmp.lt.s32.totalorder %s245, 95
        %s247 = scalar_select %p246, %s245, 95
        %p248 = scmp.lt.s32.totalorder %s20, 0
        %s249 = scalar_select %p248, %s20, 0
        %s250 = sadd.s32 %s249, %s247
        %s251 = smul.addr %s250, 4
        %s252 = scalar_lea.vmem %s1, %s251
        %p253 = pneg %p84
        %p254 = pneg %p81
        %p255 = scmp.lt.s32.totalorder %s20, 0
        %s256 = scalar_select %p255, %s20, 0
        %s257 = scalar_lea.vmem %s2, %s256
        %p258 = pneg %p110
        %p259 = pneg %p107
        %p260 = pneg %p138
        %p261 = pneg %p135
        %s262 = smul.u32 2, %s19
        %p263 = scmp.lt.s32.totalorder %s262, 1
        %s264 = scalar_select %p263, %s262, 1
        %p265 = scmp.lt.s32.totalorder %s20, 0
        %s266 = scalar_select %p265, %s20, 0
        %s267 = sadd.s32 %s266, %s264
        %s268 = smul.addr %s267, 8
        %s269 = scalar_lea.vmem %s3, %s268
        %s270 = smul.u32 2, %s19
        %s271 = smul.u32 2, %s21
        %s272 = smul.u32 32, %s21
        %p273 = scmp.lt.s32.totalorder %s272, 95
        %s274 = scalar_select %p273, %s272, 95
        %p275 = scmp.lt.s32.totalorder %s20, 0
        %s276 = scalar_select %p275, %s20, 0
        %s277 = sadd.s32 %s276, %s274
        %s278 = smul.addr %s277, 4
        %s279 = scalar_lea.vmem %s1, %s278
        %s280 = smul.u32 32, %s21
        %p281 = scmp.lt.s32.totalorder %s20, 0
        %s282 = scalar_select %p281, %s20, 0
        %s283 = scalar_lea.vmem %s2, %s282
        %s284 = smul.u32 2, %s19
        %p285 = scmp.lt.s32.totalorder %s284, 1
        %s286 = scalar_select %p285, %s284, 1
        %p287 = scmp.lt.s32.totalorder %s20, 0
        %s288 = scalar_select %p287, %s20, 0
        %s289 = sadd.s32 %s288, %s286
        %s290 = smul.addr %s289, 8
        %s291 = scalar_lea.vmem %s3, %s290
        %s292 = smul.u32 2, %s19
        %p293 = scmp.eq.s32.totalorder %s21, 0
        // Predicated region
        $region71: #{vit_forward.4} parent=65 // pred_check
          %p294 = pneg %p293
        $region72: #{vit_forward.4} parent=65 // pred_check_branch
          %296 = sbr.rel (%p294) target = $region74
        $region73: #{vit_forward.4} parent=65 // pred_region
          %297 = vst [vmem:[#allocation2] sm:$0xff] 0.0
          %298 = vst [vmem:[#allocation2 + $0x8] sm:$0xff] 0.0
        $region74: #{vit_forward.4} parent=65 // pred_fallthru
          _
        %v299 = vld [vmem:[#allocation2] sm:$0xff]
        %v300 = vld [vmem:[#allocation2 + $0x8] sm:$0xff]
        %v301 = vld [vmem:[%s235] sm:$0xff]
        %v302 = vld [vmem:[%s235 + $0x8] sm:$0xff]
        %v303 = vld [vmem:[%s279] sm:$0xf]
        %v304 = vld [vmem:[%s279 + $0x4] sm:$0xf]
        %v305 = vld [vmem:[%s279 + $0x8] sm:$0xf]
        %v306 = vld [vmem:[%s279 + $0xc] sm:$0xf]
        %v307 = vld [vmem:[%s279 + $0x10] sm:$0xf]
        %v308 = vld [vmem:[%s279 + $0x14] sm:$0xf]
        %v309 = vld [vmem:[%s279 + $0x18] sm:$0xf]
        %v310 = vld [vmem:[%s279 + $0x1c] sm:$0xf]
        %v311 = vld [vmem:[%s279 + $0x20] sm:$0xf]
        %v312 = vld [vmem:[%s279 + $0x24] sm:$0xf]
        %v313 = vld [vmem:[%s279 + $0x28] sm:$0xf]
        %v314 = vld [vmem:[%s279 + $0x2c] sm:$0xf]
        %v315 = vld [vmem:[%s279 + $0x30] sm:$0xf]
        %v316 = vld [vmem:[%s279 + $0x34] sm:$0xf]
        %v317 = vld [vmem:[%s279 + $0x38] sm:$0xf]
        %v318 = vld [vmem:[%s279 + $0x3c] sm:$0xf]
        %v319 = vld [vmem:[%s279 + $0x40] sm:$0xf]
        %v320 = vld [vmem:[%s279 + $0x44] sm:$0xf]
        %v321 = vld [vmem:[%s279 + $0x48] sm:$0xf]
        %v322 = vld [vmem:[%s279 + $0x4c] sm:$0xf]
        %v323 = vld [vmem:[%s279 + $0x50] sm:$0xf]
        %v324 = vld [vmem:[%s279 + $0x54] sm:$0xf]
        %v325 = vld [vmem:[%s279 + $0x58] sm:$0xf]
        %v326 = vld [vmem:[%s279 + $0x5c] sm:$0xf]
        %v327 = vld [vmem:[%s279 + $0x60] sm:$0xf]
        %v328 = vld [vmem:[%s279 + $0x64] sm:$0xf]
        %v329 = vld [vmem:[%s279 + $0x68] sm:$0xf]
        %v330 = vld [vmem:[%s279 + $0x6c] sm:$0xf]
        %v331 = vld [vmem:[%s279 + $0x70] sm:$0xf]
        %v332 = vld [vmem:[%s279 + $0x74] sm:$0xf]
        %v333 = vld [vmem:[%s279 + $0x78] sm:$0xf]
        %v334 = vld [vmem:[%s279 + $0x7c] sm:$0xf]
        %v337 = vunpack.c.l.b16 %v301
        %v338 = vunpack.c.h.b16 %v301
        %v339 = vunpack.c.l.b16 %v302
        %v340 = vunpack.c.h.b16 %v302
        %v341 = vpack.c.b16 %v339, %v337
        %v342 = vpack.c.b16 %v340, %v338
        %v377 = vunpack.c.l.b16 %v303
        %v378 = vunpack.c.l.b16 %v304
        %v379 = vunpack.c.l.b16 %v305
        %v380 = vunpack.c.l.b16 %v306
        %v381 = vunpack.c.l.b16 %v307
        %v382 = vunpack.c.l.b16 %v308
        %v383 = vunpack.c.l.b16 %v309
        %v384 = vunpack.c.l.b16 %v310
        %v385 = vunpack.c.l.b16 %v311
        %v386 = vunpack.c.l.b16 %v312
        %v387 = vunpack.c.l.b16 %v313
        %v388 = vunpack.c.l.b16 %v314
        %v389 = vunpack.c.l.b16 %v315
        %v390 = vunpack.c.l.b16 %v316
        %v391 = vunpack.c.l.b16 %v317
        %v392 = vunpack.c.l.b16 %v318
        %v393 = vunpack.c.l.b16 %v319
        %v394 = vunpack.c.l.b16 %v320
        %v395 = vunpack.c.l.b16 %v321
        %v396 = vunpack.c.l.b16 %v322
        %v397 = vunpack.c.l.b16 %v323
        %v398 = vunpack.c.l.b16 %v324
        %v399 = vunpack.c.l.b16 %v325
        %v400 = vunpack.c.l.b16 %v326
        %v401 = vunpack.c.l.b16 %v327
        %v402 = vunpack.c.l.b16 %v328
        %v403 = vunpack.c.l.b16 %v329
        %v404 = vunpack.c.l.b16 %v330
        %v405 = vunpack.c.l.b16 %v331
        %v406 = vunpack.c.l.b16 %v332
        %v407 = vunpack.c.l.b16 %v333
        %v408 = vunpack.c.l.b16 %v334
        %v409 = vpack.c.b16 %v378, %v377
        %v410 = vpack.c.b16 %v380, %v379
        %v411 = vpack.c.b16 %v382, %v381
        %v412 = vpack.c.b16 %v384, %v383
        %v413 = vpack.c.b16 %v386, %v385
        %v414 = vpack.c.b16 %v388, %v387
        %v415 = vpack.c.b16 %v390, %v389
        %v416 = vpack.c.b16 %v392, %v391
        %v417 = vpack.c.b16 %v394, %v393
        %v418 = vpack.c.b16 %v396, %v395
        %v419 = vpack.c.b16 %v398, %v397
        %v420 = vpack.c.b16 %v400, %v399
        %v421 = vpack.c.b16 %v402, %v401
        %v422 = vpack.c.b16 %v404, %v403
        %v423 = vpack.c.b16 %v406, %v405
        %v424 = vpack.c.b16 %v408, %v407
        %441 = vmatpush.bf16.msra.mxu0 %v416
        %442 = vmatpush.bf16.msra.mxu0 %v415
        %443 = vmatpush.bf16.msra.mxu0 %v414
        %444 = vmatpush.bf16.msra.mxu0 %v413
        %445 = vmatpush.bf16.msra.mxu0 %v412
        %446 = vmatpush.bf16.msra.mxu0 %v411
        %447 = vmatpush.bf16.msra.mxu0 %v410
        %448 = vmatpush.bf16.msra.mxu0 %v409
        %449 = vmatmul.bf16.gmra.mxu0 %v341
        %v450 = vpop.f32.mrf.mxu0
        %v451 = vadd.f32 0.0, %v450
        %v452 = vpop.f32.mrf.mxu0
        %v453 = vadd.f32 0.0, %v452
        %454 = vdwg.mxu0
        %455 = vmatpush.bf16.msra.mxu0 %v424
        %456 = vmatpush.bf16.msra.mxu0 %v423
        %457 = vmatpush.bf16.msra.mxu0 %v422
        %458 = vmatpush.bf16.msra.mxu0 %v421
        %459 = vmatpush.bf16.msra.mxu0 %v420
        %460 = vmatpush.bf16.msra.mxu0 %v419
        %461 = vmatpush.bf16.msra.mxu0 %v418
        %462 = vmatpush.bf16.msra.mxu0 %v417
        %463 = vmatmul.bf16.gmra.mxu0 %v342
        %v464 = vpop.f32.mrf.mxu0
        %v465 = vadd.f32 %v451, %v464
        %v466 = vpop.f32.mrf.mxu0
        %v467 = vadd.f32 %v453, %v466
        %468 = vdwg.mxu0
        %v469 = vadd.f32 %v299, %v465
        %v470 = vadd.f32 %v300, %v467
        %471 = vst [vmem:[#allocation2] sm:$0xff] %v469
        %472 = vst [vmem:[#allocation2 + $0x8] sm:$0xff] %v470
        %p473 = scmp.eq.s32.totalorder %s21, 2
        // Predicated region
        $region75: #{vit_forward.4} parent=65 // pred_check
          %p474 = pneg %p473
        $region76: #{vit_forward.4} parent=65 // pred_check_branch
          %476 = sbr.rel (%p474) target = $region78
        $region77: #{vit_forward.4} parent=65 // pred_region
          %v477 = vld [vmem:[#allocation2] sm:$0xff]
          %v478 = vld [vmem:[#allocation2 + $0x8] sm:$0xff]
          %v479 = vld [vmem:[%s283] sm:$0x1]
          %v481 = vperm.slane %v479, 0
          %v483 = vadd.f32 %v477, %v481
          %v484 = vadd.f32 %v478, %v481
          %485 = vst [vmem:[%s291] sm:$0xff] %v483
          %486 = vst [vmem:[%s291 + $0x8] sm:$0xff] %v484
        $region78: #{vit_forward.4} parent=65 // pred_fallthru
          _
        %s487 = smul.u32 2, %s19
        %p488 = scmp.lt.s32.totalorder %s487, 1
        %s489 = scalar_select %p488, %s487, 1
        %p490 = scmp.lt.s32.totalorder %s20, 0
        %s491 = scalar_select %p490, %s20, 0
        %s492 = sadd.s32 %s491, %s489
        %s493 = smul.addr %s492, 8
        %s494 = scalar_lea.vmem %s3, %s493
        // Predicated region
        $region79: #{vit_forward.4} parent=65 // pred_check
          %p495 = pneg %p135
        $region80: #{vit_forward.4} parent=65 // pred_check_branch
          %497 = sbr.rel (%p495) target = $region82
        $region81: #{vit_forward.4} parent=65 // pred_region
          %s498 = smul.u32 2, %s19
        $region82: #{vit_forward.4} parent=65 // pred_fallthru
          _
        // Predicated region
        $region83: #{vit_forward.4} parent=65 // pred_check
          %p499 = pneg %p135
        $region84: #{vit_forward.4} parent=65 // pred_check_branch
          %501 = sbr.rel (%p499) target = $region86
        $region85: #{vit_forward.4} parent=65 // pred_region
          %s502 = smul.u32 2, %s19
          %p503 = scmp.lt.s32.totalorder %s502, 1
          %s504 = scalar_select %p503, %s502, 1
          %p505 = scmp.lt.s32.totalorder %s20, 0
          %s506 = scalar_select %p505, %s20, 0
          %s507 = sadd.s32 %s506, %s504
          %s508 = smul.addr %s507, 8
          %s509 = scalar_lea.vmem %s3, %s508
        $region86: #{vit_forward.4} parent=65 // pred_fallthru
          _
      $region66: #{vit_forward.4} parent=5 // pred_fallthru
        _
      %p510 = scmp.le.s32.totalorder 2, %s9
      // Predicated region
      $region87: #{vit_forward.4} parent=5 // pred_check
        %p511 = pneg %p510
      $region88: #{vit_forward.4} parent=5 // pred_check_branch
        %513 = sbr.rel (%p511) target = $region90
      $region89: #{vit_forward.4} parent=5 // pred_region
        %s514 = ssub.s32 %s9, 2
      $region90: #{vit_forward.4} parent=5 // pred_fallthru
        _
    $region6: #{vit_forward.4} parent=1 // loop_footer
      %s13 = sadd.s32 1, %s9
    $region7: #{vit_forward.4} parent=1 // loop_footer_branch
      %8 = sbr.rel target = $region3
    $region8: #{vit_forward.4} parent=1 // loop_exit
      _

// kernel: vit_forward.7
$region0: #{vit_forward.7}
  #allocation0 [shape = 'u32[]', space=smem, size = 0x4, offset = 0x4, fixed_abs, tag = 'smem constant byte address 0x4 - core index']
  #allocation1 [shape = 'u32[72,128]{1,0:T(1,128)}', space=vmem, size = 0x9000, scoped, tag = 'internal scratch']
  %s0 = inlined_call_operand.vmem [shape: f32[2,128], index: 0, kind: input, shape index: {}]
  %s1 = inlined_call_operand.vmem [shape: f32[1,128], index: 1, kind: input, shape index: {}]
  %s2 = inlined_call_operand.vmem [shape: f32[1,128], index: 2, kind: input, shape index: {}]
  %s3 = inlined_call_operand.vmem [shape: bf16[128,128], index: 3, kind: input, shape index: {}]
  %s4 = inlined_call_operand.vmem [shape: f32[1,128], index: 4, kind: input, shape index: {}]
  %s5 = inlined_call_operand.hbm [shape: f32[2,128], index: 5, kind: output, shape index: {}]
  %s6 = sld [smem:[#allocation0]]
  $region30: #{vit_forward.7} parent=0
    _
  %s8 = ssub.s32 1, %s6
  %s9 = scalar_select 0, %s8, %s6
  $region1: #{vit_forward.7} parent=0
    #allocation2 [shape = 'u8[1024]{0}', space=vmem, size = 0x400, scoped, tag = 'output window, operand 0, single buffered']
    #allocation3 [shape = 's32[1]{0}', space=sflag, size = 0x4, scoped, tag = 'scoped memory for vit_forward.7']
    %10 = vsyncpa [#allocation3], 0
    // Predicated region
    $region2: #{vit_forward.7} parent=1 // pred_check
      _
    $region3: #{vit_forward.7} parent=1 // pred_check_branch
      %12 = sbr.rel (0) target = $region5
    $region4: #{vit_forward.7} parent=1 // pred_region
      _
    $region5: #{vit_forward.7} parent=1 // pred_fallthru
      _
    // Predicated region
    $region6: #{vit_forward.7} parent=1 // pred_check
      _
    $region7: #{vit_forward.7} parent=1 // pred_check_branch
      %14 = sbr.rel (0) target = $region9
    $region8: #{vit_forward.7} parent=1 // pred_region
      _
    $region9: #{vit_forward.7} parent=1 // pred_fallthru
      _
    // Predicated region
    $region10: #{vit_forward.7} parent=1 // pred_check
      _
    $region11: #{vit_forward.7} parent=1 // pred_check_branch
      %16 = sbr.rel (0) target = $region13
    $region12: #{vit_forward.7} parent=1 // pred_region
      _
    $region13: #{vit_forward.7} parent=1 // pred_fallthru
      _
    // Predicated region
    $region14: #{vit_forward.7} parent=1 // pred_check
      _
    $region15: #{vit_forward.7} parent=1 // pred_check_branch
      %18 = sbr.rel (0) target = $region17
    $region16: #{vit_forward.7} parent=1 // pred_region
      _
    $region17: #{vit_forward.7} parent=1 // pred_fallthru
      _
    // Predicated region
    $region18: #{vit_forward.7} parent=1 // pred_check
      _
    $region19: #{vit_forward.7} parent=1 // pred_check_branch
      %20 = sbr.rel (0) target = $region21
    $region20: #{vit_forward.7} parent=1 // pred_region
      _
    $region21: #{vit_forward.7} parent=1 // pred_fallthru
      _
    %v21 = vld [vmem:[%s0] sm:$0x3]
    %v22 = vld [vmem:[%s1] sm:$0x1]
    %v23 = vld [vmem:[%s2] sm:$0x1]
    %vm24 = vcmask 1041408
    %v25 = vsel %vm24, %v21, 0.0
    %26 = vadd.xlane.f32.xlu0 %v25
    %v27 = vpop.xlane.xlu0 %26
    %v28 = vrcp.pop 128.0
    %v29 = vmul.f32 128.0, %v28
    %v30 = vsub.f32 1.0, %v29
    %v31 = vmul.f32 %v28, %v30
    %v32 = vadd.f32 %v28, %v31
    %vm33 = vweird.f32 %v28
    %v34 = vsel %vm33, %v28, %v32
    %v35 = vmul.f32 %v27, %v34
    %v36 = vsub.f32 %v21, %v35
    %v37 = vmul.f32 %v36, %v36
    %v38 = vsel %vm24, %v37, 0.0
    %39 = vadd.xlane.f32.xlu0 %v38
    %v40 = vpop.xlane.xlu0 %39
    %v41 = vmul.f32 %v40, %v34
    %v42 = vadd.f32 %v41, 1e-06
    %v43 = vrsqrt.pop %v42
    %v44 = vmul.f32 %v43, %v42
    %v45 = vmul.f32 %v44, %v43
    %v46 = vmul.f32 0.5, %v45
    %v47 = vsub.f32 1.5, %v46
    %v48 = vmul.f32 %v43, %v47
    %vm49 = vweird.f32 %v42
    %vm50 = vweird.f32 %v43
    %vm51 = vmor %vm49, %vm50
    %v52 = vsel %vm51, %v43, %v48
    %v53 = vmul.f32 %v36, %v52
    %v55 = vperm.slane %v22, 0
    %v57 = vmul.f32 %v53, %v55
    %v59 = vperm.slane %v23, 0
    %v61 = vadd.f32 %v57, %v59
    %v62 = vpack.c.bf16 %v61, %v61
    %v63 = vld [vmem:[%s3] sm:$0xf]
    %v64 = vld [vmem:[%s3 + $0x4] sm:$0xf]
    %v65 = vld [vmem:[%s3 + $0x8] sm:$0xf]
    %v66 = vld [vmem:[%s3 + $0xc] sm:$0xf]
    %v67 = vld [vmem:[%s3 + $0x10] sm:$0xf]
    %v68 = vld [vmem:[%s3 + $0x14] sm:$0xf]
    %v69 = vld [vmem:[%s3 + $0x18] sm:$0xf]
    %v70 = vld [vmem:[%s3 + $0x1c] sm:$0xf]
    %v71 = vld [vmem:[%s3 + $0x20] sm:$0xf]
    %v72 = vld [vmem:[%s3 + $0x24] sm:$0xf]
    %v73 = vld [vmem:[%s3 + $0x28] sm:$0xf]
    %v74 = vld [vmem:[%s3 + $0x2c] sm:$0xf]
    %v75 = vld [vmem:[%s3 + $0x30] sm:$0xf]
    %v76 = vld [vmem:[%s3 + $0x34] sm:$0xf]
    %v77 = vld [vmem:[%s3 + $0x38] sm:$0xf]
    %v78 = vld [vmem:[%s3 + $0x3c] sm:$0xf]
    %v79 = vld [vmem:[%s4] sm:$0x1]
    %v81 = vperm.slane %v79, 0
    %v99 = vunpack.c.l.b16 %v63
    %v100 = vunpack.c.l.b16 %v64
    %v101 = vunpack.c.l.b16 %v65
    %v102 = vunpack.c.l.b16 %v66
    %v103 = vunpack.c.l.b16 %v67
    %v104 = vunpack.c.l.b16 %v68
    %v105 = vunpack.c.l.b16 %v69
    %v106 = vunpack.c.l.b16 %v70
    %v107 = vunpack.c.l.b16 %v71
    %v108 = vunpack.c.l.b16 %v72
    %v109 = vunpack.c.l.b16 %v73
    %v110 = vunpack.c.l.b16 %v74
    %v111 = vunpack.c.l.b16 %v75
    %v112 = vunpack.c.l.b16 %v76
    %v113 = vunpack.c.l.b16 %v77
    %v114 = vunpack.c.l.b16 %v78
    %v115 = vpack.c.b16 %v100, %v99
    %v116 = vpack.c.b16 %v102, %v101
    %v117 = vpack.c.b16 %v104, %v103
    %v118 = vpack.c.b16 %v106, %v105
    %v119 = vpack.c.b16 %v108, %v107
    %v120 = vpack.c.b16 %v110, %v109
    %v121 = vpack.c.b16 %v112, %v111
    %v122 = vpack.c.b16 %v114, %v113
    %131 = vmatpush.bf16.msra.mxu0 %v122
    %132 = vmatpush.bf16.msra.mxu0 %v121
    %133 = vmatpush.bf16.msra.mxu0 %v120
    %134 = vmatpush.bf16.msra.mxu0 %v119
    %135 = vmatpush.bf16.msra.mxu0 %v118
    %136 = vmatpush.bf16.msra.mxu0 %v117
    %137 = vmatpush.bf16.msra.mxu0 %v116
    %138 = vmatpush.bf16.msra.mxu0 %v115
    %139 = vmatmul.bf16.gmra.mxu0 %v62
    %v140 = vpop.f32.mrf.mxu0
    %v141 = vadd.f32 %v81, %v140
    %v142 = vpop.f32.mrf.mxu0
    %143 = vdwg.mxu0
    %144 = vst [vmem:[#allocation2] sm:$0x3] %v141
    // Predicated region
    $region22: #{vit_forward.7} parent=1 // pred_check
      _
    $region23: #{vit_forward.7} parent=1 // pred_check_branch
      %146 = sbr.rel (0) target = $region25
    $region24: #{vit_forward.7} parent=1 // pred_region
      %148 = vsyncadd [#allocation3], 0
      %s150 = sshll.u32 [#allocation2], 4
      %s151 = int_to_ptr.vmem [resolvable:$true] %s150
      %s152 = sshll.u32 %s5, 4
      %s153 = int_to_ptr.hbm [resolvable:$true] %s152
      %155 = dma.vmem_to_hbm [thread:$0]  %s151, 32, %s153, [#allocation3]
    $region25: #{vit_forward.7} parent=1 // pred_fallthru
      _
    // Predicated region
    $region26: #{vit_forward.7} parent=1 // pred_check
      _
    $region27: #{vit_forward.7} parent=1 // pred_check_branch
      %157 = sbr.rel (0) target = $region29
    $region28: #{vit_forward.7} parent=1 // pred_region
      %159 = dma.done [#allocation3], 32
    $region29: #{vit_forward.7} parent=1 // pred_fallthru
      _
    %160 = vsyncpa [#allocation3], 1

// kernel: vit_forward.5
$region0: #{vit_forward.5}
  #allocation0 [shape = 'u32[]', space=smem, size = 0x4, offset = 0x4, fixed_abs, tag = 'smem constant byte address 0x4 - core index']
  #allocation1 [shape = 'u32[72,128]{1,0:T(1,128)}', space=vmem, size = 0x9000, scoped, tag = 'internal scratch']
  #allocation2 [shape = 'f32[128,128]{1,0:T(8,128)}', space=vmem, size = 0x10000, scoped, tag = 'scratch operand']
  %s0 = inlined_call_operand.vmem [shape: f32[2,128,128], index: 0, kind: input, shape index: {}]
  %s1 = inlined_call_operand.vmem [shape: f32[1,128], index: 1, kind: input, shape index: {}]
  %s2 = inlined_call_operand.vmem [shape: f32[1,128], index: 2, kind: input, shape index: {}]
  %s3 = inlined_call_operand.vmem [shape: bf16[128,384], index: 3, kind: input, shape index: {}]
  %s4 = inlined_call_operand.vmem [shape: f32[1,384], index: 4, kind: input, shape index: {}]
  %s5 = inlined_call_operand.vmem [shape: bf16[128,128], index: 5, kind: input, shape index: {}]
  %s6 = inlined_call_operand.vmem [shape: f32[1,128], index: 6, kind: input, shape index: {}]
  %s7 = inlined_call_operand.vmem [shape: f32[1,128], index: 7, kind: input, shape index: {}]
  %s8 = inlined_call_operand.vmem [shape: f32[1,128], index: 8, kind: input, shape index: {}]
  %s9 = inlined_call_operand.vmem [shape: bf16[128,512], index: 9, kind: input, shape index: {}]
  %s10 = inlined_call_operand.vmem [shape: f32[1,512], index: 10, kind: input, shape index: {}]
  %s11 = inlined_call_operand.vmem [shape: bf16[512,128], index: 11, kind: input, shape index: {}]
  %s12 = inlined_call_operand.vmem [shape: f32[1,128], index: 12, kind: input, shape index: {}]
  %s13 = inlined_call_operand.vmem [shape: f32[2,128,128], index: 13, kind: output, shape index: {}]
  %s14 = sld [smem:[#allocation0]]
  $region85: #{vit_forward.5} parent=0
    _
  %s16 = ssub.s32 1, %s14
  %s17 = scalar_select 0, %s16, %s14
  loop: start=0, step=1, limit=4
  $region2: #{vit_forward.5} parent=0 // loop_pre_header
    _
  $region3: #{vit_forward.5} parent=0 // loop_header
    %s19 = sphi 0, %s23
    %p20 = scmp.ge.s32.totalorder %s19, 4
    %s29 = sphi 0, %s31
    %s32 = sphi 0, %s29
    %s33 = sphi 0, %s32
    %s49 = sphi 0, %s33
    %s53 = sphi 0, %s53
    %s55 = sphi 0, %s53
    %s56 = sphi 0, %s55
    %s70 = sphi 0, %s56
    %s74 = sphi 0, %s74
    %s76 = sphi 0, %s74
    %s77 = sphi 0, %s76
    %s91 = sphi 0, %s77
    %s95 = sphi 0, %s95
    %s97 = sphi 0, %s95
    %s98 = sphi 0, %s97
    %s112 = sphi 0, %s98
    %s116 = sphi 0, %s116
    %s118 = sphi 0, %s116
    %s119 = sphi 0, %s118
    %s133 = sphi 0, %s119
    %s137 = sphi 0, %s137
    %s139 = sphi 0, %s137
    %s140 = sphi 0, %s139
    %s154 = sphi 0, %s140
    %s158 = sphi 0, %s158
    %s160 = sphi 0, %s158
    %s161 = sphi 0, %s160
    %s175 = sphi 0, %s161
    %s179 = sphi 0, %s179
    %s181 = sphi 0, %s179
    %s182 = sphi 0, %s181
    %s196 = sphi 0, %s182
    %s200 = sphi 0, %s200
    %s202 = sphi 0, %s200
    %s203 = sphi 0, %s202
    %s217 = sphi 0, %s203
    %s221 = sphi 0, %s221
    %s223 = sphi 0, %s221
    %s224 = sphi 0, %s223
    %s238 = sphi 0, %s224
    %s242 = sphi 0, %s242
    %s244 = sphi 0, %s242
    %s245 = sphi 0, %s244
    %s259 = sphi 0, %s245
    %s263 = sphi 0, %s263
    %s265 = sphi 0, %s263
    %s266 = sphi 0, %s265
    %s280 = sphi 0, %s266
    %s284 = sphi 0, %s284
    %s286 = sphi 0, %s284
    %s287 = sphi 0, %s286
    %s301 = sphi 0, %s287
    %s307 = sphi 0, %s309
    %s310 = sphi 0, %s307
    %s311 = sphi 0, %s310
    %s327 = sphi 0, %s311
  $region4: #{vit_forward.5} parent=0 // loop_header_branch
    %22 = sbr.rel (%p20) target = $region8
  $region5: #{vit_forward.5} parent=0 // loop_body
    %s24 = ssub.s32 %s19, 1
    %s25 = ssub.s32 %s19, 2
    %s26 = sadd.s32 %s19, 1
    %s27 = ssub.s32 %s19, %s26
    %p28 = scmp.eq.s32.totalorder %s27, 0
    %s30 = sadd.s32 %s29, 1
    %s31 = scalar_select %p28, %s29, %s30
    %p34 = pneg %p28
    %p35 = scmp.eq.s32.totalorder %s19, 1
    %p36 = por %p34, %p35
    %p37 = scmp.ne.s32.totalorder %s29, %s32
    %p38 = scmp.eq.s32.totalorder %s19, 0
    %p39 = por %p37, %p38
    %p40 = scmp.ne.s32.totalorder %s29, %s32
    %p41 = scmp.eq.s32.totalorder %s24, 1
    %p42 = por %p40, %p41
    %p43 = scmp.ne.s32.totalorder %s32, %s33
    %p44 = scmp.eq.s32.totalorder %s24, 0
    %p45 = por %p43, %p44
    %p46 = scmp.ne.s32.totalorder %s32, %s33
    %p47 = scmp.eq.s32.totalorder %s25, 1
    %p48 = por %p46, %p47
    %p50 = scmp.ne.s32.totalorder %s33, %s49
    %p51 = scmp.eq.s32.totalorder %s25, 0
    %p52 = por %p50, %p51
    %s54 = sadd.s32 %s53, 1
    %p57 = scmp.eq.s32.totalorder %s19, 1
    %p58 = scmp.ne.s32.totalorder %s53, %s55
    %p59 = scmp.eq.s32.totalorder %s19, 0
    %p60 = por %p58, %p59
    %p61 = scmp.ne.s32.totalorder %s53, %s55
    %p62 = scmp.eq.s32.totalorder %s24, 1
    %p63 = por %p61, %p62
    %p64 = scmp.ne.s32.totalorder %s55, %s56
    %p65 = scmp.eq.s32.totalorder %s24, 0
    %p66 = por %p64, %p65
    %p67 = scmp.ne.s32.totalorder %s55, %s56
    %p68 = scmp.eq.s32.totalorder %s25, 1
    %p69 = por %p67, %p68
    %p71 = scmp.ne.s32.totalorder %s56, %s70
    %p72 = scmp.eq.s32.totalorder %s25, 0
    %p73 = por %p71, %p72
    %s75 = sadd.s32 %s74, 1
    %p78 = scmp.eq.s32.totalorder %s19, 1
    %p79 = scmp.ne.s32.totalorder %s74, %s76
    %p80 = scmp.eq.s32.totalorder %s19, 0
    %p81 = por %p79, %p80
    %p82 = scmp.ne.s32.totalorder %s74, %s76
    %p83 = scmp.eq.s32.totalorder %s24, 1
    %p84 = por %p82, %p83
    %p85 = scmp.ne.s32.totalorder %s76, %s77
    %p86 = scmp.eq.s32.totalorder %s24, 0
    %p87 = por %p85, %p86
    %p88 = scmp.ne.s32.totalorder %s76, %s77
    %p89 = scmp.eq.s32.totalorder %s25, 1
    %p90 = por %p88, %p89
    %p92 = scmp.ne.s32.totalorder %s77, %s91
    %p93 = scmp.eq.s32.totalorder %s25, 0
    %p94 = por %p92, %p93
    %s96 = sadd.s32 %s95, 1
    %p99 = scmp.eq.s32.totalorder %s19, 1
    %p100 = scmp.ne.s32.totalorder %s95, %s97
    %p101 = scmp.eq.s32.totalorder %s19, 0
    %p102 = por %p100, %p101
    %p103 = scmp.ne.s32.totalorder %s95, %s97
    %p104 = scmp.eq.s32.totalorder %s24, 1
    %p105 = por %p103, %p104
    %p106 = scmp.ne.s32.totalorder %s97, %s98
    %p107 = scmp.eq.s32.totalorder %s24, 0
    %p108 = por %p106, %p107
    %p109 = scmp.ne.s32.totalorder %s97, %s98
    %p110 = scmp.eq.s32.totalorder %s25, 1
    %p111 = por %p109, %p110
    %p113 = scmp.ne.s32.totalorder %s98, %s112
    %p114 = scmp.eq.s32.totalorder %s25, 0
    %p115 = por %p113, %p114
    %s117 = sadd.s32 %s116, 1
    %p120 = scmp.eq.s32.totalorder %s19, 1
    %p121 = scmp.ne.s32.totalorder %s116, %s118
    %p122 = scmp.eq.s32.totalorder %s19, 0
    %p123 = por %p121, %p122
    %p124 = scmp.ne.s32.totalorder %s116, %s118
    %p125 = scmp.eq.s32.totalorder %s24, 1
    %p126 = por %p124, %p125
    %p127 = scmp.ne.s32.totalorder %s118, %s119
    %p128 = scmp.eq.s32.totalorder %s24, 0
    %p129 = por %p127, %p128
    %p130 = scmp.ne.s32.totalorder %s118, %s119
    %p131 = scmp.eq.s32.totalorder %s25, 1
    %p132 = por %p130, %p131
    %p134 = scmp.ne.s32.totalorder %s119, %s133
    %p135 = scmp.eq.s32.totalorder %s25, 0
    %p136 = por %p134, %p135
    %s138 = sadd.s32 %s137, 1
    %p141 = scmp.eq.s32.totalorder %s19, 1
    %p142 = scmp.ne.s32.totalorder %s137, %s139
    %p143 = scmp.eq.s32.totalorder %s19, 0
    %p144 = por %p142, %p143
    %p145 = scmp.ne.s32.totalorder %s137, %s139
    %p146 = scmp.eq.s32.totalorder %s24, 1
    %p147 = por %p145, %p146
    %p148 = scmp.ne.s32.totalorder %s139, %s140
    %p149 = scmp.eq.s32.totalorder %s24, 0
    %p150 = por %p148, %p149
    %p151 = scmp.ne.s32.totalorder %s139, %s140
    %p152 = scmp.eq.s32.totalorder %s25, 1
    %p153 = por %p151, %p152
    %p155 = scmp.ne.s32.totalorder %s140, %s154
    %p156 = scmp.eq.s32.totalorder %s25, 0
    %p157 = por %p155, %p156
    %s159 = sadd.s32 %s158, 1
    %p162 = scmp.eq.s32.totalorder %s19, 1
    %p163 = scmp.ne.s32.totalorder %s158, %s160
    %p164 = scmp.eq.s32.totalorder %s19, 0
    %p165 = por %p163, %p164
    %p166 = scmp.ne.s32.totalorder %s158, %s160
    %p167 = scmp.eq.s32.totalorder %s24, 1
    %p168 = por %p166, %p167
    %p169 = scmp.ne.s32.totalorder %s160, %s161
    %p170 = scmp.eq.s32.totalorder %s24, 0
    %p171 = por %p169, %p170
    %p172 = scmp.ne.s32.totalorder %s160, %s161
    %p173 = scmp.eq.s32.totalorder %s25, 1
    %p174 = por %p172, %p173
    %p176 = scmp.ne.s32.totalorder %s161, %s175
    %p177 = scmp.eq.s32.totalorder %s25, 0
    %p178 = por %p176, %p177
    %s180 = sadd.s32 %s179, 1
    %p183 = scmp.eq.s32.totalorder %s19, 1
    %p184 = scmp.ne.s32.totalorder %s179, %s181
    %p185 = scmp.eq.s32.totalorder %s19, 0
    %p186 = por %p184, %p185
    %p187 = scmp.ne.s32.totalorder %s179, %s181
    %p188 = scmp.eq.s32.totalorder %s24, 1
    %p189 = por %p187, %p188
    %p190 = scmp.ne.s32.totalorder %s181, %s182
    %p191 = scmp.eq.s32.totalorder %s24, 0
    %p192 = por %p190, %p191
    %p193 = scmp.ne.s32.totalorder %s181, %s182
    %p194 = scmp.eq.s32.totalorder %s25, 1
    %p195 = por %p193, %p194
    %p197 = scmp.ne.s32.totalorder %s182, %s196
    %p198 = scmp.eq.s32.totalorder %s25, 0
    %p199 = por %p197, %p198
    %s201 = sadd.s32 %s200, 1
    %p204 = scmp.eq.s32.totalorder %s19, 1
    %p205 = scmp.ne.s32.totalorder %s200, %s202
    %p206 = scmp.eq.s32.totalorder %s19, 0
    %p207 = por %p205, %p206
    %p208 = scmp.ne.s32.totalorder %s200, %s202
    %p209 = scmp.eq.s32.totalorder %s24, 1
    %p210 = por %p208, %p209
    %p211 = scmp.ne.s32.totalorder %s202, %s203
    %p212 = scmp.eq.s32.totalorder %s24, 0
    %p213 = por %p211, %p212
    %p214 = scmp.ne.s32.totalorder %s202, %s203
    %p215 = scmp.eq.s32.totalorder %s25, 1
    %p216 = por %p214, %p215
    %p218 = scmp.ne.s32.totalorder %s203, %s217
    %p219 = scmp.eq.s32.totalorder %s25, 0
    %p220 = por %p218, %p219
    %s222 = sadd.s32 %s221, 1
    %p225 = scmp.eq.s32.totalorder %s19, 1
    %p226 = scmp.ne.s32.totalorder %s221, %s223
    %p227 = scmp.eq.s32.totalorder %s19, 0
    %p228 = por %p226, %p227
    %p229 = scmp.ne.s32.totalorder %s221, %s223
    %p230 = scmp.eq.s32.totalorder %s24, 1
    %p231 = por %p229, %p230
    %p232 = scmp.ne.s32.totalorder %s223, %s224
    %p233 = scmp.eq.s32.totalorder %s24, 0
    %p234 = por %p232, %p233
    %p235 = scmp.ne.s32.totalorder %s223, %s224
    %p236 = scmp.eq.s32.totalorder %s25, 1
    %p237 = por %p235, %p236
    %p239 = scmp.ne.s32.totalorder %s224, %s238
    %p240 = scmp.eq.s32.totalorder %s25, 0
    %p241 = por %p239, %p240
    %s243 = sadd.s32 %s242, 1
    %p246 = scmp.eq.s32.totalorder %s19, 1
    %p247 = scmp.ne.s32.totalorder %s242, %s244
    %p248 = scmp.eq.s32.totalorder %s19, 0
    %p249 = por %p247, %p248
    %p250 = scmp.ne.s32.totalorder %s242, %s244
    %p251 = scmp.eq.s32.totalorder %s24, 1
    %p252 = por %p250, %p251
    %p253 = scmp.ne.s32.totalorder %s244, %s245
    %p254 = scmp.eq.s32.totalorder %s24, 0
    %p255 = por %p253, %p254
    %p256 = scmp.ne.s32.totalorder %s244, %s245
    %p257 = scmp.eq.s32.totalorder %s25, 1
    %p258 = por %p256, %p257
    %p260 = scmp.ne.s32.totalorder %s245, %s259
    %p261 = scmp.eq.s32.totalorder %s25, 0
    %p262 = por %p260, %p261
    %s264 = sadd.s32 %s263, 1
    %p267 = scmp.eq.s32.totalorder %s19, 1
    %p268 = scmp.ne.s32.totalorder %s263, %s265
    %p269 = scmp.eq.s32.totalorder %s19, 0
    %p270 = por %p268, %p269
    %p271 = scmp.ne.s32.totalorder %s263, %s265
    %p272 = scmp.eq.s32.totalorder %s24, 1
    %p273 = por %p271, %p272
    %p274 = scmp.ne.s32.totalorder %s265, %s266
    %p275 = scmp.eq.s32.totalorder %s24, 0
    %p276 = por %p274, %p275
    %p277 = scmp.ne.s32.totalorder %s265, %s266
    %p278 = scmp.eq.s32.totalorder %s25, 1
    %p279 = por %p277, %p278
    %p281 = scmp.ne.s32.totalorder %s266, %s280
    %p282 = scmp.eq.s32.totalorder %s25, 0
    %p283 = por %p281, %p282
    %s285 = sadd.s32 %s284, 1
    %p288 = scmp.eq.s32.totalorder %s19, 1
    %p289 = scmp.ne.s32.totalorder %s284, %s286
    %p290 = scmp.eq.s32.totalorder %s19, 0
    %p291 = por %p289, %p290
    %p292 = scmp.ne.s32.totalorder %s284, %s286
    %p293 = scmp.eq.s32.totalorder %s24, 1
    %p294 = por %p292, %p293
    %p295 = scmp.ne.s32.totalorder %s286, %s287
    %p296 = scmp.eq.s32.totalorder %s24, 0
    %p297 = por %p295, %p296
    %p298 = scmp.ne.s32.totalorder %s286, %s287
    %p299 = scmp.eq.s32.totalorder %s25, 1
    %p300 = por %p298, %p299
    %p302 = scmp.ne.s32.totalorder %s287, %s301
    %p303 = scmp.eq.s32.totalorder %s25, 0
    %p304 = por %p302, %p303
    %s305 = ssub.s32 %s19, %s26
    %p306 = scmp.eq.s32.totalorder %s305, 0
    %s308 = sadd.s32 %s307, 1
    %s309 = scalar_select %p306, %s307, %s308
    %p312 = pneg %p306
    %p313 = scmp.eq.s32.totalorder %s19, 1
    %p314 = por %p312, %p313
    %p315 = scmp.ne.s32.totalorder %s307, %s310
    %p316 = scmp.eq.s32.totalorder %s19, 0
    %p317 = por %p315, %p316
    %p318 = scmp.ne.s32.totalorder %s307, %s310
    %p319 = scmp.eq.s32.totalorder %s24, 1
    %p320 = por %p318, %p319
    %p321 = scmp.ne.s32.totalorder %s310, %s311
    %p322 = scmp.eq.s32.totalorder %s24, 0
    %p323 = por %p321, %p322
    %p324 = scmp.ne.s32.totalorder %s310, %s311
    %p325 = scmp.eq.s32.totalorder %s25, 1
    %p326 = por %p324, %p325
    %p328 = scmp.ne.s32.totalorder %s311, %s327
    %p329 = scmp.eq.s32.totalorder %s25, 0
    %p330 = por %p328, %p329
    %p331 = scmp.le.s32.totalorder 1, %s19
    %p332 = scmp.lt.s32.totalorder %s19, 3
    %p333 = pnand %p331, %p332
    %p334 = pneg %p333
    // Predicated region
    $region9: #{vit_forward.5} parent=5 // pred_check
      _
    $region10: #{vit_forward.5} parent=5 // pred_check_branch
      %336 = sbr.rel (%p333) target = $region12
    $region11: #{vit_forward.5} parent=5 // pred_region
      %s337 = ssub.s32 %s19, 1
      // Predicated region
      $region13: #{vit_forward.5} parent=11 // pred_check
        %p338 = pneg %p66
      $region14: #{vit_forward.5} parent=11 // pred_check_branch
        %340 = sbr.rel (%p338) target = $region16
      $region15: #{vit_forward.5} parent=11 // pred_region
        _
      $region16: #{vit_forward.5} parent=11 // pred_fallthru
        _
      // Predicated region
      $region17: #{vit_forward.5} parent=11 // pred_check
        %p341 = pneg %p87
      $region18: #{vit_forward.5} parent=11 // pred_check_branch
        %343 = sbr.rel (%p341) target = $region20
      $region19: #{vit_forward.5} parent=11 // pred_region
        _
      $region20: #{vit_forward.5} parent=11 // pred_fallthru
        _
      // Predicated region
      $region21: #{vit_forward.5} parent=11 // pred_check
        %p344 = pneg %p108
      $region22: #{vit_forward.5} parent=11 // pred_check_branch
        %346 = sbr.rel (%p344) target = $region24
      $region23: #{vit_forward.5} parent=11 // pred_region
        _
      $region24: #{vit_forward.5} parent=11 // pred_fallthru
        _
      // Predicated region
      $region25: #{vit_forward.5} parent=11 // pred_check
        %p347 = pneg %p129
      $region26: #{vit_forward.5} parent=11 // pred_check_branch
        %349 = sbr.rel (%p347) target = $region28
      $region27: #{vit_forward.5} parent=11 // pred_region
        _
      $region28: #{vit_forward.5} parent=11 // pred_fallthru
        _
      // Predicated region
      $region29: #{vit_forward.5} parent=11 // pred_check
        %p350 = pneg %p150
      $region30: #{vit_forward.5} parent=11 // pred_check_branch
        %352 = sbr.rel (%p350) target = $region32
      $region31: #{vit_forward.5} parent=11 // pred_region
        _
      $region32: #{vit_forward.5} parent=11 // pred_fallthru
        _
      // Predicated region
      $region33: #{vit_forward.5} parent=11 // pred_check
        %p353 = pneg %p171
      $region34: #{vit_forward.5} parent=11 // pred_check_branch
        %355 = sbr.rel (%p353) target = $region36
      $region35: #{vit_forward.5} parent=11 // pred_region
        _
      $region36: #{vit_forward.5} parent=11 // pred_fallthru
        _
      // Predicated region
      $region37: #{vit_forward.5} parent=11 // pred_check
        %p356 = pneg %p192
      $region38: #{vit_forward.5} parent=11 // pred_check_branch
        %358 = sbr.rel (%p356) target = $region40
      $region39: #{vit_forward.5} parent=11 // pred_region
        _
      $region40: #{vit_forward.5} parent=11 // pred_fallthru
        _
      // Predicated region
      $region41: #{vit_forward.5} parent=11 // pred_check
        %p359 = pneg %p213
      $region42: #{vit_forward.5} parent=11 // pred_check_branch
        %361 = sbr.rel (%p359) target = $region44
      $region43: #{vit_forward.5} parent=11 // pred_region
        _
      $region44: #{vit_forward.5} parent=11 // pred_fallthru
        _
      // Predicated region
      $region45: #{vit_forward.5} parent=11 // pred_check
        %p362 = pneg %p234
      $region46: #{vit_forward.5} parent=11 // pred_check_branch
        %364 = sbr.rel (%p362) target = $region48
      $region47: #{vit_forward.5} parent=11 // pred_region
        _
      $region48: #{vit_forward.5} parent=11 // pred_fallthru
        _
      // Predicated region
      $region49: #{vit_forward.5} parent=11 // pred_check
        %p365 = pneg %p255
      $region50: #{vit_forward.5} parent=11 // pred_check_branch
        %367 = sbr.rel (%p365) target = $region52
      $region51: #{vit_forward.5} parent=11 // pred_region
        _
      $region52: #{vit_forward.5} parent=11 // pred_fallthru
        _
      // Predicated region
      $region53: #{vit_forward.5} parent=11 // pred_check
        %p368 = pneg %p276
      $region54: #{vit_forward.5} parent=11 // pred_check_branch
        %370 = sbr.rel (%p368) target = $region56
      $region55: #{vit_forward.5} parent=11 // pred_region
        _
      $region56: #{vit_forward.5} parent=11 // pred_fallthru
        _
      // Predicated region
      $region57: #{vit_forward.5} parent=11 // pred_check
        %p371 = pneg %p297
      $region58: #{vit_forward.5} parent=11 // pred_check_branch
        %373 = sbr.rel (%p371) target = $region60
      $region59: #{vit_forward.5} parent=11 // pred_region
        _
      $region60: #{vit_forward.5} parent=11 // pred_fallthru
        _
    $region12: #{vit_forward.5} parent=5 // pred_fallthru
      _
    %p374 = scmp.lt.s32.totalorder %s19, 2
    // Predicated region
    $region61: #{vit_forward.5} parent=5 // pred_check
      %p375 = pneg %p374
    $region62: #{vit_forward.5} parent=5 // pred_check_branch
      %377 = sbr.rel (%p375) target = $region64
    $region63: #{vit_forward.5} parent=5 // pred_region
      // Predicated region
      $region65: #{vit_forward.5} parent=63 // pred_check
        %p378 = pneg %p39
      $region66: #{vit_forward.5} parent=63 // pred_check_branch
        %380 = sbr.rel (%p378) target = $region68
      $region67: #{vit_forward.5} parent=63 // pred_region
        %p381 = scmp.lt.s32.totalorder %s19, 1
        %s382 = scalar_select %p381, %s19, 1
        %s383 = smul.addr %s382, 16
        %s384 = smul.addr %s383, 8
        %s385 = scalar_lea.vmem %s0, %s384
      $region68: #{vit_forward.5} parent=63 // pred_fallthru
        _
    $region64: #{vit_forward.5} parent=5 // pred_fallthru
      _
    %p386 = scmp.le.s32.totalorder 1, %s19
    %p387 = scmp.lt.s32.totalorder %s19, 3
    %p388 = pnand %p386, %p387
    %p389 = pneg %p388
    // Predicated region
    $region69: #{vit_forward.5} parent=5 // pred_check
      _
    $region70: #{vit_forward.5} parent=5 // pred_check_branch
      %391 = sbr.rel (%p388) target = $region72
    $region71: #{vit_forward.5} parent=5 // pred_region
      %s392 = ssub.s32 %s19, 1
      %p393 = scmp.lt.s32.totalorder %s24, 1
      %s394 = scalar_select %p393, %s24, 1
      %s395 = smul.addr %s394, 16
      %s396 = smul.addr %s395, 8
      %s397 = scalar_lea.vmem %s0, %s396
      %p398 = pneg %p45
      %p399 = pneg %p42
      %p400 = pneg %p66
      %p401 = pneg %p63
      %p402 = pneg %p87
      %p403 = pneg %p84
      %p404 = pneg %p108
      %p405 = pneg %p105
      %p406 = pneg %p129
      %p407 = pneg %p126
      %p408 = pneg %p150
      %p409 = pneg %p147
      %p410 = pneg %p171
      %p411 = pneg %p168
      %p412 = pneg %p192
      %p413 = pneg %p189
      %p414 = pneg %p213
      %p415 = pneg %p210
      %p416 = pneg %p234
      %p417 = pneg %p231
      %p418 = pneg %p255
      %p419 = pneg %p252
      %p420 = pneg %p276
      %p421 = pneg %p273
      %p422 = pneg %p297
      %p423 = pneg %p294
      %p424 = pneg %p323
      %p425 = pneg %p320
      %p426 = scmp.lt.s32.totalorder %s24, 1
      %s427 = scalar_select %p426, %s24, 1
      %s428 = smul.addr %s427, 16
      %s429 = smul.addr %s428, 8
      %s430 = scalar_lea.vmem %s13, %s429
      %p431 = scmp.lt.s32.totalorder %s24, 1
      %s432 = scalar_select %p431, %s24, 1
      %s433 = smul.addr %s432, 16
      %s434 = smul.addr %s433, 8
      %s435 = scalar_lea.vmem %s0, %s434
      %p436 = scmp.lt.s32.totalorder %s24, 1
      %s437 = scalar_select %p436, %s24, 1
      %s438 = smul.addr %s437, 16
      %s439 = smul.addr %s438, 8
      %s440 = scalar_lea.vmem %s13, %s439
      %v441 = vld [vmem:[%s435] sm:$0xff]
      %v442 = vld [vmem:[%s435 + $0x8] sm:$0xff]
      %v443 = vld [vmem:[%s435 + $0x10] sm:$0xff]
      %v444 = vld [vmem:[%s435 + $0x18] sm:$0xff]
      %v445 = vld [vmem:[%s435 + $0x20] sm:$0xff]
      %v446 = vld [vmem:[%s435 + $0x28] sm:$0xff]
      %v447 = vld [vmem:[%s435 + $0x30] sm:$0xff]
      %v448 = vld [vmem:[%s435 + $0x38] sm:$0xff]
      %v449 = vld [vmem:[%s435 + $0x40] sm:$0xff]
      %v450 = vld [vmem:[%s435 + $0x48] sm:$0xff]
      %v451 = vld [vmem:[%s435 + $0x50] sm:$0xff]
      %v452 = vld [vmem:[%s435 + $0x58] sm:$0xff]
      %v453 = vld [vmem:[%s435 + $0x60] sm:$0xff]
      %v454 = vld [vmem:[%s435 + $0x68] sm:$0xff]
      %v455 = vld [vmem:[%s435 + $0x70] sm:$0xff]
      %v456 = vld [vmem:[%s435 + $0x78] sm:$0xff]
      %v457 = vld [vmem:[%s1] sm:$0x1]
      %v458 = vld [vmem:[%s2] sm:$0x1]
      %459 = vadd.xlane.f32.xlu0 %v441
      %v460 = vpop.xlane.xlu0 %459
      %461 = vadd.xlane.f32.xlu0 %v442
      %v462 = vpop.xlane.xlu0 %461
      %463 = vadd.xlane.f32.xlu0 %v443
      %v464 = vpop.xlane.xlu0 %463
      %465 = vadd.xlane.f32.xlu0 %v444
      %v466 = vpop.xlane.xlu0 %465
      %467 = vadd.xlane.f32.xlu0 %v445
      %v468 = vpop.xlane.xlu0 %467
      %469 = vadd.xlane.f32.xlu0 %v446
      %v470 = vpop.xlane.xlu0 %469
      %471 = vadd.xlane.f32.xlu0 %v447
      %v472 = vpop.xlane.xlu0 %471
      %473 = vadd.xlane.f32.xlu0 %v448
      %v474 = vpop.xlane.xlu0 %473
      %475 = vadd.xlane.f32.xlu0 %v449
      %v476 = vpop.xlane.xlu0 %475
      %477 = vadd.xlane.f32.xlu0 %v450
      %v478 = vpop.xlane.xlu0 %477
      %479 = vadd.xlane.f32.xlu0 %v451
      %v480 = vpop.xlane.xlu0 %479
      %481 = vadd.xlane.f32.xlu0 %v452
      %v482 = vpop.xlane.xlu0 %481
      %483 = vadd.xlane.f32.xlu0 %v453
      %v484 = vpop.xlane.xlu0 %483
      %485 = vadd.xlane.f32.xlu0 %v454
      %v486 = vpop.xlane.xlu0 %485
      %487 = vadd.xlane.f32.xlu0 %v455
      %v488 = vpop.xlane.xlu0 %487
      %489 = vadd.xlane.f32.xlu0 %v456
      %v490 = vpop.xlane.xlu0 %489
      %v491 = vrcp.pop 128.0
      %v492 = vmul.f32 128.0, %v491
      %v493 = vsub.f32 1.0, %v492
      %v494 = vmul.f32 %v491, %v493
      %v495 = vadd.f32 %v491, %v494
      %vm496 = vweird.f32 %v491
      %v497 = vsel %vm496, %v491, %v495
      %v498 = vmul.f32 %v460, %v497
      %v499 = vmul.f32 %v462, %v497
      %v500 = vmul.f32 %v464, %v497
      %v501 = vmul.f32 %v466, %v497
      %v502 = vmul.f32 %v468, %v497
      %v503 = vmul.f32 %v470, %v497
      %v504 = vmul.f32 %v472, %v497
      %v505 = vmul.f32 %v474, %v497
      %v506 = vmul.f32 %v476, %v497
      %v507 = vmul.f32 %v478, %v497
      %v508 = vmul.f32 %v480, %v497
      %v509 = vmul.f32 %v482, %v497
      %v510 = vmul.f32 %v484, %v497
      %v511 = vmul.f32 %v486, %v497
      %v512 = vmul.f32 %v488, %v497
      %v513 = vmul.f32 %v490, %v497
      %v514 = vsub.f32 %v441, %v498
      %v515 = vsub.f32 %v442, %v499
      %v516 = vsub.f32 %v443, %v500
      %v517 = vsub.f32 %v444, %v501
      %v518 = vsub.f32 %v445, %v502
      %v519 = vsub.f32 %v446, %v503
      %v520 = vsub.f32 %v447, %v504
      %v521 = vsub.f32 %v448, %v505
      %v522 = vsub.f32 %v449, %v506
      %v523 = vsub.f32 %v450, %v507
      %v524 = vsub.f32 %v451, %v508
      %v525 = vsub.f32 %v452, %v509
      %v526 = vsub.f32 %v453, %v510
      %v527 = vsub.f32 %v454, %v511
      %v528 = vsub.f32 %v455, %v512
      %v529 = vsub.f32 %v456, %v513
      %v530 = vmul.f32 %v514, %v514
      %v531 = vmul.f32 %v515, %v515
      %v532 = vmul.f32 %v516, %v516
      %v533 = vmul.f32 %v517, %v517
      %v534 = vmul.f32 %v518, %v518
      %v535 = vmul.f32 %v519, %v519
      %v536 = vmul.f32 %v520, %v520
      %v537 = vmul.f32 %v521, %v521
      %v538 = vmul.f32 %v522, %v522
      %v539 = vmul.f32 %v523, %v523
      %v540 = vmul.f32 %v524, %v524
      %v541 = vmul.f32 %v525, %v525
      %v542 = vmul.f32 %v526, %v526
      %v543 = vmul.f32 %v527, %v527
      %v544 = vmul.f32 %v528, %v528
      %v545 = vmul.f32 %v529, %v529
      %546 = vadd.xlane.f32.xlu0 %v530
      %v547 = vpop.xlane.xlu0 %546
      %548 = vadd.xlane.f32.xlu0 %v531
      %v549 = vpop.xlane.xlu0 %548
      %550 = vadd.xlane.f32.xlu0 %v532
      %v551 = vpop.xlane.xlu0 %550
      %552 = vadd.xlane.f32.xlu0 %v533
      %v553 = vpop.xlane.xlu0 %552
      %554 = vadd.xlane.f32.xlu0 %v534
      %v555 = vpop.xlane.xlu0 %554
      %556 = vadd.xlane.f32.xlu0 %v535
      %v557 = vpop.xlane.xlu0 %556
      %558 = vadd.xlane.f32.xlu0 %v536
      %v559 = vpop.xlane.xlu0 %558
      %560 = vadd.xlane.f32.xlu0 %v537
      %v561 = vpop.xlane.xlu0 %560
      %562 = vadd.xlane.f32.xlu0 %v538
      %v563 = vpop.xlane.xlu0 %562
      %564 = vadd.xlane.f32.xlu0 %v539
      %v565 = vpop.xlane.xlu0 %564
      %566 = vadd.xlane.f32.xlu0 %v540
      %v567 = vpop.xlane.xlu0 %566
      %568 = vadd.xlane.f32.xlu0 %v541
      %v569 = vpop.xlane.xlu0 %568
      %570 = vadd.xlane.f32.xlu0 %v542
      %v571 = vpop.xlane.xlu0 %570
      %572 = vadd.xlane.f32.xlu0 %v543
      %v573 = vpop.xlane.xlu0 %572
      %574 = vadd.xlane.f32.xlu0 %v544
      %v575 = vpop.xlane.xlu0 %574
      %576 = vadd.xlane.f32.xlu0 %v545
      %v577 = vpop.xlane.xlu0 %576
      %v578 = vmul.f32 %v547, %v497
      %v579 = vmul.f32 %v549, %v497
      %v580 = vmul.f32 %v551, %v497
      %v581 = vmul.f32 %v553, %v497
      %v582 = vmul.f32 %v555, %v497
      %v583 = vmul.f32 %v557, %v497
      %v584 = vmul.f32 %v559, %v497
      %v585 = vmul.f32 %v561, %v497
      %v586 = vmul.f32 %v563, %v497
      %v587 = vmul.f32 %v565, %v497
      %v588 = vmul.f32 %v567, %v497
      %v589 = vmul.f32 %v569, %v497
      %v590 = vmul.f32 %v571, %v497
      %v591 = vmul.f32 %v573, %v497
      %v592 = vmul.f32 %v575, %v497
      %v593 = vmul.f32 %v577, %v497
      %v594 = vadd.f32 %v578, 1e-06
      %v595 = vadd.f32 %v579, 1e-06
      %v596 = vadd.f32 %v580, 1e-06
      %v597 = vadd.f32 %v581, 1e-06
      %v598 = vadd.f32 %v582, 1e-06
      %v599 = vadd.f32 %v583, 1e-06
      %v600 = vadd.f32 %v584, 1e-06
      %v601 = vadd.f32 %v585, 1e-06
      %v602 = vadd.f32 %v586, 1e-06
      %v603 = vadd.f32 %v587, 1e-06
      %v604 = vadd.f32 %v588, 1e-06
      %v605 = vadd.f32 %v589, 1e-06
      %v606 = vadd.f32 %v590, 1e-06
      %v607 = vadd.f32 %v591, 1e-06
      %v608 = vadd.f32 %v592, 1e-06
      %v609 = vadd.f32 %v593, 1e-06
      %v610 = vrsqrt.pop %v594
      %v611 = vmul.f32 %v610, %v594
      %v612 = vmul.f32 %v611, %v610
      %v613 = vmul.f32 0.5, %v612
      %v614 = vsub.f32 1.5, %v613
      %v615 = vmul.f32 %v610, %v614
      %vm616 = vweird.f32 %v594
      %vm617 = vweird.f32 %v610
      %vm618 = vmor %vm616, %vm617
      %v619 = vsel %vm618, %v610, %v615
      %v620 = vrsqrt.pop %v595
      %v621 = vmul.f32 %v620, %v595
      %v622 = vmul.f32 %v621, %v620
      %v623 = vmul.f32 0.5, %v622
      %v624 = vsub.f32 1.5, %v623
      %v625 = vmul.f32 %v620, %v624
      %vm626 = vweird.f32 %v595
      %vm627 = vweird.f32 %v620
      %vm628 = vmor %vm626, %vm627
      %v629 = vsel %vm628, %v620, %v625
      %v630 = vrsqrt.pop %v596
      %v631 = vmul.f32 %v630, %v596
      %v632 = vmul.f32 %v631, %v630
      %v633 = vmul.f32 0.5, %v632
      %v634 = vsub.f32 1.5, %v633
      %v635 = vmul.f32 %v630, %v634
      %vm636 = vweird.f32 %v596
      %vm637 = vweird.f32 %v630
      %vm638 = vmor %vm636, %vm637
      %v639 = vsel %vm638, %v630, %v635
      %v640 = vrsqrt.pop %v597
      %v641 = vmul.f32 %v640, %v597
      %v642 = vmul.f32 %v641, %v640
      %v643 = vmul.f32 0.5, %v642
      %v644 = vsub.f32 1.5, %v643
      %v645 = vmul.f32 %v640, %v644
      %vm646 = vweird.f32 %v597
      %vm647 = vweird.f32 %v640
      %vm648 = vmor %vm646, %vm647
      %v649 = vsel %vm648, %v640, %v645
      %v650 = vrsqrt.pop %v598
      %v651 = vmul.f32 %v650, %v598
      %v652 = vmul.f32 %v651, %v650
      %v653 = vmul.f32 0.5, %v652
      %v654 = vsub.f32 1.5, %v653
      %v655 = vmul.f32 %v650, %v654
      %vm656 = vweird.f32 %v598
      %vm657 = vweird.f32 %v650
      %vm658 = vmor %vm656, %vm657
      %v659 = vsel %vm658, %v650, %v655
      %v660 = vrsqrt.pop %v599
      %v661 = vmul.f32 %v660, %v599
      %v662 = vmul.f32 %v661, %v660
      %v663 = vmul.f32 0.5, %v662
      %v664 = vsub.f32 1.5, %v663
      %v665 = vmul.f32 %v660, %v664
      %vm666 = vweird.f32 %v599
      %vm667 = vweird.f32 %v660
      %vm668 = vmor %vm666, %vm667
      %v669 = vsel %vm668, %v660, %v665
      %v670 = vrsqrt.pop %v600
      %v671 = vmul.f32 %v670, %v600
      %v672 = vmul.f32 %v671, %v670
      %v673 = vmul.f32 0.5, %v672
      %v674 = vsub.f32 1.5, %v673
      %v675 = vmul.f32 %v670, %v674
      %vm676 = vweird.f32 %v600
      %vm677 = vweird.f32 %v670
      %vm678 = vmor %vm676, %vm677
      %v679 = vsel %vm678, %v670, %v675
      %v680 = vrsqrt.pop %v601
      %v681 = vmul.f32 %v680, %v601
      %v682 = vmul.f32 %v681, %v680
      %v683 = vmul.f32 0.5, %v682
      %v684 = vsub.f32 1.5, %v683
      %v685 = vmul.f32 %v680, %v684
      %vm686 = vweird.f32 %v601
      %vm687 = vweird.f32 %v680
      %vm688 = vmor %vm686, %vm687
      %v689 = vsel %vm688, %v680, %v685
      %v690 = vrsqrt.pop %v602
      %v691 = vmul.f32 %v690, %v602
      %v692 = vmul.f32 %v691, %v690
      %v693 = vmul.f32 0.5, %v692
      %v694 = vsub.f32 1.5, %v693
      %v695 = vmul.f32 %v690, %v694
      %vm696 = vweird.f32 %v602
      %vm697 = vweird.f32 %v690
      %vm698 = vmor %vm696, %vm697
      %v699 = vsel %vm698, %v690, %v695
      %v700 = vrsqrt.pop %v603
      %v701 = vmul.f32 %v700, %v603
      %v702 = vmul.f32 %v701, %v700
      %v703 = vmul.f32 0.5, %v702
      %v704 = vsub.f32 1.5, %v703
      %v705 = vmul.f32 %v700, %v704
      %vm706 = vweird.f32 %v603
      %vm707 = vweird.f32 %v700
      %vm708 = vmor %vm706, %vm707
      %v709 = vsel %vm708, %v700, %v705
      %v710 = vrsqrt.pop %v604
      %v711 = vmul.f32 %v710, %v604
      %v712 = vmul.f32 %v711, %v710
      %v713 = vmul.f32 0.5, %v712
      %v714 = vsub.f32 1.5, %v713
      %v715 = vmul.f32 %v710, %v714
      %vm716 = vweird.f32 %v604
      %vm717 = vweird.f32 %v710
      %vm718 = vmor %vm716, %vm717
      %v719 = vsel %vm718, %v710, %v715
      %v720 = vrsqrt.pop %v605
      %v721 = vmul.f32 %v720, %v605
      %v722 = vmul.f32 %v721, %v720
      %v723 = vmul.f32 0.5, %v722
      %v724 = vsub.f32 1.5, %v723
      %v725 = vmul.f32 %v720, %v724
      %vm726 = vweird.f32 %v605
      %vm727 = vweird.f32 %v720
      %vm728 = vmor %vm726, %vm727
      %v729 = vsel %vm728, %v720, %v725
      %v730 = vrsqrt.pop %v606
      %v731 = vmul.f32 %v730, %v606
      %v732 = vmul.f32 %v731, %v730
      %v733 = vmul.f32 0.5, %v732
      %v734 = vsub.f32 1.5, %v733
      %v735 = vmul.f32 %v730, %v734
      %vm736 = vweird.f32 %v606
      %vm737 = vweird.f32 %v730
      %vm738 = vmor %vm736, %vm737
      %v739 = vsel %vm738, %v730, %v735
      %v740 = vrsqrt.pop %v607
      %v741 = vmul.f32 %v740, %v607
      %v742 = vmul.f32 %v741, %v740
      %v743 = vmul.f32 0.5, %v742
      %v744 = vsub.f32 1.5, %v743
      %v745 = vmul.f32 %v740, %v744
      %vm746 = vweird.f32 %v607
      %vm747 = vweird.f32 %v740
      %vm748 = vmor %vm746, %vm747
      %v749 = vsel %vm748, %v740, %v745
      %v750 = vrsqrt.pop %v608
      %v751 = vmul.f32 %v750, %v608
      %v752 = vmul.f32 %v751, %v750
      %v753 = vmul.f32 0.5, %v752
      %v754 = vsub.f32 1.5, %v753
      %v755 = vmul.f32 %v750, %v754
      %vm756 = vweird.f32 %v608
      %vm757 = vweird.f32 %v750
      %vm758 = vmor %vm756, %vm757
      %v759 = vsel %vm758, %v750, %v755
      %v760 = vrsqrt.pop %v609
      %v761 = vmul.f32 %v760, %v609
      %v762 = vmul.f32 %v761, %v760
      %v763 = vmul.f32 0.5, %v762
      %v764 = vsub.f32 1.5, %v763
      %v765 = vmul.f32 %v760, %v764
      %vm766 = vweird.f32 %v609
      %vm767 = vweird.f32 %v760
      %vm768 = vmor %vm766, %vm767
      %v769 = vsel %vm768, %v760, %v765
      %v770 = vmul.f32 %v514, %v619
      %v771 = vmul.f32 %v515, %v629
      %v772 = vmul.f32 %v516, %v639
      %v773 = vmul.f32 %v517, %v649
      %v774 = vmul.f32 %v518, %v659
      %v775 = vmul.f32 %v519, %v669
      %v776 = vmul.f32 %v520, %v679
      %v777 = vmul.f32 %v521, %v689
      %v778 = vmul.f32 %v522, %v699
      %v779 = vmul.f32 %v523, %v709
      %v780 = vmul.f32 %v524, %v719
      %v781 = vmul.f32 %v525, %v729
      %v782 = vmul.f32 %v526, %v739
      %v783 = vmul.f32 %v527, %v749
      %v784 = vmul.f32 %v528, %v759
      %v785 = vmul.f32 %v529, %v769
      %v787 = vperm.slane %v457, 0
      %v789 = vmul.f32 %v770, %v787
      %v790 = vmul.f32 %v771, %v787
      %v791 = vmul.f32 %v772, %v787
      %v792 = vmul.f32 %v773, %v787
      %v793 = vmul.f32 %v774, %v787
      %v794 = vmul.f32 %v775, %v787
      %v795 = vmul.f32 %v776, %v787
      %v796 = vmul.f32 %v777, %v787
      %v797 = vmul.f32 %v778, %v787
      %v798 = vmul.f32 %v779, %v787
      %v799 = vmul.f32 %v780, %v787
      %v800 = vmul.f32 %v781, %v787
      %v801 = vmul.f32 %v782, %v787
      %v802 = vmul.f32 %v783, %v787
      %v803 = vmul.f32 %v784, %v787
      %v804 = vmul.f32 %v785, %v787
      %v806 = vperm.slane %v458, 0
      %v808 = vadd.f32 %v789, %v806
      %v809 = vadd.f32 %v790, %v806
      %v810 = vadd.f32 %v791, %v806
      %v811 = vadd.f32 %v792, %v806
      %v812 = vadd.f32 %v793, %v806
      %v813 = vadd.f32 %v794, %v806
      %v814 = vadd.f32 %v795, %v806
      %v815 = vadd.f32 %v796, %v806
      %v816 = vadd.f32 %v797, %v806
      %v817 = vadd.f32 %v798, %v806
      %v818 = vadd.f32 %v799, %v806
      %v819 = vadd.f32 %v800, %v806
      %v820 = vadd.f32 %v801, %v806
      %v821 = vadd.f32 %v802, %v806
      %v822 = vadd.f32 %v803, %v806
      %v823 = vadd.f32 %v804, %v806
      %v824 = vpack.c.bf16 %v809, %v808
      %v825 = vpack.c.bf16 %v811, %v810
      %v826 = vpack.c.bf16 %v813, %v812
      %v827 = vpack.c.bf16 %v815, %v814
      %v828 = vpack.c.bf16 %v817, %v816
      %v829 = vpack.c.bf16 %v819, %v818
      %v830 = vpack.c.bf16 %v821, %v820
      %v831 = vpack.c.bf16 %v823, %v822
      %v832 = vld [vmem:[%s3] sm:$0xff]
      %v833 = vld [vmem:[%s3 + $0x8] sm:$0xf]
      %v834 = vld [vmem:[%s3 + $0xc] sm:$0xff]
      %v835 = vld [vmem:[%s3 + $0x14] sm:$0xf]
      %v836 = vld [vmem:[%s3 + $0x18] sm:$0xff]
      %v837 = vld [vmem:[%s3 + $0x20] sm:$0xf]
      %v838 = vld [vmem:[%s3 + $0x24] sm:$0xff]
      %v839 = vld [vmem:[%s3 + $0x2c] sm:$0xf]
      %v840 = vld [vmem:[%s3 + $0x30] sm:$0xff]
      %v841 = vld [vmem:[%s3 + $0x38] sm:$0xf]
      %v842 = vld [vmem:[%s3 + $0x3c] sm:$0xff]
      %v843 = vld [vmem:[%s3 + $0x44] sm:$0xf]
      %v844 = vld [vmem:[%s3 + $0x48] sm:$0xff]
      %v845 = vld [vmem:[%s3 + $0x50] sm:$0xf]
      %v846 = vld [vmem:[%s3 + $0x54] sm:$0xff]
      %v847 = vld [vmem:[%s3 + $0x5c] sm:$0xf]
      %v848 = vld [vmem:[%s3 + $0x60] sm:$0xff]
      %v849 = vld [vmem:[%s3 + $0x68] sm:$0xf]
      %v850 = vld [vmem:[%s3 + $0x6c] sm:$0xff]
      %v851 = vld [vmem:[%s3 + $0x74] sm:$0xf]
      %v852 = vld [vmem:[%s3 + $0x78] sm:$0xff]
      %v853 = vld [vmem:[%s3 + $0x80] sm:$0xf]
      %v854 = vld [vmem:[%s3 + $0x84] sm:$0xff]
      %v855 = vld [vmem:[%s3 + $0x8c] sm:$0xf]
      %v856 = vld [vmem:[%s3 + $0x90] sm:$0xff]
      %v857 = vld [vmem:[%s3 + $0x98] sm:$0xf]
      %v858 = vld [vmem:[%s3 + $0x9c] sm:$0xff]
      %v859 = vld [vmem:[%s3 + $0xa4] sm:$0xf]
      %v860 = vld [vmem:[%s3 + $0xa8] sm:$0xff]
      %v861 = vld [vmem:[%s3 + $0xb0] sm:$0xf]
      %v862 = vld [vmem:[%s3 + $0xb4] sm:$0xff]
      %v863 = vld [vmem:[%s3 + $0xbc] sm:$0xf]
      %v864 = vld [vmem:[%s4] sm:$0x7]
      %v866 = vperm.slane %v864, 0
      %v867 = vperm.slane %v864, 1
      %v868 = vperm.slane %v864, 2
      %v904 = vunpack.c.l.b16 %v832
      %v905 = vunpack.c.h.b16 %v832
      %v906 = vunpack.c.l.b16 %v833
      %v907 = vunpack.c.l.b16 %v834
      %v908 = vunpack.c.h.b16 %v834
      %v909 = vunpack.c.l.b16 %v835
      %v910 = vunpack.c.l.b16 %v836
      %v911 = vunpack.c.h.b16 %v836
      %v912 = vunpack.c.l.b16 %v837
      %v913 = vunpack.c.l.b16 %v838
      %v914 = vunpack.c.h.b16 %v838
      %v915 = vunpack.c.l.b16 %v839
      %v916 = vunpack.c.l.b16 %v840
      %v917 = vunpack.c.h.b16 %v840
      %v918 = vunpack.c.l.b16 %v841
      %v919 = vunpack.c.l.b16 %v842
      %v920 = vunpack.c.h.b16 %v842
      %v921 = vunpack.c.l.b16 %v843
      %v922 = vunpack.c.l.b16 %v844
      %v923 = vunpack.c.h.b16 %v844
      %v924 = vunpack.c.l.b16 %v845
      %v925 = vunpack.c.l.b16 %v846
      %v926 = vunpack.c.h.b16 %v846
      %v927 = vunpack.c.l.b16 %v847
      %v928 = vunpack.c.l.b16 %v848
      %v929 = vunpack.c.h.b16 %v848
      %v930 = vunpack.c.l.b16 %v849
      %v931 = vunpack.c.l.b16 %v850
      %v932 = vunpack.c.h.b16 %v850
      %v933 = vunpack.c.l.b16 %v851
      %v934 = vunpack.c.l.b16 %v852
      %v935 = vunpack.c.h.b16 %v852
      %v936 = vunpack.c.l.b16 %v853
      %v937 = vunpack.c.l.b16 %v854
      %v938 = vunpack.c.h.b16 %v854
      %v939 = vunpack.c.l.b16 %v855
      %v940 = vunpack.c.l.b16 %v856
      %v941 = vunpack.c.h.b16 %v856
      %v942 = vunpack.c.l.b16 %v857
      %v943 = vunpack.c.l.b16 %v858
      %v944 = vunpack.c.h.b16 %v858
      %v945 = vunpack.c.l.b16 %v859
      %v946 = vunpack.c.l.b16 %v860
      %v947 = vunpack.c.h.b16 %v860
      %v948 = vunpack.c.l.b16 %v861
      %v949 = vunpack.c.l.b16 %v862
      %v950 = vunpack.c.h.b16 %v862
      %v951 = vunpack.c.l.b16 %v863
      %v952 = vpack.c.b16 %v907, %v904
      %v953 = vpack.c.b16 %v908, %v905
      %v954 = vpack.c.b16 %v909, %v906
      %v955 = vpack.c.b16 %v913, %v910
      %v956 = vpack.c.b16 %v914, %v911
      %v957 = vpack.c.b16 %v915, %v912
      %v958 = vpack.c.b16 %v919, %v916
      %v959 = vpack.c.b16 %v920, %v917
      %v960 = vpack.c.b16 %v921, %v918
      %v961 = vpack.c.b16 %v925, %v922
      %v962 = vpack.c.b16 %v926, %v923
      %v963 = vpack.c.b16 %v927, %v924
      %v964 = vpack.c.b16 %v931, %v928
      %v965 = vpack.c.b16 %v932, %v929
      %v966 = vpack.c.b16 %v933, %v930
      %v967 = vpack.c.b16 %v937, %v934
      %v968 = vpack.c.b16 %v938, %v935
      %v969 = vpack.c.b16 %v939, %v936
      %v970 = vpack.c.b16 %v943, %v940
      %v971 = vpack.c.b16 %v944, %v941
      %v972 = vpack.c.b16 %v945, %v942
      %v973 = vpack.c.b16 %v949, %v946
      %v974 = vpack.c.b16 %v950, %v947
      %v975 = vpack.c.b16 %v951, %v948
      %1000 = vmatpush.bf16.msra.mxu0 %v973
      %1001 = vmatpush.bf16.msra.mxu0 %v970
      %1002 = vmatpush.bf16.msra.mxu0 %v967
      %1003 = vmatpush.bf16.msra.mxu0 %v964
      %1004 = vmatpush.bf16.msra.mxu0 %v961
      %1005 = vmatpush.bf16.msra.mxu0 %v958
      %1006 = vmatpush.bf16.msra.mxu0 %v955
      %1007 = vmatpush.bf16.msra.mxu0 %v952
      %1008 = vmatmul.bf16.gmra.mxu0 %v824
      %v1009 = vpop.f32.mrf.mxu0
      %v1010 = vadd.f32 %v866, %v1009
      %v1011 = vpop.f32.mrf.mxu0
      %v1012 = vadd.f32 %v866, %v1011
      %1013 = vmatmul.bf16.gmra.mxu0 %v825
      %v1014 = vpop.f32.mrf.mxu0
      %v1015 = vadd.f32 %v866, %v1014
      %v1016 = vpop.f32.mrf.mxu0
      %v1017 = vadd.f32 %v866, %v1016
      %1018 = vmatmul.bf16.gmra.mxu0 %v826
      %v1019 = vpop.f32.mrf.mxu0
      %v1020 = vadd.f32 %v866, %v1019
      %v1021 = vpop.f32.mrf.mxu0
      %v1022 = vadd.f32 %v866, %v1021
      %1023 = vmatmul.bf16.gmra.mxu0 %v827
      %v1024 = vpop.f32.mrf.mxu0
      %v1025 = vadd.f32 %v866, %v1024
      %v1026 = vpop.f32.mrf.mxu0
      %v1027 = vadd.f32 %v866, %v1026
      %1028 = vmatmul.bf16.gmra.mxu0 %v828
      %v1029 = vpop.f32.mrf.mxu0
      %v1030 = vadd.f32 %v866, %v1029
      %v1031 = vpop.f32.mrf.mxu0
      %v1032 = vadd.f32 %v866, %v1031
      %1033 = vmatmul.bf16.gmra.mxu0 %v829
      %v1034 = vpop.f32.mrf.mxu0
      %v1035 = vadd.f32 %v866, %v1034
      %v1036 = vpop.f32.mrf.mxu0
      %v1037 = vadd.f32 %v866, %v1036
      %1038 = vmatmul.bf16.gmra.mxu0 %v830
      %v1039 = vpop.f32.mrf.mxu0
      %v1040 = vadd.f32 %v866, %v1039
      %v1041 = vpop.f32.mrf.mxu0
      %v1042 = vadd.f32 %v866, %v1041
      %1043 = vmatmul.bf16.gmra.mxu0 %v831
      %v1044 = vpop.f32.mrf.mxu0
      %v1045 = vadd.f32 %v866, %v1044
      %v1046 = vpop.f32.mrf.mxu0
      %v1047 = vadd.f32 %v866, %v1046
      %1048 = vdwg.mxu0
      %1049 = vmatpush.bf16.msra.mxu0 %v974
      %1050 = vmatpush.bf16.msra.mxu0 %v971
      %1051 = vmatpush.bf16.msra.mxu0 %v968
      %1052 = vmatpush.bf16.msra.mxu0 %v965
      %1053 = vmatpush.bf16.msra.mxu0 %v962
      %1054 = vmatpush.bf16.msra.mxu0 %v959
      %1055 = vmatpush.bf16.msra.mxu0 %v956
      %1056 = vmatpush.bf16.msra.mxu0 %v953
      %1057 = vmatmul.bf16.gmra.mxu0 %v824
      %v1058 = vpop.f32.mrf.mxu0
      %v1059 = vadd.f32 %v867, %v1058
      %v1060 = vpop.f32.mrf.mxu0
      %v1061 = vadd.f32 %v867, %v1060
      %1062 = vmatmul.bf16.gmra.mxu0 %v825
      %v1063 = vpop.f32.mrf.mxu0
      %v1064 = vadd.f32 %v867, %v1063
      %v1065 = vpop.f32.mrf.mxu0
      %v1066 = vadd.f32 %v867, %v1065
      %1067 = vmatmul.bf16.gmra.mxu0 %v826
      %v1068 = vpop.f32.mrf.mxu0
      %v1069 = vadd.f32 %v867, %v1068
      %v1070 = vpop.f32.mrf.mxu0
      %v1071 = vadd.f32 %v867, %v1070
      %1072 = vmatmul.bf16.gmra.mxu0 %v827
      %v1073 = vpop.f32.mrf.mxu0
      %v1074 = vadd.f32 %v867, %v1073
      %v1075 = vpop.f32.mrf.mxu0
      %v1076 = vadd.f32 %v867, %v1075
      %1077 = vmatmul.bf16.gmra.mxu0 %v828
      %v1078 = vpop.f32.mrf.mxu0
      %v1079 = vadd.f32 %v867, %v1078
      %v1080 = vpop.f32.mrf.mxu0
      %v1081 = vadd.f32 %v867, %v1080
      %1082 = vmatmul.bf16.gmra.mxu0 %v829
      %v1083 = vpop.f32.mrf.mxu0
      %v1084 = vadd.f32 %v867, %v1083
      %v1085 = vpop.f32.mrf.mxu0
      %v1086 = vadd.f32 %v867, %v1085
      %1087 = vmatmul.bf16.gmra.mxu0 %v830
      %v1088 = vpop.f32.mrf.mxu0
      %v1089 = vadd.f32 %v867, %v1088
      %v1090 = vpop.f32.mrf.mxu0
      %v1091 = vadd.f32 %v867, %v1090
      %1092 = vmatmul.bf16.gmra.mxu0 %v831
      %v1093 = vpop.f32.mrf.mxu0
      %v1094 = vadd.f32 %v867, %v1093
      %v1095 = vpop.f32.mrf.mxu0
      %v1096 = vadd.f32 %v867, %v1095
      %1097 = vdwg.mxu0
      %1098 = vmatpush.bf16.msra.mxu0 %v975
      %1099 = vmatpush.bf16.msra.mxu0 %v972
      %1100 = vmatpush.bf16.msra.mxu0 %v969
      %1101 = vmatpush.bf16.msra.mxu0 %v966
      %1102 = vmatpush.bf16.msra.mxu0 %v963
      %1103 = vmatpush.bf16.msra.mxu0 %v960
      %1104 = vmatpush.bf16.msra.mxu0 %v957
      %1105 = vmatpush.bf16.msra.mxu0 %v954
      %1106 = vmatmul.bf16.gmra.mxu0 %v824
      %v1107 = vpop.f32.mrf.mxu0
      %v1108 = vadd.f32 %v868, %v1107
      %v1109 = vpop.f32.mrf.mxu0
      %v1110 = vadd.f32 %v868, %v1109
      %1111 = vmatmul.bf16.gmra.mxu0 %v825
      %v1112 = vpop.f32.mrf.mxu0
      %v1113 = vadd.f32 %v868, %v1112
      %v1114 = vpop.f32.mrf.mxu0
      %v1115 = vadd.f32 %v868, %v1114
      %1116 = vmatmul.bf16.gmra.mxu0 %v826
      %v1117 = vpop.f32.mrf.mxu0
      %v1118 = vadd.f32 %v868, %v1117
      %v1119 = vpop.f32.mrf.mxu0
      %v1120 = vadd.f32 %v868, %v1119
      %1121 = vmatmul.bf16.gmra.mxu0 %v827
      %v1122 = vpop.f32.mrf.mxu0
      %v1123 = vadd.f32 %v868, %v1122
      %v1124 = vpop.f32.mrf.mxu0
      %v1125 = vadd.f32 %v868, %v1124
      %1126 = vmatmul.bf16.gmra.mxu0 %v828
      %v1127 = vpop.f32.mrf.mxu0
      %v1128 = vadd.f32 %v868, %v1127
      %v1129 = vpop.f32.mrf.mxu0
      %v1130 = vadd.f32 %v868, %v1129
      %1131 = vmatmul.bf16.gmra.mxu0 %v829
      %v1132 = vpop.f32.mrf.mxu0
      %v1133 = vadd.f32 %v868, %v1132
      %v1134 = vpop.f32.mrf.mxu0
      %v1135 = vadd.f32 %v868, %v1134
      %1136 = vmatmul.bf16.gmra.mxu0 %v830
      %v1137 = vpop.f32.mrf.mxu0
      %v1138 = vadd.f32 %v868, %v1137
      %v1139 = vpop.f32.mrf.mxu0
      %v1140 = vadd.f32 %v868, %v1139
      %1141 = vmatmul.bf16.gmra.mxu0 %v831
      %v1142 = vpop.f32.mrf.mxu0
      %v1143 = vadd.f32 %v868, %v1142
      %v1144 = vpop.f32.mrf.mxu0
      %v1145 = vadd.f32 %v868, %v1144
      %1146 = vdwg.mxu0
      %v1147 = vlaneseq
      %v1148 = vand.u32 %v1147, 127
      %vm1149 = vcmp.lt.s32.totalorder %v1148, 5
      %v1150 = vpack.c.bf16 %v1012, %v1010
      %v1151 = vpack.c.bf16 %v1017, %v1015
      %v1152 = vpack.c.bf16 %v1022, %v1020
      %v1153 = vpack.c.bf16 %v1027, %v1025
      %v1154 = vpack.c.bf16 %v1032, %v1030
      %v1155 = vpack.c.bf16 %v1037, %v1035
      %v1156 = vpack.c.bf16 %v1042, %v1040
      %v1157 = vpack.c.bf16 %v1047, %v1045
      %v1158 = vpack.c.bf16 %v1061, %v1059
      %v1159 = vpack.c.bf16 %v1066, %v1064
      %v1160 = vpack.c.bf16 %v1071, %v1069
      %v1161 = vpack.c.bf16 %v1076, %v1074
      %v1162 = vpack.c.bf16 %v1081, %v1079
      %v1163 = vpack.c.bf16 %v1086, %v1084
      %v1164 = vpack.c.bf16 %v1091, %v1089
      %v1165 = vpack.c.bf16 %v1096, %v1094
      %v1166 = vpack.c.bf16 %v1110, %v1108
      %v1167 = vpack.c.bf16 %v1115, %v1113
      %v1168 = vpack.c.bf16 %v1120, %v1118
      %v1169 = vpack.c.bf16 %v1125, %v1123
      %v1170 = vpack.c.bf16 %v1130, %v1128
      %v1171 = vpack.c.bf16 %v1135, %v1133
      %v1172 = vpack.c.bf16 %v1140, %v1138
      %v1173 = vpack.c.bf16 %v1145, %v1143
      %vm1174 = vcmask 261120
      %v1176 = vsel %vm1174, %v1150, 0
      %v1179 = vsel %vm1174, %v1151, 0
      %v1182 = vsel %vm1174, %v1152, 0
      %v1185 = vsel %vm1174, %v1153, 0
      %v1188 = vsel %vm1174, %v1154, 0
      %v1191 = vsel %vm1174, %v1155, 0
      %v1194 = vsel %vm1174, %v1156, 0
      %v1197 = vsel %vm1174, %v1157, 0
      %v1200 = vsel %vm1174, %v1158, 0
      %v1203 = vsel %vm1174, %v1159, 0
      %v1206 = vsel %vm1174, %v1160, 0
      %v1209 = vsel %vm1174, %v1161, 0
      %v1212 = vsel %vm1174, %v1162, 0
      %v1215 = vsel %vm1174, %v1163, 0
      %v1218 = vsel %vm1174, %v1164, 0
      %v1221 = vsel %vm1174, %v1165, 0
      %1223 = vmatpush.bf16.xpose.msra.mxu0 %v1221
      %1224 = vmatpush.bf16.xpose.msra.mxu0 %v1218
      %1225 = vmatpush.bf16.xpose.msra.mxu0 %v1215
      %1226 = vmatpush.bf16.xpose.msra.mxu0 %v1212
      %1227 = vmatpush.bf16.xpose.msra.mxu0 %v1209
      %1228 = vmatpush.bf16.xpose.msra.mxu0 %v1206
      %1229 = vmatpush.bf16.xpose.msra.mxu0 %v1203
      %1230 = vmatpush.bf16.xpose.msra.mxu0 %v1200
      %1231 = vmatmul.bf16.gmra.mxu0 %v1176
      %v1232 = vpop.f32.mrf.mxu0
      %v1233 = vadd.f32 0.0, %v1232
      %v1234 = vpop.f32.mrf.mxu0
      %v1235 = vadd.f32 0.0, %v1234
      %1236 = vmatmul.bf16.gmra.mxu0 %v1179
      %v1237 = vpop.f32.mrf.mxu0
      %v1238 = vadd.f32 0.0, %v1237
      %v1239 = vpop.f32.mrf.mxu0
      %v1240 = vadd.f32 0.0, %v1239
      %1241 = vmatmul.bf16.gmra.mxu0 %v1182
      %v1242 = vpop.f32.mrf.mxu0
      %v1243 = vadd.f32 0.0, %v1242
      %v1244 = vpop.f32.mrf.mxu0
      %v1245 = vadd.f32 0.0, %v1244
      %1246 = vmatmul.bf16.gmra.mxu0 %v1185
      %v1247 = vpop.f32.mrf.mxu0
      %v1248 = vadd.f32 0.0, %v1247
      %v1249 = vpop.f32.mrf.mxu0
      %v1250 = vadd.f32 0.0, %v1249
      %1251 = vmatmul.bf16.gmra.mxu0 %v1188
      %v1252 = vpop.f32.mrf.mxu0
      %v1253 = vadd.f32 0.0, %v1252
      %v1254 = vpop.f32.mrf.mxu0
      %v1255 = vadd.f32 0.0, %v1254
      %1256 = vmatmul.bf16.gmra.mxu0 %v1191
      %v1257 = vpop.f32.mrf.mxu0
      %v1258 = vadd.f32 0.0, %v1257
      %v1259 = vpop.f32.mrf.mxu0
      %v1260 = vadd.f32 0.0, %v1259
      %1261 = vmatmul.bf16.gmra.mxu0 %v1194
      %v1262 = vpop.f32.mrf.mxu0
      %v1263 = vadd.f32 0.0, %v1262
      %v1264 = vpop.f32.mrf.mxu0
      %v1265 = vadd.f32 0.0, %v1264
      %1266 = vmatmul.bf16.gmra.mxu0 %v1197
      %v1267 = vpop.f32.mrf.mxu0
      %v1268 = vadd.f32 0.0, %v1267
      %v1269 = vpop.f32.mrf.mxu0
      %v1270 = vadd.f32 0.0, %v1269
      %1271 = vdwg.mxu0
      %v1272 = vmul.f32 %v1233, 0.17677669
      %v1273 = vmul.f32 %v1235, 0.17677669
      %v1274 = vmul.f32 %v1238, 0.17677669
      %v1275 = vmul.f32 %v1240, 0.17677669
      %v1276 = vmul.f32 %v1243, 0.17677669
      %v1277 = vmul.f32 %v1245, 0.17677669
      %v1278 = vmul.f32 %v1248, 0.17677669
      %v1279 = vmul.f32 %v1250, 0.17677669
      %v1280 = vmul.f32 %v1253, 0.17677669
      %v1281 = vmul.f32 %v1255, 0.17677669
      %v1282 = vmul.f32 %v1258, 0.17677669
      %v1283 = vmul.f32 %v1260, 0.17677669
      %v1284 = vmul.f32 %v1263, 0.17677669
      %v1285 = vmul.f32 %v1265, 0.17677669
      %v1286 = vmul.f32 %v1268, 0.17677669
      %v1287 = vmul.f32 %v1270, 0.17677669
      %v1288 = vsel %vm1149, %v1272, -1e+30
      %v1289 = vsel %vm1149, %v1273, -1e+30
      %v1290 = vsel %vm1149, %v1274, -1e+30
      %v1291 = vsel %vm1149, %v1275, -1e+30
      %v1292 = vsel %vm1149, %v1276, -1e+30
      %v1293 = vsel %vm1149, %v1277, -1e+30
      %v1294 = vsel %vm1149, %v1278, -1e+30
      %v1295 = vsel %vm1149, %v1279, -1e+30
      %v1296 = vsel %vm1149, %v1280, -1e+30
      %v1297 = vsel %vm1149, %v1281, -1e+30
      %v1298 = vsel %vm1149, %v1282, -1e+30
      %v1299 = vsel %vm1149, %v1283, -1e+30
      %v1300 = vsel %vm1149, %v1284, -1e+30
      %v1301 = vsel %vm1149, %v1285, -1e+30
      %v1302 = vsel %vm1149, %v1286, -1e+30
      %v1303 = vsel %vm1149, %v1287, -1e+30
      %1304 = vmax.xlane.f32.xlu0 %v1288
      %v1305 = vpop.xlane.xlu0 %1304
      %1306 = vmax.xlane.f32.xlu0 %v1289
      %v1307 = vpop.xlane.xlu0 %1306
      %1308 = vmax.xlane.f32.xlu0 %v1290
      %v1309 = vpop.xlane.xlu0 %1308
      %1310 = vmax.xlane.f32.xlu0 %v1291
      %v1311 = vpop.xlane.xlu0 %1310
      %1312 = vmax.xlane.f32.xlu0 %v1292
      %v1313 = vpop.xlane.xlu0 %1312
      %1314 = vmax.xlane.f32.xlu0 %v1293
      %v1315 = vpop.xlane.xlu0 %1314
      %1316 = vmax.xlane.f32.xlu0 %v1294
      %v1317 = vpop.xlane.xlu0 %1316
      %1318 = vmax.xlane.f32.xlu0 %v1295
      %v1319 = vpop.xlane.xlu0 %1318
      %1320 = vmax.xlane.f32.xlu0 %v1296
      %v1321 = vpop.xlane.xlu0 %1320
      %1322 = vmax.xlane.f32.xlu0 %v1297
      %v1323 = vpop.xlane.xlu0 %1322
      %1324 = vmax.xlane.f32.xlu0 %v1298
      %v1325 = vpop.xlane.xlu0 %1324
      %1326 = vmax.xlane.f32.xlu0 %v1299
      %v1327 = vpop.xlane.xlu0 %1326
      %1328 = vmax.xlane.f32.xlu0 %v1300
      %v1329 = vpop.xlane.xlu0 %1328
      %1330 = vmax.xlane.f32.xlu0 %v1301
      %v1331 = vpop.xlane.xlu0 %1330
      %1332 = vmax.xlane.f32.xlu0 %v1302
      %v1333 = vpop.xlane.xlu0 %1332
      %1334 = vmax.xlane.f32.xlu0 %v1303
      %v1335 = vpop.xlane.xlu0 %1334
      %v1336 = vsub.f32 %v1288, %v1305
      %v1337 = vsub.f32 %v1289, %v1307
      %v1338 = vsub.f32 %v1290, %v1309
      %v1339 = vsub.f32 %v1291, %v1311
      %v1340 = vsub.f32 %v1292, %v1313
      %v1341 = vsub.f32 %v1293, %v1315
      %v1342 = vsub.f32 %v1294, %v1317
      %v1343 = vsub.f32 %v1295, %v1319
      %v1344 = vsub.f32 %v1296, %v1321
      %v1345 = vsub.f32 %v1297, %v1323
      %v1346 = vsub.f32 %v1298, %v1325
      %v1347 = vsub.f32 %v1299, %v1327
      %v1348 = vsub.f32 %v1300, %v1329
      %v1349 = vsub.f32 %v1301, %v1331
      %v1350 = vsub.f32 %v1302, %v1333
      %v1351 = vsub.f32 %v1303, %v1335
      %v1352 = vmul.f32 %v1336, 1.442695
      %v1353 = vpow.pop %v1352
      %v1354 = vmul.f32 %v1337, 1.442695
      %v1355 = vpow.pop %v1354
      %v1356 = vmul.f32 %v1338, 1.442695
      %v1357 = vpow.pop %v1356
      %v1358 = vmul.f32 %v1339, 1.442695
      %v1359 = vpow.pop %v1358
      %v1360 = vmul.f32 %v1340, 1.442695
      %v1361 = vpow.pop %v1360
      %v1362 = vmul.f32 %v1341, 1.442695
      %v1363 = vpow.pop %v1362
      %v1364 = vmul.f32 %v1342, 1.442695
      %v1365 = vpow.pop %v1364
      %v1366 = vmul.f32 %v1343, 1.442695
      %v1367 = vpow.pop %v1366
      %v1368 = vmul.f32 %v1344, 1.442695
      %v1369 = vpow.pop %v1368
      %v1370 = vmul.f32 %v1345, 1.442695
      %v1371 = vpow.pop %v1370
      %v1372 = vmul.f32 %v1346, 1.442695
      %v1373 = vpow.pop %v1372
      %v1374 = vmul.f32 %v1347, 1.442695
      %v1375 = vpow.pop %v1374
      %v1376 = vmul.f32 %v1348, 1.442695
      %v1377 = vpow.pop %v1376
      %v1378 = vmul.f32 %v1349, 1.442695
      %v1379 = vpow.pop %v1378
      %v1380 = vmul.f32 %v1350, 1.442695
      %v1381 = vpow.pop %v1380
      %v1382 = vmul.f32 %v1351, 1.442695
      %v1383 = vpow.pop %v1382
      %1384 = vadd.xlane.f32.xlu0 %v1353
      %v1385 = vpop.xlane.xlu0 %1384
      %1386 = vadd.xlane.f32.xlu0 %v1355
      %v1387 = vpop.xlane.xlu0 %1386
      %1388 = vadd.xlane.f32.xlu0 %v1357
      %v1389 = vpop.xlane.xlu0 %1388
      %1390 = vadd.xlane.f32.xlu0 %v1359
      %v1391 = vpop.xlane.xlu0 %1390
      %1392 = vadd.xlane.f32.xlu0 %v1361
      %v1393 = vpop.xlane.xlu0 %1392
      %1394 = vadd.xlane.f32.xlu0 %v1363
      %v1395 = vpop.xlane.xlu0 %1394
      %1396 = vadd.xlane.f32.xlu0 %v1365
      %v1397 = vpop.xlane.xlu0 %1396
      %1398 = vadd.xlane.f32.xlu0 %v1367
      %v1399 = vpop.xlane.xlu0 %1398
      %1400 = vadd.xlane.f32.xlu0 %v1369
      %v1401 = vpop.xlane.xlu0 %1400
      %1402 = vadd.xlane.f32.xlu0 %v1371
      %v1403 = vpop.xlane.xlu0 %1402
      %1404 = vadd.xlane.f32.xlu0 %v1373
      %v1405 = vpop.xlane.xlu0 %1404
      %1406 = vadd.xlane.f32.xlu0 %v1375
      %v1407 = vpop.xlane.xlu0 %1406
      %1408 = vadd.xlane.f32.xlu0 %v1377
      %v1409 = vpop.xlane.xlu0 %1408
      %1410 = vadd.xlane.f32.xlu0 %v1379
      %v1411 = vpop.xlane.xlu0 %1410
      %1412 = vadd.xlane.f32.xlu0 %v1381
      %v1413 = vpop.xlane.xlu0 %1412
      %1414 = vadd.xlane.f32.xlu0 %v1383
      %v1415 = vpop.xlane.xlu0 %1414
      %v1416 = vrcp.pop %v1385
      %v1417 = vrcp.pop %v1387
      %v1418 = vrcp.pop %v1389
      %v1419 = vrcp.pop %v1391
      %v1420 = vrcp.pop %v1393
      %v1421 = vrcp.pop %v1395
      %v1422 = vrcp.pop %v1397
      %v1423 = vrcp.pop %v1399
      %v1424 = vrcp.pop %v1401
      %v1425 = vrcp.pop %v1403
      %v1426 = vrcp.pop %v1405
      %v1427 = vrcp.pop %v1407
      %v1428 = vrcp.pop %v1409
      %v1429 = vrcp.pop %v1411
      %v1430 = vrcp.pop %v1413
      %v1431 = vrcp.pop %v1415
      %v1432 = vmul.f32 %v1353, %v1416
      %v1433 = vmul.f32 %v1355, %v1417
      %v1434 = vmul.f32 %v1357, %v1418
      %v1435 = vmul.f32 %v1359, %v1419
      %v1436 = vmul.f32 %v1361, %v1420
      %v1437 = vmul.f32 %v1363, %v1421
      %v1438 = vmul.f32 %v1365, %v1422
      %v1439 = vmul.f32 %v1367, %v1423
      %v1440 = vmul.f32 %v1369, %v1424
      %v1441 = vmul.f32 %v1371, %v1425
      %v1442 = vmul.f32 %v1373, %v1426
      %v1443 = vmul.f32 %v1375, %v1427
      %v1444 = vmul.f32 %v1377, %v1428
      %v1445 = vmul.f32 %v1379, %v1429
      %v1446 = vmul.f32 %v1381, %v1430
      %v1447 = vmul.f32 %v1383, %v1431
      %v1448 = vpack.c.bf16 %v1433, %v1432
      %v1449 = vpack.c.bf16 %v1435, %v1434
      %v1450 = vpack.c.bf16 %v1437, %v1436
      %v1451 = vpack.c.bf16 %v1439, %v1438
      %v1452 = vpack.c.bf16 %v1441, %v1440
      %v1453 = vpack.c.bf16 %v1443, %v1442
      %v1454 = vpack.c.bf16 %v1445, %v1444
      %v1455 = vpack.c.bf16 %v1447, %v1446
      %1456 = vmatpush.bf16.msra.mxu0 %v1173
      %1457 = vmatpush.bf16.msra.mxu0 %v1172
      %1458 = vmatpush.bf16.msra.mxu0 %v1171
      %1459 = vmatpush.bf16.msra.mxu0 %v1170
      %1460 = vmatpush.bf16.msra.mxu0 %v1169
      %1461 = vmatpush.bf16.msra.mxu0 %v1168
      %1462 = vmatpush.bf16.msra.mxu0 %v1167
      %1463 = vmatpush.bf16.msra.mxu0 %v1166
      %1464 = vmatmul.bf16.gmra.mxu0 %v1448
      %v1465 = vpop.f32.mrf.mxu0
      %v1466 = vadd.f32 0.0, %v1465
      %v1467 = vpop.f32.mrf.mxu0
      %v1468 = vadd.f32 0.0, %v1467
      %1469 = vmatmul.bf16.gmra.mxu0 %v1449
      %v1470 = vpop.f32.mrf.mxu0
      %v1471 = vadd.f32 0.0, %v1470
      %v1472 = vpop.f32.mrf.mxu0
      %v1473 = vadd.f32 0.0, %v1472
      %1474 = vmatmul.bf16.gmra.mxu0 %v1450
      %v1475 = vpop.f32.mrf.mxu0
      %v1476 = vadd.f32 0.0, %v1475
      %v1477 = vpop.f32.mrf.mxu0
      %v1478 = vadd.f32 0.0, %v1477
      %1479 = vmatmul.bf16.gmra.mxu0 %v1451
      %v1480 = vpop.f32.mrf.mxu0
      %v1481 = vadd.f32 0.0, %v1480
      %v1482 = vpop.f32.mrf.mxu0
      %v1483 = vadd.f32 0.0, %v1482
      %1484 = vmatmul.bf16.gmra.mxu0 %v1452
      %v1485 = vpop.f32.mrf.mxu0
      %v1486 = vadd.f32 0.0, %v1485
      %v1487 = vpop.f32.mrf.mxu0
      %v1488 = vadd.f32 0.0, %v1487
      %1489 = vmatmul.bf16.gmra.mxu0 %v1453
      %v1490 = vpop.f32.mrf.mxu0
      %v1491 = vadd.f32 0.0, %v1490
      %v1492 = vpop.f32.mrf.mxu0
      %v1493 = vadd.f32 0.0, %v1492
      %1494 = vmatmul.bf16.gmra.mxu0 %v1454
      %v1495 = vpop.f32.mrf.mxu0
      %v1496 = vadd.f32 0.0, %v1495
      %v1497 = vpop.f32.mrf.mxu0
      %v1498 = vadd.f32 0.0, %v1497
      %1499 = vmatmul.bf16.gmra.mxu0 %v1455
      %v1500 = vpop.f32.mrf.mxu0
      %v1501 = vadd.f32 0.0, %v1500
      %v1502 = vpop.f32.mrf.mxu0
      %v1503 = vadd.f32 0.0, %v1502
      %1504 = vdwg.mxu0
      %1505 = vst.msk [vmem:[#allocation2] sm:$0xff] %vm1174, %v1466
      %1506 = vst.msk [vmem:[#allocation2 + $0x8] sm:$0xff] %vm1174, %v1468
      %1507 = vst.msk [vmem:[#allocation2 + $0x10] sm:$0xff] %vm1174, %v1471
      %1508 = vst.msk [vmem:[#allocation2 + $0x18] sm:$0xff] %vm1174, %v1473
      %1509 = vst.msk [vmem:[#allocation2 + $0x20] sm:$0xff] %vm1174, %v1476
      %1510 = vst.msk [vmem:[#allocation2 + $0x28] sm:$0xff] %vm1174, %v1478
      %1511 = vst.msk [vmem:[#allocation2 + $0x30] sm:$0xff] %vm1174, %v1481
      %1512 = vst.msk [vmem:[#allocation2 + $0x38] sm:$0xff] %vm1174, %v1483
      %1513 = vst.msk [vmem:[#allocation2 + $0x40] sm:$0xff] %vm1174, %v1486
      %1514 = vst.msk [vmem:[#allocation2 + $0x48] sm:$0xff] %vm1174, %v1488
      %1515 = vst.msk [vmem:[#allocation2 + $0x50] sm:$0xff] %vm1174, %v1491
      %1516 = vst.msk [vmem:[#allocation2 + $0x58] sm:$0xff] %vm1174, %v1493
      %1517 = vst.msk [vmem:[#allocation2 + $0x60] sm:$0xff] %vm1174, %v1496
      %1518 = vst.msk [vmem:[#allocation2 + $0x68] sm:$0xff] %vm1174, %v1498
      %1519 = vst.msk [vmem:[#allocation2 + $0x70] sm:$0xff] %vm1174, %v1501
      %1520 = vst.msk [vmem:[#allocation2 + $0x78] sm:$0xff] %vm1174, %v1503
      %1529 = vrot.lane.b32.xlu0 %v1150, 96
      %v1530 = vpop.permute.xlu0 %1529
      %1531 = vrot.lane.b32.xlu0 %v1151, 96
      %v1532 = vpop.permute.xlu0 %1531
      %1533 = vrot.lane.b32.xlu0 %v1152, 96
      %v1534 = vpop.permute.xlu0 %1533
      %1535 = vrot.lane.b32.xlu0 %v1153, 96
      %v1536 = vpop.permute.xlu0 %1535
      %1537 = vrot.lane.b32.xlu0 %v1154, 96
      %v1538 = vpop.permute.xlu0 %1537
      %1539 = vrot.lane.b32.xlu0 %v1155, 96
      %v1540 = vpop.permute.xlu0 %1539
      %1541 = vrot.lane.b32.xlu0 %v1156, 96
      %v1542 = vpop.permute.xlu0 %1541
      %1543 = vrot.lane.b32.xlu0 %v1157, 96
      %v1544 = vpop.permute.xlu0 %1543
      %1553 = vrot.lane.b32.xlu0 %v1158, 96
      %v1554 = vpop.permute.xlu0 %1553
      %1555 = vrot.lane.b32.xlu0 %v1159, 96
      %v1556 = vpop.permute.xlu0 %1555
      %1557 = vrot.lane.b32.xlu0 %v1160, 96
      %v1558 = vpop.permute.xlu0 %1557
      %1559 = vrot.lane.b32.xlu0 %v1161, 96
      %v1560 = vpop.permute.xlu0 %1559
      %1561 = vrot.lane.b32.xlu0 %v1162, 96
      %v1562 = vpop.permute.xlu0 %1561
      %1563 = vrot.lane.b32.xlu0 %v1163, 96
      %v1564 = vpop.permute.xlu0 %1563
      %1565 = vrot.lane.b32.xlu0 %v1164, 96
      %v1566 = vpop.permute.xlu0 %1565
      %1567 = vrot.lane.b32.xlu0 %v1165, 96
      %v1568 = vpop.permute.xlu0 %1567
      %v1570 = vsel %vm1174, %v1530, 0
      %v1573 = vsel %vm1174, %v1532, 0
      %v1576 = vsel %vm1174, %v1534, 0
      %v1579 = vsel %vm1174, %v1536, 0
      %v1582 = vsel %vm1174, %v1538, 0
      %v1585 = vsel %vm1174, %v1540, 0
      %v1588 = vsel %vm1174, %v1542, 0
      %v1591 = vsel %vm1174, %v1544, 0
      %v1594 = vsel %vm1174, %v1554, 0
      %v1597 = vsel %vm1174, %v1556, 0
      %v1600 = vsel %vm1174, %v1558, 0
      %v1603 = vsel %vm1174, %v1560, 0
      %v1606 = vsel %vm1174, %v1562, 0
      %v1609 = vsel %vm1174, %v1564, 0
      %v1612 = vsel %vm1174, %v1566, 0
      %v1615 = vsel %vm1174, %v1568, 0
      %1617 = vmatpush.bf16.xpose.msra.mxu0 %v1615
      %1618 = vmatpush.bf16.xpose.msra.mxu0 %v1612
      %1619 = vmatpush.bf16.xpose.msra.mxu0 %v1609
      %1620 = vmatpush.bf16.xpose.msra.mxu0 %v1606
      %1621 = vmatpush.bf16.xpose.msra.mxu0 %v1603
      %1622 = vmatpush.bf16.xpose.msra.mxu0 %v1600
      %1623 = vmatpush.bf16.xpose.msra.mxu0 %v1597
      %1624 = vmatpush.bf16.xpose.msra.mxu0 %v1594
      %1625 = vmatmul.bf16.gmra.mxu0 %v1570
      %v1626 = vpop.f32.mrf.mxu0
      %v1627 = vadd.f32 0.0, %v1626
      %v1628 = vpop.f32.mrf.mxu0
      %v1629 = vadd.f32 0.0, %v1628
      %1630 = vmatmul.bf16.gmra.mxu0 %v1573
      %v1631 = vpop.f32.mrf.mxu0
      %v1632 = vadd.f32 0.0, %v1631
      %v1633 = vpop.f32.mrf.mxu0
      %v1634 = vadd.f32 0.0, %v1633
      %1635 = vmatmul.bf16.gmra.mxu0 %v1576
      %v1636 = vpop.f32.mrf.mxu0
      %v1637 = vadd.f32 0.0, %v1636
      %v1638 = vpop.f32.mrf.mxu0
      %v1639 = vadd.f32 0.0, %v1638
      %1640 = vmatmul.bf16.gmra.mxu0 %v1579
      %v1641 = vpop.f32.mrf.mxu0
      %v1642 = vadd.f32 0.0, %v1641
      %v1643 = vpop.f32.mrf.mxu0
      %v1644 = vadd.f32 0.0, %v1643
      %1645 = vmatmul.bf16.gmra.mxu0 %v1582
      %v1646 = vpop.f32.mrf.mxu0
      %v1647 = vadd.f32 0.0, %v1646
      %v1648 = vpop.f32.mrf.mxu0
      %v1649 = vadd.f32 0.0, %v1648
      %1650 = vmatmul.bf16.gmra.mxu0 %v1585
      %v1651 = vpop.f32.mrf.mxu0
      %v1652 = vadd.f32 0.0, %v1651
      %v1653 = vpop.f32.mrf.mxu0
      %v1654 = vadd.f32 0.0, %v1653
      %1655 = vmatmul.bf16.gmra.mxu0 %v1588
      %v1656 = vpop.f32.mrf.mxu0
      %v1657 = vadd.f32 0.0, %v1656
      %v1658 = vpop.f32.mrf.mxu0
      %v1659 = vadd.f32 0.0, %v1658
      %1660 = vmatmul.bf16.gmra.mxu0 %v1591
      %v1661 = vpop.f32.mrf.mxu0
      %v1662 = vadd.f32 0.0, %v1661
      %v1663 = vpop.f32.mrf.mxu0
      %v1664 = vadd.f32 0.0, %v1663
      %1665 = vdwg.mxu0
      %v1666 = vmul.f32 %v1627, 0.17677669
      %v1667 = vmul.f32 %v1629, 0.17677669
      %v1668 = vmul.f32 %v1632, 0.17677669
      %v1669 = vmul.f32 %v1634, 0.17677669
      %v1670 = vmul.f32 %v1637, 0.17677669
      %v1671 = vmul.f32 %v1639, 0.17677669
      %v1672 = vmul.f32 %v1642, 0.17677669
      %v1673 = vmul.f32 %v1644, 0.17677669
      %v1674 = vmul.f32 %v1647, 0.17677669
      %v1675 = vmul.f32 %v1649, 0.17677669
      %v1676 = vmul.f32 %v1652, 0.17677669
      %v1677 = vmul.f32 %v1654, 0.17677669
      %v1678 = vmul.f32 %v1657, 0.17677669
      %v1679 = vmul.f32 %v1659, 0.17677669
      %v1680 = vmul.f32 %v1662, 0.17677669
      %v1681 = vmul.f32 %v1664, 0.17677669
      %v1682 = vsel %vm1149, %v1666, -1e+30
      %v1683 = vsel %vm1149, %v1667, -1e+30
      %v1684 = vsel %vm1149, %v1668, -1e+30
      %v1685 = vsel %vm1149, %v1669, -1e+30
      %v1686 = vsel %vm1149, %v1670, -1e+30
      %v1687 = vsel %vm1149, %v1671, -1e+30
      %v1688 = vsel %vm1149, %v1672, -1e+30
      %v1689 = vsel %vm1149, %v1673, -1e+30
      %v1690 = vsel %vm1149, %v1674, -1e+30
      %v1691 = vsel %vm1149, %v1675, -1e+30
      %v1692 = vsel %vm1149, %v1676, -1e+30
      %v1693 = vsel %vm1149, %v1677, -1e+30
      %v1694 = vsel %vm1149, %v1678, -1e+30
      %v1695 = vsel %vm1149, %v1679, -1e+30
      %v1696 = vsel %vm1149, %v1680, -1e+30
      %v1697 = vsel %vm1149, %v1681, -1e+30
      %1698 = vmax.xlane.f32.xlu0 %v1682
      %v1699 = vpop.xlane.xlu0 %1698
      %1700 = vmax.xlane.f32.xlu0 %v1683
      %v1701 = vpop.xlane.xlu0 %1700
      %1702 = vmax.xlane.f32.xlu0 %v1684
      %v1703 = vpop.xlane.xlu0 %1702
      %1704 = vmax.xlane.f32.xlu0 %v1685
      %v1705 = vpop.xlane.xlu0 %1704
      %1706 = vmax.xlane.f32.xlu0 %v1686
      %v1707 = vpop.xlane.xlu0 %1706
      %1708 = vmax.xlane.f32.xlu0 %v1687
      %v1709 = vpop.xlane.xlu0 %1708
      %1710 = vmax.xlane.f32.xlu0 %v1688
      %v1711 = vpop.xlane.xlu0 %1710
      %1712 = vmax.xlane.f32.xlu0 %v1689
      %v1713 = vpop.xlane.xlu0 %1712
      %1714 = vmax.xlane.f32.xlu0 %v1690
      %v1715 = vpop.xlane.xlu0 %1714
      %1716 = vmax.xlane.f32.xlu0 %v1691
      %v1717 = vpop.xlane.xlu0 %1716
      %1718 = vmax.xlane.f32.xlu0 %v1692
      %v1719 = vpop.xlane.xlu0 %1718
      %1720 = vmax.xlane.f32.xlu0 %v1693
      %v1721 = vpop.xlane.xlu0 %1720
      %1722 = vmax.xlane.f32.xlu0 %v1694
      %v1723 = vpop.xlane.xlu0 %1722
      %1724 = vmax.xlane.f32.xlu0 %v1695
      %v1725 = vpop.xlane.xlu0 %1724
      %1726 = vmax.xlane.f32.xlu0 %v1696
      %v1727 = vpop.xlane.xlu0 %1726
      %1728 = vmax.xlane.f32.xlu0 %v1697
      %v1729 = vpop.xlane.xlu0 %1728
      %v1730 = vsub.f32 %v1682, %v1699
      %v1731 = vsub.f32 %v1683, %v1701
      %v1732 = vsub.f32 %v1684, %v1703
      %v1733 = vsub.f32 %v1685, %v1705
      %v1734 = vsub.f32 %v1686, %v1707
      %v1735 = vsub.f32 %v1687, %v1709
      %v1736 = vsub.f32 %v1688, %v1711
      %v1737 = vsub.f32 %v1689, %v1713
      %v1738 = vsub.f32 %v1690, %v1715
      %v1739 = vsub.f32 %v1691, %v1717
      %v1740 = vsub.f32 %v1692, %v1719
      %v1741 = vsub.f32 %v1693, %v1721
      %v1742 = vsub.f32 %v1694, %v1723
      %v1743 = vsub.f32 %v1695, %v1725
      %v1744 = vsub.f32 %v1696, %v1727
      %v1745 = vsub.f32 %v1697, %v1729
      %v1746 = vmul.f32 %v1730, 1.442695
      %v1747 = vpow.pop %v1746
      %v1748 = vmul.f32 %v1731, 1.442695
      %v1749 = vpow.pop %v1748
      %v1750 = vmul.f32 %v1732, 1.442695
      %v1751 = vpow.pop %v1750
      %v1752 = vmul.f32 %v1733, 1.442695
      %v1753 = vpow.pop %v1752
      %v1754 = vmul.f32 %v1734, 1.442695
      %v1755 = vpow.pop %v1754
      %v1756 = vmul.f32 %v1735, 1.442695
      %v1757 = vpow.pop %v1756
      %v1758 = vmul.f32 %v1736, 1.442695
      %v1759 = vpow.pop %v1758
      %v1760 = vmul.f32 %v1737, 1.442695
      %v1761 = vpow.pop %v1760
      %v1762 = vmul.f32 %v1738, 1.442695
      %v1763 = vpow.pop %v1762
      %v1764 = vmul.f32 %v1739, 1.442695
      %v1765 = vpow.pop %v1764
      %v1766 = vmul.f32 %v1740, 1.442695
      %v1767 = vpow.pop %v1766
      %v1768 = vmul.f32 %v1741, 1.442695
      %v1769 = vpow.pop %v1768
      %v1770 = vmul.f32 %v1742, 1.442695
      %v1771 = vpow.pop %v1770
      %v1772 = vmul.f32 %v1743, 1.442695
      %v1773 = vpow.pop %v1772
      %v1774 = vmul.f32 %v1744, 1.442695
      %v1775 = vpow.pop %v1774
      %v1776 = vmul.f32 %v1745, 1.442695
      %v1777 = vpow.pop %v1776
      %1778 = vadd.xlane.f32.xlu0 %v1747
      %v1779 = vpop.xlane.xlu0 %1778
      %1780 = vadd.xlane.f32.xlu0 %v1749
      %v1781 = vpop.xlane.xlu0 %1780
      %1782 = vadd.xlane.f32.xlu0 %v1751
      %v1783 = vpop.xlane.xlu0 %1782
      %1784 = vadd.xlane.f32.xlu0 %v1753
      %v1785 = vpop.xlane.xlu0 %1784
      %1786 = vadd.xlane.f32.xlu0 %v1755
      %v1787 = vpop.xlane.xlu0 %1786
      %1788 = vadd.xlane.f32.xlu0 %v1757
      %v1789 = vpop.xlane.xlu0 %1788
      %1790 = vadd.xlane.f32.xlu0 %v1759
      %v1791 = vpop.xlane.xlu0 %1790
      %1792 = vadd.xlane.f32.xlu0 %v1761
      %v1793 = vpop.xlane.xlu0 %1792
      %1794 = vadd.xlane.f32.xlu0 %v1763
      %v1795 = vpop.xlane.xlu0 %1794
      %1796 = vadd.xlane.f32.xlu0 %v1765
      %v1797 = vpop.xlane.xlu0 %1796
      %1798 = vadd.xlane.f32.xlu0 %v1767
      %v1799 = vpop.xlane.xlu0 %1798
      %1800 = vadd.xlane.f32.xlu0 %v1769
      %v1801 = vpop.xlane.xlu0 %1800
      %1802 = vadd.xlane.f32.xlu0 %v1771
      %v1803 = vpop.xlane.xlu0 %1802
      %1804 = vadd.xlane.f32.xlu0 %v1773
      %v1805 = vpop.xlane.xlu0 %1804
      %1806 = vadd.xlane.f32.xlu0 %v1775
      %v1807 = vpop.xlane.xlu0 %1806
      %1808 = vadd.xlane.f32.xlu0 %v1777
      %v1809 = vpop.xlane.xlu0 %1808
      %v1810 = vrcp.pop %v1779
      %v1811 = vrcp.pop %v1781
      %v1812 = vrcp.pop %v1783
      %v1813 = vrcp.pop %v1785
      %v1814 = vrcp.pop %v1787
      %v1815 = vrcp.pop %v1789
      %v1816 = vrcp.pop %v1791
      %v1817 = vrcp.pop %v1793
      %v1818 = vrcp.pop %v1795
      %v1819 = vrcp.pop %v1797
      %v1820 = vrcp.pop %v1799
      %v1821 = vrcp.pop %v1801
      %v1822 = vrcp.pop %v1803
      %v1823 = vrcp.pop %v1805
      %v1824 = vrcp.pop %v1807
      %v1825 = vrcp.pop %v1809
      %v1826 = vmul.f32 %v1747, %v1810
      %v1827 = vmul.f32 %v1749, %v1811
      %v1828 = vmul.f32 %v1751, %v1812
      %v1829 = vmul.f32 %v1753, %v1813
      %v1830 = vmul.f32 %v1755, %v1814
      %v1831 = vmul.f32 %v1757, %v1815
      %v1832 = vmul.f32 %v1759, %v1816
      %v1833 = vmul.f32 %v1761, %v1817
      %v1834 = vmul.f32 %v1763, %v1818
      %v1835 = vmul.f32 %v1765, %v1819
      %v1836 = vmul.f32 %v1767, %v1820
      %v1837 = vmul.f32 %v1769, %v1821
      %v1838 = vmul.f32 %v1771, %v1822
      %v1839 = vmul.f32 %v1773, %v1823
      %v1840 = vmul.f32 %v1775, %v1824
      %v1841 = vmul.f32 %v1777, %v1825
      %v1842 = vpack.c.bf16 %v1827, %v1826
      %v1843 = vpack.c.bf16 %v1829, %v1828
      %v1844 = vpack.c.bf16 %v1831, %v1830
      %v1845 = vpack.c.bf16 %v1833, %v1832
      %v1846 = vpack.c.bf16 %v1835, %v1834
      %v1847 = vpack.c.bf16 %v1837, %v1836
      %v1848 = vpack.c.bf16 %v1839, %v1838
      %v1849 = vpack.c.bf16 %v1841, %v1840
      %1858 = vrot.lane.b32.xlu0 %v1166, 96
      %v1859 = vpop.permute.xlu0 %1858
      %1860 = vrot.lane.b32.xlu0 %v1167, 96
      %v1861 = vpop.permute.xlu0 %1860
      %1862 = vrot.lane.b32.xlu0 %v1168, 96
      %v1863 = vpop.permute.xlu0 %1862
      %1864 = vrot.lane.b32.xlu0 %v1169, 96
      %v1865 = vpop.permute.xlu0 %1864
      %1866 = vrot.lane.b32.xlu0 %v1170, 96
      %v1867 = vpop.permute.xlu0 %1866
      %1868 = vrot.lane.b32.xlu0 %v1171, 96
      %v1869 = vpop.permute.xlu0 %1868
      %1870 = vrot.lane.b32.xlu0 %v1172, 96
      %v1871 = vpop.permute.xlu0 %1870
      %1872 = vrot.lane.b32.xlu0 %v1173, 96
      %v1873 = vpop.permute.xlu0 %1872
      %1882 = vmatpush.bf16.msra.mxu0 %v1873
      %1883 = vmatpush.bf16.msra.mxu0 %v1871
      %1884 = vmatpush.bf16.msra.mxu0 %v1869
      %1885 = vmatpush.bf16.msra.mxu0 %v1867
      %1886 = vmatpush.bf16.msra.mxu0 %v1865
      %1887 = vmatpush.bf16.msra.mxu0 %v1863
      %1888 = vmatpush.bf16.msra.mxu0 %v1861
      %1889 = vmatpush.bf16.msra.mxu0 %v1859
      %1890 = vmatmul.bf16.gmra.mxu0 %v1842
      %v1891 = vpop.f32.mrf.mxu0
      %v1892 = vadd.f32 0.0, %v1891
      %v1893 = vpop.f32.mrf.mxu0
      %v1894 = vadd.f32 0.0, %v1893
      %1895 = vmatmul.bf16.gmra.mxu0 %v1843
      %v1896 = vpop.f32.mrf.mxu0
      %v1897 = vadd.f32 0.0, %v1896
      %v1898 = vpop.f32.mrf.mxu0
      %v1899 = vadd.f32 0.0, %v1898
      %1900 = vmatmul.bf16.gmra.mxu0 %v1844
      %v1901 = vpop.f32.mrf.mxu0
      %v1902 = vadd.f32 0.0, %v1901
      %v1903 = vpop.f32.mrf.mxu0
      %v1904 = vadd.f32 0.0, %v1903
      %1905 = vmatmul.bf16.gmra.mxu0 %v1845
      %v1906 = vpop.f32.mrf.mxu0
      %v1907 = vadd.f32 0.0, %v1906
      %v1908 = vpop.f32.mrf.mxu0
      %v1909 = vadd.f32 0.0, %v1908
      %1910 = vmatmul.bf16.gmra.mxu0 %v1846
      %v1911 = vpop.f32.mrf.mxu0
      %v1912 = vadd.f32 0.0, %v1911
      %v1913 = vpop.f32.mrf.mxu0
      %v1914 = vadd.f32 0.0, %v1913
      %1915 = vmatmul.bf16.gmra.mxu0 %v1847
      %v1916 = vpop.f32.mrf.mxu0
      %v1917 = vadd.f32 0.0, %v1916
      %v1918 = vpop.f32.mrf.mxu0
      %v1919 = vadd.f32 0.0, %v1918
      %1920 = vmatmul.bf16.gmra.mxu0 %v1848
      %v1921 = vpop.f32.mrf.mxu0
      %v1922 = vadd.f32 0.0, %v1921
      %v1923 = vpop.f32.mrf.mxu0
      %v1924 = vadd.f32 0.0, %v1923
      %1925 = vmatmul.bf16.gmra.mxu0 %v1849
      %v1926 = vpop.f32.mrf.mxu0
      %v1927 = vadd.f32 0.0, %v1926
      %v1928 = vpop.f32.mrf.mxu0
      %v1929 = vadd.f32 0.0, %v1928
      %1930 = vdwg.mxu0
      %1947 = vrot.lane.b32.xlu0 %v1892, 32
      %v1948 = vpop.permute.xlu0 %1947
      %1949 = vrot.lane.b32.xlu0 %v1894, 32
      %v1950 = vpop.permute.xlu0 %1949
      %1951 = vrot.lane.b32.xlu0 %v1897, 32
      %v1952 = vpop.permute.xlu0 %1951
      %1953 = vrot.lane.b32.xlu0 %v1899, 32
      %v1954 = vpop.permute.xlu0 %1953
      %1955 = vrot.lane.b32.xlu0 %v1902, 32
      %v1956 = vpop.permute.xlu0 %1955
      %1957 = vrot.lane.b32.xlu0 %v1904, 32
      %v1958 = vpop.permute.xlu0 %1957
      %1959 = vrot.lane.b32.xlu0 %v1907, 32
      %v1960 = vpop.permute.xlu0 %1959
      %1961 = vrot.lane.b32.xlu0 %v1909, 32
      %v1962 = vpop.permute.xlu0 %1961
      %1963 = vrot.lane.b32.xlu0 %v1912, 32
      %v1964 = vpop.permute.xlu0 %1963
      %1965 = vrot.lane.b32.xlu0 %v1914, 32
      %v1966 = vpop.permute.xlu0 %1965
      %1967 = vrot.lane.b32.xlu0 %v1917, 32
      %v1968 = vpop.permute.xlu0 %1967
      %1969 = vrot.lane.b32.xlu0 %v1919, 32
      %v1970 = vpop.permute.xlu0 %1969
      %1971 = vrot.lane.b32.xlu0 %v1922, 32
      %v1972 = vpop.permute.xlu0 %1971
      %1973 = vrot.lane.b32.xlu0 %v1924, 32
      %v1974 = vpop.permute.xlu0 %1973
      %1975 = vrot.lane.b32.xlu0 %v1927, 32
      %v1976 = vpop.permute.xlu0 %1975
      %1977 = vrot.lane.b32.xlu0 %v1929, 32
      %v1978 = vpop.permute.xlu0 %1977
      %vm1995 = vcmask 523520
      %1996 = vst.msk [vmem:[#allocation2] sm:$0xff] %vm1995, %v1948
      %1997 = vst.msk [vmem:[#allocation2 + $0x8] sm:$0xff] %vm1995, %v1950
      %1998 = vst.msk [vmem:[#allocation2 + $0x10] sm:$0xff] %vm1995, %v1952
      %1999 = vst.msk [vmem:[#allocation2 + $0x18] sm:$0xff] %vm1995, %v1954
      %2000 = vst.msk [vmem:[#allocation2 + $0x20] sm:$0xff] %vm1995, %v1956
      %2001 = vst.msk [vmem:[#allocation2 + $0x28] sm:$0xff] %vm1995, %v1958
      %2002 = vst.msk [vmem:[#allocation2 + $0x30] sm:$0xff] %vm1995, %v1960
      %2003 = vst.msk [vmem:[#allocation2 + $0x38] sm:$0xff] %vm1995, %v1962
      %2004 = vst.msk [vmem:[#allocation2 + $0x40] sm:$0xff] %vm1995, %v1964
      %2005 = vst.msk [vmem:[#allocation2 + $0x48] sm:$0xff] %vm1995, %v1966
      %2006 = vst.msk [vmem:[#allocation2 + $0x50] sm:$0xff] %vm1995, %v1968
      %2007 = vst.msk [vmem:[#allocation2 + $0x58] sm:$0xff] %vm1995, %v1970
      %2008 = vst.msk [vmem:[#allocation2 + $0x60] sm:$0xff] %vm1995, %v1972
      %2009 = vst.msk [vmem:[#allocation2 + $0x68] sm:$0xff] %vm1995, %v1974
      %2010 = vst.msk [vmem:[#allocation2 + $0x70] sm:$0xff] %vm1995, %v1976
      %2011 = vst.msk [vmem:[#allocation2 + $0x78] sm:$0xff] %vm1995, %v1978
      %2012 = vrot.lane.b32.xlu0 %v1150, 64
      %v2013 = vpop.permute.xlu0 %2012
      %2014 = vrot.lane.b32.xlu0 %v1151, 64
      %v2015 = vpop.permute.xlu0 %2014
      %2016 = vrot.lane.b32.xlu0 %v1152, 64
      %v2017 = vpop.permute.xlu0 %2016
      %2018 = vrot.lane.b32.xlu0 %v1153, 64
      %v2019 = vpop.permute.xlu0 %2018
      %2020 = vrot.lane.b32.xlu0 %v1154, 64
      %v2021 = vpop.permute.xlu0 %2020
      %2022 = vrot.lane.b32.xlu0 %v1155, 64
      %v2023 = vpop.permute.xlu0 %2022
      %2024 = vrot.lane.b32.xlu0 %v1156, 64
      %v2025 = vpop.permute.xlu0 %2024
      %2026 = vrot.lane.b32.xlu0 %v1157, 64
      %v2027 = vpop.permute.xlu0 %2026
      %2028 = vrot.lane.b32.xlu0 %v1158, 64
      %v2029 = vpop.permute.xlu0 %2028
      %2030 = vrot.lane.b32.xlu0 %v1159, 64
      %v2031 = vpop.permute.xlu0 %2030
      %2032 = vrot.lane.b32.xlu0 %v1160, 64
      %v2033 = vpop.permute.xlu0 %2032
      %2034 = vrot.lane.b32.xlu0 %v1161, 64
      %v2035 = vpop.permute.xlu0 %2034
      %2036 = vrot.lane.b32.xlu0 %v1162, 64
      %v2037 = vpop.permute.xlu0 %2036
      %2038 = vrot.lane.b32.xlu0 %v1163, 64
      %v2039 = vpop.permute.xlu0 %2038
      %2040 = vrot.lane.b32.xlu0 %v1164, 64
      %v2041 = vpop.permute.xlu0 %2040
      %2042 = vrot.lane.b32.xlu0 %v1165, 64
      %v2043 = vpop.permute.xlu0 %2042
      %v2045 = vsel %vm1174, %v2013, 0
      %v2048 = vsel %vm1174, %v2015, 0
      %v2051 = vsel %vm1174, %v2017, 0
      %v2054 = vsel %vm1174, %v2019, 0
      %v2057 = vsel %vm1174, %v2021, 0
      %v2060 = vsel %vm1174, %v2023, 0
      %v2063 = vsel %vm1174, %v2025, 0
      %v2066 = vsel %vm1174, %v2027, 0
      %v2069 = vsel %vm1174, %v2029, 0
      %v2072 = vsel %vm1174, %v2031, 0
      %v2075 = vsel %vm1174, %v2033, 0
      %v2078 = vsel %vm1174, %v2035, 0
      %v2081 = vsel %vm1174, %v2037, 0
      %v2084 = vsel %vm1174, %v2039, 0
      %v2087 = vsel %vm1174, %v2041, 0
      %v2090 = vsel %vm1174, %v2043, 0
      %2092 = vmatpush.bf16.xpose.msra.mxu0 %v2090
      %2093 = vmatpush.bf16.xpose.msra.mxu0 %v2087
      %2094 = vmatpush.bf16.xpose.msra.mxu0 %v2084
      %2095 = vmatpush.bf16.xpose.msra.mxu0 %v2081
      %2096 = vmatpush.bf16.xpose.msra.mxu0 %v2078
      %2097 = vmatpush.bf16.xpose.msra.mxu0 %v2075
      %2098 = vmatpush.bf16.xpose.msra.mxu0 %v2072
      %2099 = vmatpush.bf16.xpose.msra.mxu0 %v2069
      %2100 = vmatmul.bf16.gmra.mxu0 %v2045
      %v2101 = vpop.f32.mrf.mxu0
      %v2102 = vadd.f32 0.0, %v2101
      %v2103 = vpop.f32.mrf.mxu0
      %v2104 = vadd.f32 0.0, %v2103
      %2105 = vmatmul.bf16.gmra.mxu0 %v2048
      %v2106 = vpop.f32.mrf.mxu0
      %v2107 = vadd.f32 0.0, %v2106
      %v2108 = vpop.f32.mrf.mxu0
      %v2109 = vadd.f32 0.0, %v2108
      %2110 = vmatmul.bf16.gmra.mxu0 %v2051
      %v2111 = vpop.f32.mrf.mxu0
      %v2112 = vadd.f32 0.0, %v2111
      %v2113 = vpop.f32.mrf.mxu0
      %v2114 = vadd.f32 0.0, %v2113
      %2115 = vmatmul.bf16.gmra.mxu0 %v2054
      %v2116 = vpop.f32.mrf.mxu0
      %v2117 = vadd.f32 0.0, %v2116
      %v2118 = vpop.f32.mrf.mxu0
      %v2119 = vadd.f32 0.0, %v2118
      %2120 = vmatmul.bf16.gmra.mxu0 %v2057
      %v2121 = vpop.f32.mrf.mxu0
      %v2122 = vadd.f32 0.0, %v2121
      %v2123 = vpop.f32.mrf.mxu0
      %v2124 = vadd.f32 0.0, %v2123
      %2125 = vmatmul.bf16.gmra.mxu0 %v2060
      %v2126 = vpop.f32.mrf.mxu0
      %v2127 = vadd.f32 0.0, %v2126
      %v2128 = vpop.f32.mrf.mxu0
      %v2129 = vadd.f32 0.0, %v2128
      %2130 = vmatmul.bf16.gmra.mxu0 %v2063
      %v2131 = vpop.f32.mrf.mxu0
      %v2132 = vadd.f32 0.0, %v2131
      %v2133 = vpop.f32.mrf.mxu0
      %v2134 = vadd.f32 0.0, %v2133
      %2135 = vmatmul.bf16.gmra.mxu0 %v2066
      %v2136 = vpop.f32.mrf.mxu0
      %v2137 = vadd.f32 0.0, %v2136
      %v2138 = vpop.f32.mrf.mxu0
      %v2139 = vadd.f32 0.0, %v2138
      %2140 = vdwg.mxu0
      %v2141 = vmul.f32 %v2102, 0.17677669
      %v2142 = vmul.f32 %v2104, 0.17677669
      %v2143 = vmul.f32 %v2107, 0.17677669
      %v2144 = vmul.f32 %v2109, 0.17677669
      %v2145 = vmul.f32 %v2112, 0.17677669
      %v2146 = vmul.f32 %v2114, 0.17677669
      %v2147 = vmul.f32 %v2117, 0.17677669
      %v2148 = vmul.f32 %v2119, 0.17677669
      %v2149 = vmul.f32 %v2122, 0.17677669
      %v2150 = vmul.f32 %v2124, 0.17677669
      %v2151 = vmul.f32 %v2127, 0.17677669
      %v2152 = vmul.f32 %v2129, 0.17677669
      %v2153 = vmul.f32 %v2132, 0.17677669
      %v2154 = vmul.f32 %v2134, 0.17677669
      %v2155 = vmul.f32 %v2137, 0.17677669
      %v2156 = vmul.f32 %v2139, 0.17677669
      %v2157 = vsel %vm1149, %v2141, -1e+30
      %v2158 = vsel %vm1149, %v2142, -1e+30
      %v2159 = vsel %vm1149, %v2143, -1e+30
      %v2160 = vsel %vm1149, %v2144, -1e+30
      %v2161 = vsel %vm1149, %v2145, -1e+30
      %v2162 = vsel %vm1149, %v2146, -1e+30
      %v2163 = vsel %vm1149, %v2147, -1e+30
      %v2164 = vsel %vm1149, %v2148, -1e+30
      %v2165 = vsel %vm1149, %v2149, -1e+30
      %v2166 = vsel %vm1149, %v2150, -1e+30
      %v2167 = vsel %vm1149, %v2151, -1e+30
      %v2168 = vsel %vm1149, %v2152, -1e+30
      %v2169 = vsel %vm1149, %v2153, -1e+30
      %v2170 = vsel %vm1149, %v2154, -1e+30
      %v2171 = vsel %vm1149, %v2155, -1e+30
      %v2172 = vsel %vm1149, %v2156, -1e+30
      %2173 = vmax.xlane.f32.xlu0 %v2157
      %v2174 = vpop.xlane.xlu0 %2173
      %2175 = vmax.xlane.f32.xlu0 %v2158
      %v2176 = vpop.xlane.xlu0 %2175
      %2177 = vmax.xlane.f32.xlu0 %v2159
      %v2178 = vpop.xlane.xlu0 %2177
      %2179 = vmax.xlane.f32.xlu0 %v2160
      %v2180 = vpop.xlane.xlu0 %2179
      %2181 = vmax.xlane.f32.xlu0 %v2161
      %v2182 = vpop.xlane.xlu0 %2181
      %2183 = vmax.xlane.f32.xlu0 %v2162
      %v2184 = vpop.xlane.xlu0 %2183
      %2185 = vmax.xlane.f32.xlu0 %v2163
      %v2186 = vpop.xlane.xlu0 %2185
      %2187 = vmax.xlane.f32.xlu0 %v2164
      %v2188 = vpop.xlane.xlu0 %2187
      %2189 = vmax.xlane.f32.xlu0 %v2165
      %v2190 = vpop.xlane.xlu0 %2189
      %2191 = vmax.xlane.f32.xlu0 %v2166
      %v2192 = vpop.xlane.xlu0 %2191
      %2193 = vmax.xlane.f32.xlu0 %v2167
      %v2194 = vpop.xlane.xlu0 %2193
      %2195 = vmax.xlane.f32.xlu0 %v2168
      %v2196 = vpop.xlane.xlu0 %2195
      %2197 = vmax.xlane.f32.xlu0 %v2169
      %v2198 = vpop.xlane.xlu0 %2197
      %2199 = vmax.xlane.f32.xlu0 %v2170
      %v2200 = vpop.xlane.xlu0 %2199
      %2201 = vmax.xlane.f32.xlu0 %v2171
      %v2202 = vpop.xlane.xlu0 %2201
      %2203 = vmax.xlane.f32.xlu0 %v2172
      %v2204 = vpop.xlane.xlu0 %2203
      %v2205 = vsub.f32 %v2157, %v2174
      %v2206 = vsub.f32 %v2158, %v2176
      %v2207 = vsub.f32 %v2159, %v2178
      %v2208 = vsub.f32 %v2160, %v2180
      %v2209 = vsub.f32 %v2161, %v2182
      %v2210 = vsub.f32 %v2162, %v2184
      %v2211 = vsub.f32 %v2163, %v2186
      %v2212 = vsub.f32 %v2164, %v2188
      %v2213 = vsub.f32 %v2165, %v2190
      %v2214 = vsub.f32 %v2166, %v2192
      %v2215 = vsub.f32 %v2167, %v2194
      %v2216 = vsub.f32 %v2168, %v2196
      %v2217 = vsub.f32 %v2169, %v2198
      %v2218 = vsub.f32 %v2170, %v2200
      %v2219 = vsub.f32 %v2171, %v2202
      %v2220 = vsub.f32 %v2172, %v2204
      %v2221 = vmul.f32 %v2205, 1.442695
      %v2222 = vpow.pop %v2221
      %v2223 = vmul.f32 %v2206, 1.442695
      %v2224 = vpow.pop %v2223
      %v2225 = vmul.f32 %v2207, 1.442695
      %v2226 = vpow.pop %v2225
      %v2227 = vmul.f32 %v2208, 1.442695
      %v2228 = vpow.pop %v2227
      %v2229 = vmul.f32 %v2209, 1.442695
      %v2230 = vpow.pop %v2229
      %v2231 = vmul.f32 %v2210, 1.442695
      %v2232 = vpow.pop %v2231
      %v2233 = vmul.f32 %v2211, 1.442695
      %v2234 = vpow.pop %v2233
      %v2235 = vmul.f32 %v2212, 1.442695
      %v2236 = vpow.pop %v2235
      %v2237 = vmul.f32 %v2213, 1.442695
      %v2238 = vpow.pop %v2237
      %v2239 = vmul.f32 %v2214, 1.442695
      %v2240 = vpow.pop %v2239
      %v2241 = vmul.f32 %v2215, 1.442695
      %v2242 = vpow.pop %v2241
      %v2243 = vmul.f32 %v2216, 1.442695
      %v2244 = vpow.pop %v2243
      %v2245 = vmul.f32 %v2217, 1.442695
      %v2246 = vpow.pop %v2245
      %v2247 = vmul.f32 %v2218, 1.442695
      %v2248 = vpow.pop %v2247
      %v2249 = vmul.f32 %v2219, 1.442695
      %v2250 = vpow.pop %v2249
      %v2251 = vmul.f32 %v2220, 1.442695
      %v2252 = vpow.pop %v2251
      %2253 = vadd.xlane.f32.xlu0 %v2222
      %v2254 = vpop.xlane.xlu0 %2253
      %2255 = vadd.xlane.f32.xlu0 %v2224
      %v2256 = vpop.xlane.xlu0 %2255
      %2257 = vadd.xlane.f32.xlu0 %v2226
      %v2258 = vpop.xlane.xlu0 %2257
      %2259 = vadd.xlane.f32.xlu0 %v2228
      %v2260 = vpop.xlane.xlu0 %2259
      %2261 = vadd.xlane.f32.xlu0 %v2230
      %v2262 = vpop.xlane.xlu0 %2261
      %2263 = vadd.xlane.f32.xlu0 %v2232
      %v2264 = vpop.xlane.xlu0 %2263
      %2265 = vadd.xlane.f32.xlu0 %v2234
      %v2266 = vpop.xlane.xlu0 %2265
      %2267 = vadd.xlane.f32.xlu0 %v2236
      %v2268 = vpop.xlane.xlu0 %2267
      %2269 = vadd.xlane.f32.xlu0 %v2238
      %v2270 = vpop.xlane.xlu0 %2269
      %2271 = vadd.xlane.f32.xlu0 %v2240
      %v2272 = vpop.xlane.xlu0 %2271
      %2273 = vadd.xlane.f32.xlu0 %v2242
      %v2274 = vpop.xlane.xlu0 %2273
      %2275 = vadd.xlane.f32.xlu0 %v2244
      %v2276 = vpop.xlane.xlu0 %2275
      %2277 = vadd.xlane.f32.xlu0 %v2246
      %v2278 = vpop.xlane.xlu0 %2277
      %2279 = vadd.xlane.f32.xlu0 %v2248
      %v2280 = vpop.xlane.xlu0 %2279
      %2281 = vadd.xlane.f32.xlu0 %v2250
      %v2282 = vpop.xlane.xlu0 %2281
      %2283 = vadd.xlane.f32.xlu0 %v2252
      %v2284 = vpop.xlane.xlu0 %2283
      %v2285 = vrcp.pop %v2254
      %v2286 = vrcp.pop %v2256
      %v2287 = vrcp.pop %v2258
      %v2288 = vrcp.pop %v2260
      %v2289 = vrcp.pop %v2262
      %v2290 = vrcp.pop %v2264
      %v2291 = vrcp.pop %v2266
      %v2292 = vrcp.pop %v2268
      %v2293 = vrcp.pop %v2270
      %v2294 = vrcp.pop %v2272
      %v2295 = vrcp.pop %v2274
      %v2296 = vrcp.pop %v2276
      %v2297 = vrcp.pop %v2278
      %v2298 = vrcp.pop %v2280
      %v2299 = vrcp.pop %v2282
      %v2300 = vrcp.pop %v2284
      %v2301 = vmul.f32 %v2222, %v2285
      %v2302 = vmul.f32 %v2224, %v2286
      %v2303 = vmul.f32 %v2226, %v2287
      %v2304 = vmul.f32 %v2228, %v2288
      %v2305 = vmul.f32 %v2230, %v2289
      %v2306 = vmul.f32 %v2232, %v2290
      %v2307 = vmul.f32 %v2234, %v2291
      %v2308 = vmul.f32 %v2236, %v2292
      %v2309 = vmul.f32 %v2238, %v2293
      %v2310 = vmul.f32 %v2240, %v2294
      %v2311 = vmul.f32 %v2242, %v2295
      %v2312 = vmul.f32 %v2244, %v2296
      %v2313 = vmul.f32 %v2246, %v2297
      %v2314 = vmul.f32 %v2248, %v2298
      %v2315 = vmul.f32 %v2250, %v2299
      %v2316 = vmul.f32 %v2252, %v2300
      %v2317 = vpack.c.bf16 %v2302, %v2301
      %v2318 = vpack.c.bf16 %v2304, %v2303
      %v2319 = vpack.c.bf16 %v2306, %v2305
      %v2320 = vpack.c.bf16 %v2308, %v2307
      %v2321 = vpack.c.bf16 %v2310, %v2309
      %v2322 = vpack.c.bf16 %v2312, %v2311
      %v2323 = vpack.c.bf16 %v2314, %v2313
      %v2324 = vpack.c.bf16 %v2316, %v2315
      %2325 = vrot.lane.b32.xlu0 %v1166, 64
      %v2326 = vpop.permute.xlu0 %2325
      %2327 = vrot.lane.b32.xlu0 %v1167, 64
      %v2328 = vpop.permute.xlu0 %2327
      %2329 = vrot.lane.b32.xlu0 %v1168, 64
      %v2330 = vpop.permute.xlu0 %2329
      %2331 = vrot.lane.b32.xlu0 %v1169, 64
      %v2332 = vpop.permute.xlu0 %2331
      %2333 = vrot.lane.b32.xlu0 %v1170, 64
      %v2334 = vpop.permute.xlu0 %2333
      %2335 = vrot.lane.b32.xlu0 %v1171, 64
      %v2336 = vpop.permute.xlu0 %2335
      %2337 = vrot.lane.b32.xlu0 %v1172, 64
      %v2338 = vpop.permute.xlu0 %2337
      %2339 = vrot.lane.b32.xlu0 %v1173, 64
      %v2340 = vpop.permute.xlu0 %2339
      %2349 = vmatpush.bf16.msra.mxu0 %v2340
      %2350 = vmatpush.bf16.msra.mxu0 %v2338
      %2351 = vmatpush.bf16.msra.mxu0 %v2336
      %2352 = vmatpush.bf16.msra.mxu0 %v2334
      %2353 = vmatpush.bf16.msra.mxu0 %v2332
      %2354 = vmatpush.bf16.msra.mxu0 %v2330
      %2355 = vmatpush.bf16.msra.mxu0 %v2328
      %2356 = vmatpush.bf16.msra.mxu0 %v2326
      %2357 = vmatmul.bf16.gmra.mxu0 %v2317
      %v2358 = vpop.f32.mrf.mxu0
      %v2359 = vadd.f32 0.0, %v2358
      %v2360 = vpop.f32.mrf.mxu0
      %v2361 = vadd.f32 0.0, %v2360
      %2362 = vmatmul.bf16.gmra.mxu0 %v2318
      %v2363 = vpop.f32.mrf.mxu0
      %v2364 = vadd.f32 0.0, %v2363
      %v2365 = vpop.f32.mrf.mxu0
      %v2366 = vadd.f32 0.0, %v2365
      %2367 = vmatmul.bf16.gmra.mxu0 %v2319
      %v2368 = vpop.f32.mrf.mxu0
      %v2369 = vadd.f32 0.0, %v2368
      %v2370 = vpop.f32.mrf.mxu0
      %v2371 = vadd.f32 0.0, %v2370
      %2372 = vmatmul.bf16.gmra.mxu0 %v2320
      %v2373 = vpop.f32.mrf.mxu0
      %v2374 = vadd.f32 0.0, %v2373
      %v2375 = vpop.f32.mrf.mxu0
      %v2376 = vadd.f32 0.0, %v2375
      %2377 = vmatmul.bf16.gmra.mxu0 %v2321
      %v2378 = vpop.f32.mrf.mxu0
      %v2379 = vadd.f32 0.0, %v2378
      %v2380 = vpop.f32.mrf.mxu0
      %v2381 = vadd.f32 0.0, %v2380
      %2382 = vmatmul.bf16.gmra.mxu0 %v2322
      %v2383 = vpop.f32.mrf.mxu0
      %v2384 = vadd.f32 0.0, %v2383
      %v2385 = vpop.f32.mrf.mxu0
      %v2386 = vadd.f32 0.0, %v2385
      %2387 = vmatmul.bf16.gmra.mxu0 %v2323
      %v2388 = vpop.f32.mrf.mxu0
      %v2389 = vadd.f32 0.0, %v2388
      %v2390 = vpop.f32.mrf.mxu0
      %v2391 = vadd.f32 0.0, %v2390
      %2392 = vmatmul.bf16.gmra.mxu0 %v2324
      %v2393 = vpop.f32.mrf.mxu0
      %v2394 = vadd.f32 0.0, %v2393
      %v2395 = vpop.f32.mrf.mxu0
      %v2396 = vadd.f32 0.0, %v2395
      %2397 = vdwg.mxu0
      %2414 = vrot.lane.b32.xlu0 %v2359, 64
      %v2415 = vpop.permute.xlu0 %2414
      %2416 = vrot.lane.b32.xlu0 %v2361, 64
      %v2417 = vpop.permute.xlu0 %2416
      %2418 = vrot.lane.b32.xlu0 %v2364, 64
      %v2419 = vpop.permute.xlu0 %2418
      %2420 = vrot.lane.b32.xlu0 %v2366, 64
      %v2421 = vpop.permute.xlu0 %2420
      %2422 = vrot.lane.b32.xlu0 %v2369, 64
      %v2423 = vpop.permute.xlu0 %2422
      %2424 = vrot.lane.b32.xlu0 %v2371, 64
      %v2425 = vpop.permute.xlu0 %2424
      %2426 = vrot.lane.b32.xlu0 %v2374, 64
      %v2427 = vpop.permute.xlu0 %2426
      %2428 = vrot.lane.b32.xlu0 %v2376, 64
      %v2429 = vpop.permute.xlu0 %2428
      %2430 = vrot.lane.b32.xlu0 %v2379, 64
      %v2431 = vpop.permute.xlu0 %2430
      %2432 = vrot.lane.b32.xlu0 %v2381, 64
      %v2433 = vpop.permute.xlu0 %2432
      %2434 = vrot.lane.b32.xlu0 %v2384, 64
      %v2435 = vpop.permute.xlu0 %2434
      %2436 = vrot.lane.b32.xlu0 %v2386, 64
      %v2437 = vpop.permute.xlu0 %2436
      %2438 = vrot.lane.b32.xlu0 %v2389, 64
      %v2439 = vpop.permute.xlu0 %2438
      %2440 = vrot.lane.b32.xlu0 %v2391, 64
      %v2441 = vpop.permute.xlu0 %2440
      %2442 = vrot.lane.b32.xlu0 %v2394, 64
      %v2443 = vpop.permute.xlu0 %2442
      %2444 = vrot.lane.b32.xlu0 %v2396, 64
      %v2445 = vpop.permute.xlu0 %2444
      %vm2462 = vcmask 785920
      %2463 = vst.msk [vmem:[#allocation2] sm:$0xff] %vm2462, %v2415
      %2464 = vst.msk [vmem:[#allocation2 + $0x8] sm:$0xff] %vm2462, %v2417
      %2465 = vst.msk [vmem:[#allocation2 + $0x10] sm:$0xff] %vm2462, %v2419
      %2466 = vst.msk [vmem:[#allocation2 + $0x18] sm:$0xff] %vm2462, %v2421
      %2467 = vst.msk [vmem:[#allocation2 + $0x20] sm:$0xff] %vm2462, %v2423
      %2468 = vst.msk [vmem:[#allocation2 + $0x28] sm:$0xff] %vm2462, %v2425
      %2469 = vst.msk [vmem:[#allocation2 + $0x30] sm:$0xff] %vm2462, %v2427
      %2470 = vst.msk [vmem:[#allocation2 + $0x38] sm:$0xff] %vm2462, %v2429
      %2471 = vst.msk [vmem:[#allocation2 + $0x40] sm:$0xff] %vm2462, %v2431
      %2472 = vst.msk [vmem:[#allocation2 + $0x48] sm:$0xff] %vm2462, %v2433
      %2473 = vst.msk [vmem:[#allocation2 + $0x50] sm:$0xff] %vm2462, %v2435
      %2474 = vst.msk [vmem:[#allocation2 + $0x58] sm:$0xff] %vm2462, %v2437
      %2475 = vst.msk [vmem:[#allocation2 + $0x60] sm:$0xff] %vm2462, %v2439
      %2476 = vst.msk [vmem:[#allocation2 + $0x68] sm:$0xff] %vm2462, %v2441
      %2477 = vst.msk [vmem:[#allocation2 + $0x70] sm:$0xff] %vm2462, %v2443
      %2478 = vst.msk [vmem:[#allocation2 + $0x78] sm:$0xff] %vm2462, %v2445
      %2479 = vrot.lane.b32.xlu0 %v1150, 32
      %v2480 = vpop.permute.xlu0 %2479
      %2481 = vrot.lane.b32.xlu0 %v1151, 32
      %v2482 = vpop.permute.xlu0 %2481
      %2483 = vrot.lane.b32.xlu0 %v1152, 32
      %v2484 = vpop.permute.xlu0 %2483
      %2485 = vrot.lane.b32.xlu0 %v1153, 32
      %v2486 = vpop.permute.xlu0 %2485
      %2487 = vrot.lane.b32.xlu0 %v1154, 32
      %v2488 = vpop.permute.xlu0 %2487
      %2489 = vrot.lane.b32.xlu0 %v1155, 32
      %v2490 = vpop.permute.xlu0 %2489
      %2491 = vrot.lane.b32.xlu0 %v1156, 32
      %v2492 = vpop.permute.xlu0 %2491
      %2493 = vrot.lane.b32.xlu0 %v1157, 32
      %v2494 = vpop.permute.xlu0 %2493
      %2495 = vrot.lane.b32.xlu0 %v1158, 32
      %v2496 = vpop.permute.xlu0 %2495
      %2497 = vrot.lane.b32.xlu0 %v1159, 32
      %v2498 = vpop.permute.xlu0 %2497
      %2499 = vrot.lane.b32.xlu0 %v1160, 32
      %v2500 = vpop.permute.xlu0 %2499
      %2501 = vrot.lane.b32.xlu0 %v1161, 32
      %v2502 = vpop.permute.xlu0 %2501
      %2503 = vrot.lane.b32.xlu0 %v1162, 32
      %v2504 = vpop.permute.xlu0 %2503
      %2505 = vrot.lane.b32.xlu0 %v1163, 32
      %v2506 = vpop.permute.xlu0 %2505
      %2507 = vrot.lane.b32.xlu0 %v1164, 32
      %v2508 = vpop.permute.xlu0 %2507
      %2509 = vrot.lane.b32.xlu0 %v1165, 32
      %v2510 = vpop.permute.xlu0 %2509
      %v2512 = vsel %vm1174, %v2480, 0
      %v2515 = vsel %vm1174, %v2482, 0
      %v2518 = vsel %vm1174, %v2484, 0
      %v2521 = vsel %vm1174, %v2486, 0
      %v2524 = vsel %vm1174, %v2488, 0
      %v2527 = vsel %vm1174, %v2490, 0
      %v2530 = vsel %vm1174, %v2492, 0
      %v2533 = vsel %vm1174, %v2494, 0
      %v2536 = vsel %vm1174, %v2496, 0
      %v2539 = vsel %vm1174, %v2498, 0
      %v2542 = vsel %vm1174, %v2500, 0
      %v2545 = vsel %vm1174, %v2502, 0
      %v2548 = vsel %vm1174, %v2504, 0
      %v2551 = vsel %vm1174, %v2506, 0
      %v2554 = vsel %vm1174, %v2508, 0
      %v2557 = vsel %vm1174, %v2510, 0
      %2559 = vmatpush.bf16.xpose.msra.mxu0 %v2557
      %2560 = vmatpush.bf16.xpose.msra.mxu0 %v2554
      %2561 = vmatpush.bf16.xpose.msra.mxu0 %v2551
      %2562 = vmatpush.bf16.xpose.msra.mxu0 %v2548
      %2563 = vmatpush.bf16.xpose.msra.mxu0 %v2545
      %2564 = vmatpush.bf16.xpose.msra.mxu0 %v2542
      %2565 = vmatpush.bf16.xpose.msra.mxu0 %v2539
      %2566 = vmatpush.bf16.xpose.msra.mxu0 %v2536
      %2567 = vmatmul.bf16.gmra.mxu0 %v2512
      %v2568 = vpop.f32.mrf.mxu0
      %v2569 = vadd.f32 0.0, %v2568
      %v2570 = vpop.f32.mrf.mxu0
      %v2571 = vadd.f32 0.0, %v2570
      %2572 = vmatmul.bf16.gmra.mxu0 %v2515
      %v2573 = vpop.f32.mrf.mxu0
      %v2574 = vadd.f32 0.0, %v2573
      %v2575 = vpop.f32.mrf.mxu0
      %v2576 = vadd.f32 0.0, %v2575
      %2577 = vmatmul.bf16.gmra.mxu0 %v2518
      %v2578 = vpop.f32.mrf.mxu0
      %v2579 = vadd.f32 0.0, %v2578
      %v2580 = vpop.f32.mrf.mxu0
      %v2581 = vadd.f32 0.0, %v2580
      %2582 = vmatmul.bf16.gmra.mxu0 %v2521
      %v2583 = vpop.f32.mrf.mxu0
      %v2584 = vadd.f32 0.0, %v2583
      %v2585 = vpop.f32.mrf.mxu0
      %v2586 = vadd.f32 0.0, %v2585
      %2587 = vmatmul.bf16.gmra.mxu0 %v2524
      %v2588 = vpop.f32.mrf.mxu0
      %v2589 = vadd.f32 0.0, %v2588
      %v2590 = vpop.f32.mrf.mxu0
      %v2591 = vadd.f32 0.0, %v2590
      %2592 = vmatmul.bf16.gmra.mxu0 %v2527
      %v2593 = vpop.f32.mrf.mxu0
      %v2594 = vadd.f32 0.0, %v2593
      %v2595 = vpop.f32.mrf.mxu0
      %v2596 = vadd.f32 0.0, %v2595
      %2597 = vmatmul.bf16.gmra.mxu0 %v2530
      %v2598 = vpop.f32.mrf.mxu0
      %v2599 = vadd.f32 0.0, %v2598
      %v2600 = vpop.f32.mrf.mxu0
      %v2601 = vadd.f32 0.0, %v2600
      %2602 = vmatmul.bf16.gmra.mxu0 %v2533
      %v2603 = vpop.f32.mrf.mxu0
      %v2604 = vadd.f32 0.0, %v2603
      %v2605 = vpop.f32.mrf.mxu0
      %v2606 = vadd.f32 0.0, %v2605
      %2607 = vdwg.mxu0
      %v2608 = vmul.f32 %v2569, 0.17677669
      %v2609 = vmul.f32 %v2571, 0.17677669
      %v2610 = vmul.f32 %v2574, 0.17677669
      %v2611 = vmul.f32 %v2576, 0.17677669
      %v2612 = vmul.f32 %v2579, 0.17677669
      %v2613 = vmul.f32 %v2581, 0.17677669
      %v2614 = vmul.f32 %v2584, 0.17677669
      %v2615 = vmul.f32 %v2586, 0.17677669
      %v2616 = vmul.f32 %v2589, 0.17677669
      %v2617 = vmul.f32 %v2591, 0.17677669
      %v2618 = vmul.f32 %v2594, 0.17677669
      %v2619 = vmul.f32 %v2596, 0.17677669
      %v2620 = vmul.f32 %v2599, 0.17677669
      %v2621 = vmul.f32 %v2601, 0.17677669
      %v2622 = vmul.f32 %v2604, 0.17677669
      %v2623 = vmul.f32 %v2606, 0.17677669
      %v2624 = vsel %vm1149, %v2608, -1e+30
      %v2625 = vsel %vm1149, %v2609, -1e+30
      %v2626 = vsel %vm1149, %v2610, -1e+30
      %v2627 = vsel %vm1149, %v2611, -1e+30
      %v2628 = vsel %vm1149, %v2612, -1e+30
      %v2629 = vsel %vm1149, %v2613, -1e+30
      %v2630 = vsel %vm1149, %v2614, -1e+30
      %v2631 = vsel %vm1149, %v2615, -1e+30
      %v2632 = vsel %vm1149, %v2616, -1e+30
      %v2633 = vsel %vm1149, %v2617, -1e+30
      %v2634 = vsel %vm1149, %v2618, -1e+30
      %v2635 = vsel %vm1149, %v2619, -1e+30
      %v2636 = vsel %vm1149, %v2620, -1e+30
      %v2637 = vsel %vm1149, %v2621, -1e+30
      %v2638 = vsel %vm1149, %v2622, -1e+30
      %v2639 = vsel %vm1149, %v2623, -1e+30
      %2640 = vmax.xlane.f32.xlu0 %v2624
      %v2641 = vpop.xlane.xlu0 %2640
      %2642 = vmax.xlane.f32.xlu0 %v2625
      %v2643 = vpop.xlane.xlu0 %2642
      %2644 = vmax.xlane.f32.xlu0 %v2626
      %v2645 = vpop.xlane.xlu0 %2644
      %2646 = vmax.xlane.f32.xlu0 %v2627
      %v2647 = vpop.xlane.xlu0 %2646
      %2648 = vmax.xlane.f32.xlu0 %v2628
      %v2649 = vpop.xlane.xlu0 %2648
      %2650 = vmax.xlane.f32.xlu0 %v2629
      %v2651 = vpop.xlane.xlu0 %2650
      %2652 = vmax.xlane.f32.xlu0 %v2630
      %v2653 = vpop.xlane.xlu0 %2652
      %2654 = vmax.xlane.f32.xlu0 %v2631
      %v2655 = vpop.xlane.xlu0 %2654
      %2656 = vmax.xlane.f32.xlu0 %v2632
      %v2657 = vpop.xlane.xlu0 %2656
      %2658 = vmax.xlane.f32.xlu0 %v2633
      %v2659 = vpop.xlane.xlu0 %2658
      %2660 = vmax.xlane.f32.xlu0 %v2634
      %v2661 = vpop.xlane.xlu0 %2660
      %2662 = vmax.xlane.f32.xlu0 %v2635
      %v2663 = vpop.xlane.xlu0 %2662
      %2664 = vmax.xlane.f32.xlu0 %v2636
      %v2665 = vpop.xlane.xlu0 %2664
      %2666 = vmax.xlane.f32.xlu0 %v2637
      %v2667 = vpop.xlane.xlu0 %2666
      %2668 = vmax.xlane.f32.xlu0 %v2638
      %v2669 = vpop.xlane.xlu0 %2668
      %2670 = vmax.xlane.f32.xlu0 %v2639
      %v2671 = vpop.xlane.xlu0 %2670
      %v2672 = vsub.f32 %v2624, %v2641
      %v2673 = vsub.f32 %v2625, %v2643
      %v2674 = vsub.f32 %v2626, %v2645
      %v2675 = vsub.f32 %v2627, %v2647
      %v2676 = vsub.f32 %v2628, %v2649
      %v2677 = vsub.f32 %v2629, %v2651
      %v2678 = vsub.f32 %v2630, %v2653
      %v2679 = vsub.f32 %v2631, %v2655
      %v2680 = vsub.f32 %v2632, %v2657
      %v2681 = vsub.f32 %v2633, %v2659
      %v2682 = vsub.f32 %v2634, %v2661
      %v2683 = vsub.f32 %v2635, %v2663
      %v2684 = vsub.f32 %v2636, %v2665
      %v2685 = vsub.f32 %v2637, %v2667
      %v2686 = vsub.f32 %v2638, %v2669
      %v2687 = vsub.f32 %v2639, %v2671
      %v2688 = vmul.f32 %v2672, 1.442695
      %v2689 = vpow.pop %v2688
      %v2690 = vmul.f32 %v2673, 1.442695
      %v2691 = vpow.pop %v2690
      %v2692 = vmul.f32 %v2674, 1.442695
      %v2693 = vpow.pop %v2692
      %v2694 = vmul.f32 %v2675, 1.442695
      %v2695 = vpow.pop %v2694
      %v2696 = vmul.f32 %v2676, 1.442695
      %v2697 = vpow.pop %v2696
      %v2698 = vmul.f32 %v2677, 1.442695
      %v2699 = vpow.pop %v2698
      %v2700 = vmul.f32 %v2678, 1.442695
      %v2701 = vpow.pop %v2700
      %v2702 = vmul.f32 %v2679, 1.442695
      %v2703 = vpow.pop %v2702
      %v2704 = vmul.f32 %v2680, 1.442695
      %v2705 = vpow.pop %v2704
      %v2706 = vmul.f32 %v2681, 1.442695
      %v2707 = vpow.pop %v2706
      %v2708 = vmul.f32 %v2682, 1.442695
      %v2709 = vpow.pop %v2708
      %v2710 = vmul.f32 %v2683, 1.442695
      %v2711 = vpow.pop %v2710
      %v2712 = vmul.f32 %v2684, 1.442695
      %v2713 = vpow.pop %v2712
      %v2714 = vmul.f32 %v2685, 1.442695
      %v2715 = vpow.pop %v2714
      %v2716 = vmul.f32 %v2686, 1.442695
      %v2717 = vpow.pop %v2716
      %v2718 = vmul.f32 %v2687, 1.442695
      %v2719 = vpow.pop %v2718
      %2720 = vadd.xlane.f32.xlu0 %v2689
      %v2721 = vpop.xlane.xlu0 %2720
      %2722 = vadd.xlane.f32.xlu0 %v2691
      %v2723 = vpop.xlane.xlu0 %2722
      %2724 = vadd.xlane.f32.xlu0 %v2693
      %v2725 = vpop.xlane.xlu0 %2724
      %2726 = vadd.xlane.f32.xlu0 %v2695
      %v2727 = vpop.xlane.xlu0 %2726
      %2728 = vadd.xlane.f32.xlu0 %v2697
      %v2729 = vpop.xlane.xlu0 %2728
      %2730 = vadd.xlane.f32.xlu0 %v2699
      %v2731 = vpop.xlane.xlu0 %2730
      %2732 = vadd.xlane.f32.xlu0 %v2701
      %v2733 = vpop.xlane.xlu0 %2732
      %2734 = vadd.xlane.f32.xlu0 %v2703
      %v2735 = vpop.xlane.xlu0 %2734
      %2736 = vadd.xlane.f32.xlu0 %v2705
      %v2737 = vpop.xlane.xlu0 %2736
      %2738 = vadd.xlane.f32.xlu0 %v2707
      %v2739 = vpop.xlane.xlu0 %2738
      %2740 = vadd.xlane.f32.xlu0 %v2709
      %v2741 = vpop.xlane.xlu0 %2740
      %2742 = vadd.xlane.f32.xlu0 %v2711
      %v2743 = vpop.xlane.xlu0 %2742
      %2744 = vadd.xlane.f32.xlu0 %v2713
      %v2745 = vpop.xlane.xlu0 %2744
      %2746 = vadd.xlane.f32.xlu0 %v2715
      %v2747 = vpop.xlane.xlu0 %2746
      %2748 = vadd.xlane.f32.xlu0 %v2717
      %v2749 = vpop.xlane.xlu0 %2748
      %2750 = vadd.xlane.f32.xlu0 %v2719
      %v2751 = vpop.xlane.xlu0 %2750
      %v2752 = vrcp.pop %v2721
      %v2753 = vrcp.pop %v2723
      %v2754 = vrcp.pop %v2725
      %v2755 = vrcp.pop %v2727
      %v2756 = vrcp.pop %v2729
      %v2757 = vrcp.pop %v2731
      %v2758 = vrcp.pop %v2733
      %v2759 = vrcp.pop %v2735
      %v2760 = vrcp.pop %v2737
      %v2761 = vrcp.pop %v2739
      %v2762 = vrcp.pop %v2741
      %v2763 = vrcp.pop %v2743
      %v2764 = vrcp.pop %v2745
      %v2765 = vrcp.pop %v2747
      %v2766 = vrcp.pop %v2749
      %v2767 = vrcp.pop %v2751
      %v2768 = vmul.f32 %v2689, %v2752
      %v2769 = vmul.f32 %v2691, %v2753
      %v2770 = vmul.f32 %v2693, %v2754
      %v2771 = vmul.f32 %v2695, %v2755
      %v2772 = vmul.f32 %v2697, %v2756
      %v2773 = vmul.f32 %v2699, %v2757
      %v2774 = vmul.f32 %v2701, %v2758
      %v2775 = vmul.f32 %v2703, %v2759
      %v2776 = vmul.f32 %v2705, %v2760
      %v2777 = vmul.f32 %v2707, %v2761
      %v2778 = vmul.f32 %v2709, %v2762
      %v2779 = vmul.f32 %v2711, %v2763
      %v2780 = vmul.f32 %v2713, %v2764
      %v2781 = vmul.f32 %v2715, %v2765
      %v2782 = vmul.f32 %v2717, %v2766
      %v2783 = vmul.f32 %v2719, %v2767
      %v2784 = vpack.c.bf16 %v2769, %v2768
      %v2785 = vpack.c.bf16 %v2771, %v2770
      %v2786 = vpack.c.bf16 %v2773, %v2772
      %v2787 = vpack.c.bf16 %v2775, %v2774
      %v2788 = vpack.c.bf16 %v2777, %v2776
      %v2789 = vpack.c.bf16 %v2779, %v2778
      %v2790 = vpack.c.bf16 %v2781, %v2780
      %v2791 = vpack.c.bf16 %v2783, %v2782
      %2792 = vrot.lane.b32.xlu0 %v1166, 32
      %v2793 = vpop.permute.xlu0 %2792
      %2794 = vrot.lane.b32.xlu0 %v1167, 32
      %v2795 = vpop.permute.xlu0 %2794
      %2796 = vrot.lane.b32.xlu0 %v1168, 32
      %v2797 = vpop.permute.xlu0 %2796
      %2798 = vrot.lane.b32.xlu0 %v1169, 32
      %v2799 = vpop.permute.xlu0 %2798
      %2800 = vrot.lane.b32.xlu0 %v1170, 32
      %v2801 = vpop.permute.xlu0 %2800
      %2802 = vrot.lane.b32.xlu0 %v1171, 32
      %v2803 = vpop.permute.xlu0 %2802
      %2804 = vrot.lane.b32.xlu0 %v1172, 32
      %v2805 = vpop.permute.xlu0 %2804
      %2806 = vrot.lane.b32.xlu0 %v1173, 32
      %v2807 = vpop.permute.xlu0 %2806
      %2816 = vmatpush.bf16.msra.mxu0 %v2807
      %2817 = vmatpush.bf16.msra.mxu0 %v2805
      %2818 = vmatpush.bf16.msra.mxu0 %v2803
      %2819 = vmatpush.bf16.msra.mxu0 %v2801
      %2820 = vmatpush.bf16.msra.mxu0 %v2799
      %2821 = vmatpush.bf16.msra.mxu0 %v2797
      %2822 = vmatpush.bf16.msra.mxu0 %v2795
      %2823 = vmatpush.bf16.msra.mxu0 %v2793
      %2824 = vmatmul.bf16.gmra.mxu0 %v2784
      %v2825 = vpop.f32.mrf.mxu0
      %v2826 = vadd.f32 0.0, %v2825
      %v2827 = vpop.f32.mrf.mxu0
      %v2828 = vadd.f32 0.0, %v2827
      %2829 = vmatmul.bf16.gmra.mxu0 %v2785
      %v2830 = vpop.f32.mrf.mxu0
      %v2831 = vadd.f32 0.0, %v2830
      %v2832 = vpop.f32.mrf.mxu0
      %v2833 = vadd.f32 0.0, %v2832
      %2834 = vmatmul.bf16.gmra.mxu0 %v2786
      %v2835 = vpop.f32.mrf.mxu0
      %v2836 = vadd.f32 0.0, %v2835
      %v2837 = vpop.f32.mrf.mxu0
      %v2838 = vadd.f32 0.0, %v2837
      %2839 = vmatmul.bf16.gmra.mxu0 %v2787
      %v2840 = vpop.f32.mrf.mxu0
      %v2841 = vadd.f32 0.0, %v2840
      %v2842 = vpop.f32.mrf.mxu0
      %v2843 = vadd.f32 0.0, %v2842
      %2844 = vmatmul.bf16.gmra.mxu0 %v2788
      %v2845 = vpop.f32.mrf.mxu0
      %v2846 = vadd.f32 0.0, %v2845
      %v2847 = vpop.f32.mrf.mxu0
      %v2848 = vadd.f32 0.0, %v2847
      %2849 = vmatmul.bf16.gmra.mxu0 %v2789
      %v2850 = vpop.f32.mrf.mxu0
      %v2851 = vadd.f32 0.0, %v2850
      %v2852 = vpop.f32.mrf.mxu0
      %v2853 = vadd.f32 0.0, %v2852
      %2854 = vmatmul.bf16.gmra.mxu0 %v2790
      %v2855 = vpop.f32.mrf.mxu0
      %v2856 = vadd.f32 0.0, %v2855
      %v2857 = vpop.f32.mrf.mxu0
      %v2858 = vadd.f32 0.0, %v2857
      %2859 = vmatmul.bf16.gmra.mxu0 %v2791
      %v2860 = vpop.f32.mrf.mxu0
      %v2861 = vadd.f32 0.0, %v2860
      %v2862 = vpop.f32.mrf.mxu0
      %v2863 = vadd.f32 0.0, %v2862
      %2864 = vdwg.mxu0
      %2881 = vrot.lane.b32.xlu0 %v2826, 96
      %v2882 = vpop.permute.xlu0 %2881
      %2883 = vrot.lane.b32.xlu0 %v2828, 96
      %v2884 = vpop.permute.xlu0 %2883
      %2885 = vrot.lane.b32.xlu0 %v2831, 96
      %v2886 = vpop.permute.xlu0 %2885
      %2887 = vrot.lane.b32.xlu0 %v2833, 96
      %v2888 = vpop.permute.xlu0 %2887
      %2889 = vrot.lane.b32.xlu0 %v2836, 96
      %v2890 = vpop.permute.xlu0 %2889
      %2891 = vrot.lane.b32.xlu0 %v2838, 96
      %v2892 = vpop.permute.xlu0 %2891
      %2893 = vrot.lane.b32.xlu0 %v2841, 96
      %v2894 = vpop.permute.xlu0 %2893
      %2895 = vrot.lane.b32.xlu0 %v2843, 96
      %v2896 = vpop.permute.xlu0 %2895
      %2897 = vrot.lane.b32.xlu0 %v2846, 96
      %v2898 = vpop.permute.xlu0 %2897
      %2899 = vrot.lane.b32.xlu0 %v2848, 96
      %v2900 = vpop.permute.xlu0 %2899
      %2901 = vrot.lane.b32.xlu0 %v2851, 96
      %v2902 = vpop.permute.xlu0 %2901
      %2903 = vrot.lane.b32.xlu0 %v2853, 96
      %v2904 = vpop.permute.xlu0 %2903
      %2905 = vrot.lane.b32.xlu0 %v2856, 96
      %v2906 = vpop.permute.xlu0 %2905
      %2907 = vrot.lane.b32.xlu0 %v2858, 96
      %v2908 = vpop.permute.xlu0 %2907
      %2909 = vrot.lane.b32.xlu0 %v2861, 96
      %v2910 = vpop.permute.xlu0 %2909
      %2911 = vrot.lane.b32.xlu0 %v2863, 96
      %v2912 = vpop.permute.xlu0 %2911
      %vm2929 = vcmask 1048320
      %2930 = vst.msk [vmem:[#allocation2] sm:$0xff] %vm2929, %v2882
      %2931 = vst.msk [vmem:[#allocation2 + $0x8] sm:$0xff] %vm2929, %v2884
      %2932 = vst.msk [vmem:[#allocation2 + $0x10] sm:$0xff] %vm2929, %v2886
      %2933 = vst.msk [vmem:[#allocation2 + $0x18] sm:$0xff] %vm2929, %v2888
      %2934 = vst.msk [vmem:[#allocation2 + $0x20] sm:$0xff] %vm2929, %v2890
      %2935 = vst.msk [vmem:[#allocation2 + $0x28] sm:$0xff] %vm2929, %v2892
      %2936 = vst.msk [vmem:[#allocation2 + $0x30] sm:$0xff] %vm2929, %v2894
      %2937 = vst.msk [vmem:[#allocation2 + $0x38] sm:$0xff] %vm2929, %v2896
      %2938 = vst.msk [vmem:[#allocation2 + $0x40] sm:$0xff] %vm2929, %v2898
      %2939 = vst.msk [vmem:[#allocation2 + $0x48] sm:$0xff] %vm2929, %v2900
      %2940 = vst.msk [vmem:[#allocation2 + $0x50] sm:$0xff] %vm2929, %v2902
      %2941 = vst.msk [vmem:[#allocation2 + $0x58] sm:$0xff] %vm2929, %v2904
      %2942 = vst.msk [vmem:[#allocation2 + $0x60] sm:$0xff] %vm2929, %v2906
      %2943 = vst.msk [vmem:[#allocation2 + $0x68] sm:$0xff] %vm2929, %v2908
      %2944 = vst.msk [vmem:[#allocation2 + $0x70] sm:$0xff] %vm2929, %v2910
      %2945 = vst.msk [vmem:[#allocation2 + $0x78] sm:$0xff] %vm2929, %v2912
      %v2946 = vld [vmem:[#allocation2] sm:$0xff]
      %v2947 = vld [vmem:[#allocation2 + $0x8] sm:$0xff]
      %v2948 = vld [vmem:[#allocation2 + $0x10] sm:$0xff]
      %v2949 = vld [vmem:[#allocation2 + $0x18] sm:$0xff]
      %v2950 = vld [vmem:[#allocation2 + $0x20] sm:$0xff]
      %v2951 = vld [vmem:[#allocation2 + $0x28] sm:$0xff]
      %v2952 = vld [vmem:[#allocation2 + $0x30] sm:$0xff]
      %v2953 = vld [vmem:[#allocation2 + $0x38] sm:$0xff]
      %v2954 = vld [vmem:[#allocation2 + $0x40] sm:$0xff]
      %v2955 = vld [vmem:[#allocation2 + $0x48] sm:$0xff]
      %v2956 = vld [vmem:[#allocation2 + $0x50] sm:$0xff]
      %v2957 = vld [vmem:[#allocation2 + $0x58] sm:$0xff]
      %v2958 = vld [vmem:[#allocation2 + $0x60] sm:$0xff]
      %v2959 = vld [vmem:[#allocation2 + $0x68] sm:$0xff]
      %v2960 = vld [vmem:[#allocation2 + $0x70] sm:$0xff]
      %v2961 = vld [vmem:[#allocation2 + $0x78] sm:$0xff]
      %v2962 = vpack.c.bf16 %v2947, %v2946
      %v2963 = vpack.c.bf16 %v2949, %v2948
      %v2964 = vpack.c.bf16 %v2951, %v2950
      %v2965 = vpack.c.bf16 %v2953, %v2952
      %v2966 = vpack.c.bf16 %v2955, %v2954
      %v2967 = vpack.c.bf16 %v2957, %v2956
      %v2968 = vpack.c.bf16 %v2959, %v2958
      %v2969 = vpack.c.bf16 %v2961, %v2960
      %v2970 = vld [vmem:[%s5] sm:$0xf]
      %v2971 = vld [vmem:[%s5 + $0x4] sm:$0xf]
      %v2972 = vld [vmem:[%s5 + $0x8] sm:$0xf]
      %v2973 = vld [vmem:[%s5 + $0xc] sm:$0xf]
      %v2974 = vld [vmem:[%s5 + $0x10] sm:$0xf]
      %v2975 = vld [vmem:[%s5 + $0x14] sm:$0xf]
      %v2976 = vld [vmem:[%s5 + $0x18] sm:$0xf]
      %v2977 = vld [vmem:[%s5 + $0x1c] sm:$0xf]
      %v2978 = vld [vmem:[%s5 + $0x20] sm:$0xf]
      %v2979 = vld [vmem:[%s5 + $0x24] sm:$0xf]
      %v2980 = vld [vmem:[%s5 + $0x28] sm:$0xf]
      %v2981 = vld [vmem:[%s5 + $0x2c] sm:$0xf]
      %v2982 = vld [vmem:[%s5 + $0x30] sm:$0xf]
      %v2983 = vld [vmem:[%s5 + $0x34] sm:$0xf]
      %v2984 = vld [vmem:[%s5 + $0x38] sm:$0xf]
      %v2985 = vld [vmem:[%s5 + $0x3c] sm:$0xf]
      %v3002 = vunpack.c.l.b16 %v2970
      %v3003 = vunpack.c.l.b16 %v2971
      %v3004 = vunpack.c.l.b16 %v2972
      %v3005 = vunpack.c.l.b16 %v2973
      %v3006 = vunpack.c.l.b16 %v2974
      %v3007 = vunpack.c.l.b16 %v2975
      %v3008 = vunpack.c.l.b16 %v2976
      %v3009 = vunpack.c.l.b16 %v2977
      %v3010 = vunpack.c.l.b16 %v2978
      %v3011 = vunpack.c.l.b16 %v2979
      %v3012 = vunpack.c.l.b16 %v2980
      %v3013 = vunpack.c.l.b16 %v2981
      %v3014 = vunpack.c.l.b16 %v2982
      %v3015 = vunpack.c.l.b16 %v2983
      %v3016 = vunpack.c.l.b16 %v2984
      %v3017 = vunpack.c.l.b16 %v2985
      %v3018 = vpack.c.b16 %v3003, %v3002
      %v3019 = vpack.c.b16 %v3005, %v3004
      %v3020 = vpack.c.b16 %v3007, %v3006
      %v3021 = vpack.c.b16 %v3009, %v3008
      %v3022 = vpack.c.b16 %v3011, %v3010
      %v3023 = vpack.c.b16 %v3013, %v3012
      %v3024 = vpack.c.b16 %v3015, %v3014
      %v3025 = vpack.c.b16 %v3017, %v3016
      %3034 = vmatpush.bf16.msra.mxu0 %v3025
      %3035 = vmatpush.bf16.msra.mxu0 %v3024
      %3036 = vmatpush.bf16.msra.mxu0 %v3023
      %3037 = vmatpush.bf16.msra.mxu0 %v3022
      %3038 = vmatpush.bf16.msra.mxu0 %v3021
      %3039 = vmatpush.bf16.msra.mxu0 %v3020
      %3040 = vmatpush.bf16.msra.mxu0 %v3019
      %3041 = vmatpush.bf16.msra.mxu0 %v3018
      %3042 = vmatmul.bf16.gmra.mxu0 %v2962
      %v3043 = vpop.f32.mrf.mxu0
      %v3044 = vadd.f32 0.0, %v3043
      %v3045 = vpop.f32.mrf.mxu0
      %v3046 = vadd.f32 0.0, %v3045
      %3047 = vmatmul.bf16.gmra.mxu0 %v2963
      %v3048 = vpop.f32.mrf.mxu0
      %v3049 = vadd.f32 0.0, %v3048
      %v3050 = vpop.f32.mrf.mxu0
      %v3051 = vadd.f32 0.0, %v3050
      %3052 = vmatmul.bf16.gmra.mxu0 %v2964
      %v3053 = vpop.f32.mrf.mxu0
      %v3054 = vadd.f32 0.0, %v3053
      %v3055 = vpop.f32.mrf.mxu0
      %v3056 = vadd.f32 0.0, %v3055
      %3057 = vmatmul.bf16.gmra.mxu0 %v2965
      %v3058 = vpop.f32.mrf.mxu0
      %v3059 = vadd.f32 0.0, %v3058
      %v3060 = vpop.f32.mrf.mxu0
      %v3061 = vadd.f32 0.0, %v3060
      %3062 = vmatmul.bf16.gmra.mxu0 %v2966
      %v3063 = vpop.f32.mrf.mxu0
      %v3064 = vadd.f32 0.0, %v3063
      %v3065 = vpop.f32.mrf.mxu0
      %v3066 = vadd.f32 0.0, %v3065
      %3067 = vmatmul.bf16.gmra.mxu0 %v2967
      %v3068 = vpop.f32.mrf.mxu0
      %v3069 = vadd.f32 0.0, %v3068
      %v3070 = vpop.f32.mrf.mxu0
      %v3071 = vadd.f32 0.0, %v3070
      %3072 = vmatmul.bf16.gmra.mxu0 %v2968
      %v3073 = vpop.f32.mrf.mxu0
      %v3074 = vadd.f32 0.0, %v3073
      %v3075 = vpop.f32.mrf.mxu0
      %v3076 = vadd.f32 0.0, %v3075
      %3077 = vmatmul.bf16.gmra.mxu0 %v2969
      %v3078 = vpop.f32.mrf.mxu0
      %v3079 = vadd.f32 0.0, %v3078
      %v3080 = vpop.f32.mrf.mxu0
      %v3081 = vadd.f32 0.0, %v3080
      %3082 = vdwg.mxu0
      %v3083 = vadd.f32 %v441, %v3044
      %v3084 = vadd.f32 %v442, %v3046
      %v3085 = vadd.f32 %v443, %v3049
      %v3086 = vadd.f32 %v444, %v3051
      %v3087 = vadd.f32 %v445, %v3054
      %v3088 = vadd.f32 %v446, %v3056
      %v3089 = vadd.f32 %v447, %v3059
      %v3090 = vadd.f32 %v448, %v3061
      %v3091 = vadd.f32 %v449, %v3064
      %v3092 = vadd.f32 %v450, %v3066
      %v3093 = vadd.f32 %v451, %v3069
      %v3094 = vadd.f32 %v452, %v3071
      %v3095 = vadd.f32 %v453, %v3074
      %v3096 = vadd.f32 %v454, %v3076
      %v3097 = vadd.f32 %v455, %v3079
      %v3098 = vadd.f32 %v456, %v3081
      %v3099 = vld [vmem:[%s6] sm:$0x1]
      %v3101 = vperm.slane %v3099, 0
      %v3103 = vadd.f32 %v3083, %v3101
      %v3104 = vadd.f32 %v3084, %v3101
      %v3105 = vadd.f32 %v3085, %v3101
      %v3106 = vadd.f32 %v3086, %v3101
      %v3107 = vadd.f32 %v3087, %v3101
      %v3108 = vadd.f32 %v3088, %v3101
      %v3109 = vadd.f32 %v3089, %v3101
      %v3110 = vadd.f32 %v3090, %v3101
      %v3111 = vadd.f32 %v3091, %v3101
      %v3112 = vadd.f32 %v3092, %v3101
      %v3113 = vadd.f32 %v3093, %v3101
      %v3114 = vadd.f32 %v3094, %v3101
      %v3115 = vadd.f32 %v3095, %v3101
      %v3116 = vadd.f32 %v3096, %v3101
      %v3117 = vadd.f32 %v3097, %v3101
      %v3118 = vadd.f32 %v3098, %v3101
      %v3119 = vld [vmem:[%s7] sm:$0x1]
      %v3120 = vld [vmem:[%s8] sm:$0x1]
      %3121 = vadd.xlane.f32.xlu0 %v3103
      %v3122 = vpop.xlane.xlu0 %3121
      %3123 = vadd.xlane.f32.xlu0 %v3104
      %v3124 = vpop.xlane.xlu0 %3123
      %3125 = vadd.xlane.f32.xlu0 %v3105
      %v3126 = vpop.xlane.xlu0 %3125
      %3127 = vadd.xlane.f32.xlu0 %v3106
      %v3128 = vpop.xlane.xlu0 %3127
      %3129 = vadd.xlane.f32.xlu0 %v3107
      %v3130 = vpop.xlane.xlu0 %3129
      %3131 = vadd.xlane.f32.xlu0 %v3108
      %v3132 = vpop.xlane.xlu0 %3131
      %3133 = vadd.xlane.f32.xlu0 %v3109
      %v3134 = vpop.xlane.xlu0 %3133
      %3135 = vadd.xlane.f32.xlu0 %v3110
      %v3136 = vpop.xlane.xlu0 %3135
      %3137 = vadd.xlane.f32.xlu0 %v3111
      %v3138 = vpop.xlane.xlu0 %3137
      %3139 = vadd.xlane.f32.xlu0 %v3112
      %v3140 = vpop.xlane.xlu0 %3139
      %3141 = vadd.xlane.f32.xlu0 %v3113
      %v3142 = vpop.xlane.xlu0 %3141
      %3143 = vadd.xlane.f32.xlu0 %v3114
      %v3144 = vpop.xlane.xlu0 %3143
      %3145 = vadd.xlane.f32.xlu0 %v3115
      %v3146 = vpop.xlane.xlu0 %3145
      %3147 = vadd.xlane.f32.xlu0 %v3116
      %v3148 = vpop.xlane.xlu0 %3147
      %3149 = vadd.xlane.f32.xlu0 %v3117
      %v3150 = vpop.xlane.xlu0 %3149
      %3151 = vadd.xlane.f32.xlu0 %v3118
      %v3152 = vpop.xlane.xlu0 %3151
      %v3153 = vmul.f32 %v3122, %v497
      %v3154 = vmul.f32 %v3124, %v497
      %v3155 = vmul.f32 %v3126, %v497
      %v3156 = vmul.f32 %v3128, %v497
      %v3157 = vmul.f32 %v3130, %v497
      %v3158 = vmul.f32 %v3132, %v497
      %v3159 = vmul.f32 %v3134, %v497
      %v3160 = vmul.f32 %v3136, %v497
      %v3161 = vmul.f32 %v3138, %v497
      %v3162 = vmul.f32 %v3140, %v497
      %v3163 = vmul.f32 %v3142, %v497
      %v3164 = vmul.f32 %v3144, %v497
      %v3165 = vmul.f32 %v3146, %v497
      %v3166 = vmul.f32 %v3148, %v497
      %v3167 = vmul.f32 %v3150, %v497
      %v3168 = vmul.f32 %v3152, %v497
      %v3169 = vsub.f32 %v3103, %v3153
      %v3170 = vsub.f32 %v3104, %v3154
      %v3171 = vsub.f32 %v3105, %v3155
      %v3172 = vsub.f32 %v3106, %v3156
      %v3173 = vsub.f32 %v3107, %v3157
      %v3174 = vsub.f32 %v3108, %v3158
      %v3175 = vsub.f32 %v3109, %v3159
      %v3176 = vsub.f32 %v3110, %v3160
      %v3177 = vsub.f32 %v3111, %v3161
      %v3178 = vsub.f32 %v3112, %v3162
      %v3179 = vsub.f32 %v3113, %v3163
      %v3180 = vsub.f32 %v3114, %v3164
      %v3181 = vsub.f32 %v3115, %v3165
      %v3182 = vsub.f32 %v3116, %v3166
      %v3183 = vsub.f32 %v3117, %v3167
      %v3184 = vsub.f32 %v3118, %v3168
      %v3185 = vmul.f32 %v3169, %v3169
      %v3186 = vmul.f32 %v3170, %v3170
      %v3187 = vmul.f32 %v3171, %v3171
      %v3188 = vmul.f32 %v3172, %v3172
      %v3189 = vmul.f32 %v3173, %v3173
      %v3190 = vmul.f32 %v3174, %v3174
      %v3191 = vmul.f32 %v3175, %v3175
      %v3192 = vmul.f32 %v3176, %v3176
      %v3193 = vmul.f32 %v3177, %v3177
      %v3194 = vmul.f32 %v3178, %v3178
      %v3195 = vmul.f32 %v3179, %v3179
      %v3196 = vmul.f32 %v3180, %v3180
      %v3197 = vmul.f32 %v3181, %v3181
      %v3198 = vmul.f32 %v3182, %v3182
      %v3199 = vmul.f32 %v3183, %v3183
      %v3200 = vmul.f32 %v3184, %v3184
      %3201 = vadd.xlane.f32.xlu0 %v3185
      %v3202 = vpop.xlane.xlu0 %3201
      %3203 = vadd.xlane.f32.xlu0 %v3186
      %v3204 = vpop.xlane.xlu0 %3203
      %3205 = vadd.xlane.f32.xlu0 %v3187
      %v3206 = vpop.xlane.xlu0 %3205
      %3207 = vadd.xlane.f32.xlu0 %v3188
      %v3208 = vpop.xlane.xlu0 %3207
      %3209 = vadd.xlane.f32.xlu0 %v3189
      %v3210 = vpop.xlane.xlu0 %3209
      %3211 = vadd.xlane.f32.xlu0 %v3190
      %v3212 = vpop.xlane.xlu0 %3211
      %3213 = vadd.xlane.f32.xlu0 %v3191
      %v3214 = vpop.xlane.xlu0 %3213
      %3215 = vadd.xlane.f32.xlu0 %v3192
      %v3216 = vpop.xlane.xlu0 %3215
      %3217 = vadd.xlane.f32.xlu0 %v3193
      %v3218 = vpop.xlane.xlu0 %3217
      %3219 = vadd.xlane.f32.xlu0 %v3194
      %v3220 = vpop.xlane.xlu0 %3219
      %3221 = vadd.xlane.f32.xlu0 %v3195
      %v3222 = vpop.xlane.xlu0 %3221
      %3223 = vadd.xlane.f32.xlu0 %v3196
      %v3224 = vpop.xlane.xlu0 %3223
      %3225 = vadd.xlane.f32.xlu0 %v3197
      %v3226 = vpop.xlane.xlu0 %3225
      %3227 = vadd.xlane.f32.xlu0 %v3198
      %v3228 = vpop.xlane.xlu0 %3227
      %3229 = vadd.xlane.f32.xlu0 %v3199
      %v3230 = vpop.xlane.xlu0 %3229
      %3231 = vadd.xlane.f32.xlu0 %v3200
      %v3232 = vpop.xlane.xlu0 %3231
      %v3233 = vmul.f32 %v3202, %v497
      %v3234 = vmul.f32 %v3204, %v497
      %v3235 = vmul.f32 %v3206, %v497
      %v3236 = vmul.f32 %v3208, %v497
      %v3237 = vmul.f32 %v3210, %v497
      %v3238 = vmul.f32 %v3212, %v497
      %v3239 = vmul.f32 %v3214, %v497
      %v3240 = vmul.f32 %v3216, %v497
      %v3241 = vmul.f32 %v3218, %v497
      %v3242 = vmul.f32 %v3220, %v497
      %v3243 = vmul.f32 %v3222, %v497
      %v3244 = vmul.f32 %v3224, %v497
      %v3245 = vmul.f32 %v3226, %v497
      %v3246 = vmul.f32 %v3228, %v497
      %v3247 = vmul.f32 %v3230, %v497
      %v3248 = vmul.f32 %v3232, %v497
      %v3249 = vadd.f32 %v3233, 1e-06
      %v3250 = vadd.f32 %v3234, 1e-06
      %v3251 = vadd.f32 %v3235, 1e-06
      %v3252 = vadd.f32 %v3236, 1e-06
      %v3253 = vadd.f32 %v3237, 1e-06
      %v3254 = vadd.f32 %v3238, 1e-06
      %v3255 = vadd.f32 %v3239, 1e-06
      %v3256 = vadd.f32 %v3240, 1e-06
      %v3257 = vadd.f32 %v3241, 1e-06
      %v3258 = vadd.f32 %v3242, 1e-06
      %v3259 = vadd.f32 %v3243, 1e-06
      %v3260 = vadd.f32 %v3244, 1e-06
      %v3261 = vadd.f32 %v3245, 1e-06
      %v3262 = vadd.f32 %v3246, 1e-06
      %v3263 = vadd.f32 %v3247, 1e-06
      %v3264 = vadd.f32 %v3248, 1e-06
      %v3265 = vrsqrt.pop %v3249
      %v3266 = vmul.f32 %v3265, %v3249
      %v3267 = vmul.f32 %v3266, %v3265
      %v3268 = vmul.f32 0.5, %v3267
      %v3269 = vsub.f32 1.5, %v3268
      %v3270 = vmul.f32 %v3265, %v3269
      %vm3271 = vweird.f32 %v3249
      %vm3272 = vweird.f32 %v3265
      %vm3273 = vmor %vm3271, %vm3272
      %v3274 = vsel %vm3273, %v3265, %v3270
      %v3275 = vrsqrt.pop %v3250
      %v3276 = vmul.f32 %v3275, %v3250
      %v3277 = vmul.f32 %v3276, %v3275
      %v3278 = vmul.f32 0.5, %v3277
      %v3279 = vsub.f32 1.5, %v3278
      %v3280 = vmul.f32 %v3275, %v3279
      %vm3281 = vweird.f32 %v3250
      %vm3282 = vweird.f32 %v3275
      %vm3283 = vmor %vm3281, %vm3282
      %v3284 = vsel %vm3283, %v3275, %v3280
      %v3285 = vrsqrt.pop %v3251
      %v3286 = vmul.f32 %v3285, %v3251
      %v3287 = vmul.f32 %v3286, %v3285
      %v3288 = vmul.f32 0.5, %v3287
      %v3289 = vsub.f32 1.5, %v3288
      %v3290 = vmul.f32 %v3285, %v3289
      %vm3291 = vweird.f32 %v3251
      %vm3292 = vweird.f32 %v3285
      %vm3293 = vmor %vm3291, %vm3292
      %v3294 = vsel %vm3293, %v3285, %v3290
      %v3295 = vrsqrt.pop %v3252
      %v3296 = vmul.f32 %v3295, %v3252
      %v3297 = vmul.f32 %v3296, %v3295
      %v3298 = vmul.f32 0.5, %v3297
      %v3299 = vsub.f32 1.5, %v3298
      %v3300 = vmul.f32 %v3295, %v3299
      %vm3301 = vweird.f32 %v3252
      %vm3302 = vweird.f32 %v3295
      %vm3303 = vmor %vm3301, %vm3302
      %v3304 = vsel %vm3303, %v3295, %v3300
      %v3305 = vrsqrt.pop %v3253
      %v3306 = vmul.f32 %v3305, %v3253
      %v3307 = vmul.f32 %v3306, %v3305
      %v3308 = vmul.f32 0.5, %v3307
      %v3309 = vsub.f32 1.5, %v3308
      %v3310 = vmul.f32 %v3305, %v3309
      %vm3311 = vweird.f32 %v3253
      %vm3312 = vweird.f32 %v3305
      %vm3313 = vmor %vm3311, %vm3312
      %v3314 = vsel %vm3313, %v3305, %v3310
      %v3315 = vrsqrt.pop %v3254
      %v3316 = vmul.f32 %v3315, %v3254
      %v3317 = vmul.f32 %v3316, %v3315
      %v3318 = vmul.f32 0.5, %v3317
      %v3319 = vsub.f32 1.5, %v3318
      %v3320 = vmul.f32 %v3315, %v3319
      %vm3321 = vweird.f32 %v3254
      %vm3322 = vweird.f32 %v3315
      %vm3323 = vmor %vm3321, %vm3322
      %v3324 = vsel %vm3323, %v3315, %v3320
      %v3325 = vrsqrt.pop %v3255
      %v3326 = vmul.f32 %v3325, %v3255
      %v3327 = vmul.f32 %v3326, %v3325
      %v3328 = vmul.f32 0.5, %v3327
      %v3329 = vsub.f32 1.5, %v3328
      %v3330 = vmul.f32 %v3325, %v3329
      %vm3331 = vweird.f32 %v3255
      %vm3332 = vweird.f32 %v3325
      %vm3333 = vmor %vm3331, %vm3332
      %v3334 = vsel %vm3333, %v3325, %v3330
      %v3335 = vrsqrt.pop %v3256
      %v3336 = vmul.f32 %v3335, %v3256
      %v3337 = vmul.f32 %v3336, %v3335
      %v3338 = vmul.f32 0.5, %v3337
      %v3339 = vsub.f32 1.5, %v3338
      %v3340 = vmul.f32 %v3335, %v3339
      %vm3341 = vweird.f32 %v3256
      %vm3342 = vweird.f32 %v3335
      %vm3343 = vmor %vm3341, %vm3342
      %v3344 = vsel %vm3343, %v3335, %v3340
      %v3345 = vrsqrt.pop %v3257
      %v3346 = vmul.f32 %v3345, %v3257
      %v3347 = vmul.f32 %v3346, %v3345
      %v3348 = vmul.f32 0.5, %v3347
      %v3349 = vsub.f32 1.5, %v3348
      %v3350 = vmul.f32 %v3345, %v3349
      %vm3351 = vweird.f32 %v3257
      %vm3352 = vweird.f32 %v3345
      %vm3353 = vmor %vm3351, %vm3352
      %v3354 = vsel %vm3353, %v3345, %v3350
      %v3355 = vrsqrt.pop %v3258
      %v3356 = vmul.f32 %v3355, %v3258
      %v3357 = vmul.f32 %v3356, %v3355
      %v3358 = vmul.f32 0.5, %v3357
      %v3359 = vsub.f32 1.5, %v3358
      %v3360 = vmul.f32 %v3355, %v3359
      %vm3361 = vweird.f32 %v3258
      %vm3362 = vweird.f32 %v3355
      %vm3363 = vmor %vm3361, %vm3362
      %v3364 = vsel %vm3363, %v3355, %v3360
      %v3365 = vrsqrt.pop %v3259
      %v3366 = vmul.f32 %v3365, %v3259
      %v3367 = vmul.f32 %v3366, %v3365
      %v3368 = vmul.f32 0.5, %v3367
      %v3369 = vsub.f32 1.5, %v3368
      %v3370 = vmul.f32 %v3365, %v3369
      %vm3371 = vweird.f32 %v3259
      %vm3372 = vweird.f32 %v3365
      %vm3373 = vmor %vm3371, %vm3372
      %v3374 = vsel %vm3373, %v3365, %v3370
      %v3375 = vrsqrt.pop %v3260
      %v3376 = vmul.f32 %v3375, %v3260
      %v3377 = vmul.f32 %v3376, %v3375
      %v3378 = vmul.f32 0.5, %v3377
      %v3379 = vsub.f32 1.5, %v3378
      %v3380 = vmul.f32 %v3375, %v3379
      %vm3381 = vweird.f32 %v3260
      %vm3382 = vweird.f32 %v3375
      %vm3383 = vmor %vm3381, %vm3382
      %v3384 = vsel %vm3383, %v3375, %v3380
      %v3385 = vrsqrt.pop %v3261
      %v3386 = vmul.f32 %v3385, %v3261
      %v3387 = vmul.f32 %v3386, %v3385
      %v3388 = vmul.f32 0.5, %v3387
      %v3389 = vsub.f32 1.5, %v3388
      %v3390 = vmul.f32 %v3385, %v3389
      %vm3391 = vweird.f32 %v3261
      %vm3392 = vweird.f32 %v3385
      %vm3393 = vmor %vm3391, %vm3392
      %v3394 = vsel %vm3393, %v3385, %v3390
      %v3395 = vrsqrt.pop %v3262
      %v3396 = vmul.f32 %v3395, %v3262
      %v3397 = vmul.f32 %v3396, %v3395
      %v3398 = vmul.f32 0.5, %v3397
      %v3399 = vsub.f32 1.5, %v3398
      %v3400 = vmul.f32 %v3395, %v3399
      %vm3401 = vweird.f32 %v3262
      %vm3402 = vweird.f32 %v3395
      %vm3403 = vmor %vm3401, %vm3402
      %v3404 = vsel %vm3403, %v3395, %v3400
      %v3405 = vrsqrt.pop %v3263
      %v3406 = vmul.f32 %v3405, %v3263
      %v3407 = vmul.f32 %v3406, %v3405
      %v3408 = vmul.f32 0.5, %v3407
      %v3409 = vsub.f32 1.5, %v3408
      %v3410 = vmul.f32 %v3405, %v3409
      %vm3411 = vweird.f32 %v3263
      %vm3412 = vweird.f32 %v3405
      %vm3413 = vmor %vm3411, %vm3412
      %v3414 = vsel %vm3413, %v3405, %v3410
      %v3415 = vrsqrt.pop %v3264
      %v3416 = vmul.f32 %v3415, %v3264
      %v3417 = vmul.f32 %v3416, %v3415
      %v3418 = vmul.f32 0.5, %v3417
      %v3419 = vsub.f32 1.5, %v3418
      %v3420 = vmul.f32 %v3415, %v3419
      %vm3421 = vweird.f32 %v3264
      %vm3422 = vweird.f32 %v3415
      %vm3423 = vmor %vm3421, %vm3422
      %v3424 = vsel %vm3423, %v3415, %v3420
      %v3425 = vmul.f32 %v3169, %v3274
      %v3426 = vmul.f32 %v3170, %v3284
      %v3427 = vmul.f32 %v3171, %v3294
      %v3428 = vmul.f32 %v3172, %v3304
      %v3429 = vmul.f32 %v3173, %v3314
      %v3430 = vmul.f32 %v3174, %v3324
      %v3431 = vmul.f32 %v3175, %v3334
      %v3432 = vmul.f32 %v3176, %v3344
      %v3433 = vmul.f32 %v3177, %v3354
      %v3434 = vmul.f32 %v3178, %v3364
      %v3435 = vmul.f32 %v3179, %v3374
      %v3436 = vmul.f32 %v3180, %v3384
      %v3437 = vmul.f32 %v3181, %v3394
      %v3438 = vmul.f32 %v3182, %v3404
      %v3439 = vmul.f32 %v3183, %v3414
      %v3440 = vmul.f32 %v3184, %v3424
      %v3442 = vperm.slane %v3119, 0
      %v3444 = vmul.f32 %v3425, %v3442
      %v3445 = vmul.f32 %v3426, %v3442
      %v3446 = vmul.f32 %v3427, %v3442
      %v3447 = vmul.f32 %v3428, %v3442
      %v3448 = vmul.f32 %v3429, %v3442
      %v3449 = vmul.f32 %v3430, %v3442
      %v3450 = vmul.f32 %v3431, %v3442
      %v3451 = vmul.f32 %v3432, %v3442
      %v3452 = vmul.f32 %v3433, %v3442
      %v3453 = vmul.f32 %v3434, %v3442
      %v3454 = vmul.f32 %v3435, %v3442
      %v3455 = vmul.f32 %v3436, %v3442
      %v3456 = vmul.f32 %v3437, %v3442
      %v3457 = vmul.f32 %v3438, %v3442
      %v3458 = vmul.f32 %v3439, %v3442
      %v3459 = vmul.f32 %v3440, %v3442
      %v3461 = vperm.slane %v3120, 0
      %v3463 = vadd.f32 %v3444, %v3461
      %v3464 = vadd.f32 %v3445, %v3461
      %v3465 = vadd.f32 %v3446, %v3461
      %v3466 = vadd.f32 %v3447, %v3461
      %v3467 = vadd.f32 %v3448, %v3461
      %v3468 = vadd.f32 %v3449, %v3461
      %v3469 = vadd.f32 %v3450, %v3461
      %v3470 = vadd.f32 %v3451, %v3461
      %v3471 = vadd.f32 %v3452, %v3461
      %v3472 = vadd.f32 %v3453, %v3461
      %v3473 = vadd.f32 %v3454, %v3461
      %v3474 = vadd.f32 %v3455, %v3461
      %v3475 = vadd.f32 %v3456, %v3461
      %v3476 = vadd.f32 %v3457, %v3461
      %v3477 = vadd.f32 %v3458, %v3461
      %v3478 = vadd.f32 %v3459, %v3461
      %v3479 = vpack.c.bf16 %v3464, %v3463
      %v3480 = vpack.c.bf16 %v3466, %v3465
      %v3481 = vpack.c.bf16 %v3468, %v3467
      %v3482 = vpack.c.bf16 %v3470, %v3469
      %v3483 = vpack.c.bf16 %v3472, %v3471
      %v3484 = vpack.c.bf16 %v3474, %v3473
      %v3485 = vpack.c.bf16 %v3476, %v3475
      %v3486 = vpack.c.bf16 %v3478, %v3477
      %v3487 = vld [vmem:[%s9] sm:$0xff]
      %v3488 = vld [vmem:[%s9 + $0x8] sm:$0xff]
      %v3489 = vld [vmem:[%s9 + $0x10] sm:$0xff]
      %v3490 = vld [vmem:[%s9 + $0x18] sm:$0xff]
      %v3491 = vld [vmem:[%s9 + $0x20] sm:$0xff]
      %v3492 = vld [vmem:[%s9 + $0x28] sm:$0xff]
      %v3493 = vld [vmem:[%s9 + $0x30] sm:$0xff]
      %v3494 = vld [vmem:[%s9 + $0x38] sm:$0xff]
      %v3495 = vld [vmem:[%s9 + $0x40] sm:$0xff]
      %v3496 = vld [vmem:[%s9 + $0x48] sm:$0xff]
      %v3497 = vld [vmem:[%s9 + $0x50] sm:$0xff]
      %v3498 = vld [vmem:[%s9 + $0x58] sm:$0xff]
      %v3499 = vld [vmem:[%s9 + $0x60] sm:$0xff]
      %v3500 = vld [vmem:[%s9 + $0x68] sm:$0xff]
      %v3501 = vld [vmem:[%s9 + $0x70] sm:$0xff]
      %v3502 = vld [vmem:[%s9 + $0x78] sm:$0xff]
      %v3503 = vld [vmem:[%s9 + $0x80] sm:$0xff]
      %v3504 = vld [vmem:[%s9 + $0x88] sm:$0xff]
      %v3505 = vld [vmem:[%s9 + $0x90] sm:$0xff]
      %v3506 = vld [vmem:[%s9 + $0x98] sm:$0xff]
      %v3507 = vld [vmem:[%s9 + $0xa0] sm:$0xff]
      %v3508 = vld [vmem:[%s9 + $0xa8] sm:$0xff]
      %v3509 = vld [vmem:[%s9 + $0xb0] sm:$0xff]
      %v3510 = vld [vmem:[%s9 + $0xb8] sm:$0xff]
      %v3511 = vld [vmem:[%s9 + $0xc0] sm:$0xff]
      %v3512 = vld [vmem:[%s9 + $0xc8] sm:$0xff]
      %v3513 = vld [vmem:[%s9 + $0xd0] sm:$0xff]
      %v3514 = vld [vmem:[%s9 + $0xd8] sm:$0xff]
      %v3515 = vld [vmem:[%s9 + $0xe0] sm:$0xff]
      %v3516 = vld [vmem:[%s9 + $0xe8] sm:$0xff]
      %v3517 = vld [vmem:[%s9 + $0xf0] sm:$0xff]
      %v3518 = vld [vmem:[%s9 + $0xf8] sm:$0xff]
      %v3519 = vld [vmem:[%s10] sm:$0xf]
      %v3521 = vperm.slane %v3519, 0
      %v3522 = vperm.slane %v3519, 1
      %v3523 = vperm.slane %v3519, 2
      %v3524 = vperm.slane %v3519, 3
      %v3561 = vunpack.c.l.b16 %v3487
      %v3562 = vunpack.c.h.b16 %v3487
      %v3563 = vunpack.c.l.b16 %v3488
      %v3564 = vunpack.c.h.b16 %v3488
      %v3565 = vunpack.c.l.b16 %v3489
      %v3566 = vunpack.c.h.b16 %v3489
      %v3567 = vunpack.c.l.b16 %v3490
      %v3568 = vunpack.c.h.b16 %v3490
      %v3569 = vunpack.c.l.b16 %v3491
      %v3570 = vunpack.c.h.b16 %v3491
      %v3571 = vunpack.c.l.b16 %v3492
      %v3572 = vunpack.c.h.b16 %v3492
      %v3573 = vunpack.c.l.b16 %v3493
      %v3574 = vunpack.c.h.b16 %v3493
      %v3575 = vunpack.c.l.b16 %v3494
      %v3576 = vunpack.c.h.b16 %v3494
      %v3577 = vunpack.c.l.b16 %v3495
      %v3578 = vunpack.c.h.b16 %v3495
      %v3579 = vunpack.c.l.b16 %v3496
      %v3580 = vunpack.c.h.b16 %v3496
      %v3581 = vunpack.c.l.b16 %v3497
      %v3582 = vunpack.c.h.b16 %v3497
      %v3583 = vunpack.c.l.b16 %v3498
      %v3584 = vunpack.c.h.b16 %v3498
      %v3585 = vunpack.c.l.b16 %v3499
      %v3586 = vunpack.c.h.b16 %v3499
      %v3587 = vunpack.c.l.b16 %v3500
      %v3588 = vunpack.c.h.b16 %v3500
      %v3589 = vunpack.c.l.b16 %v3501
      %v3590 = vunpack.c.h.b16 %v3501
      %v3591 = vunpack.c.l.b16 %v3502
      %v3592 = vunpack.c.h.b16 %v3502
      %v3593 = vunpack.c.l.b16 %v3503
      %v3594 = vunpack.c.h.b16 %v3503
      %v3595 = vunpack.c.l.b16 %v3504
      %v3596 = vunpack.c.h.b16 %v3504
      %v3597 = vunpack.c.l.b16 %v3505
      %v3598 = vunpack.c.h.b16 %v3505
      %v3599 = vunpack.c.l.b16 %v3506
      %v3600 = vunpack.c.h.b16 %v3506
      %v3601 = vunpack.c.l.b16 %v3507
      %v3602 = vunpack.c.h.b16 %v3507
      %v3603 = vunpack.c.l.b16 %v3508
      %v3604 = vunpack.c.h.b16 %v3508
      %v3605 = vunpack.c.l.b16 %v3509
      %v3606 = vunpack.c.h.b16 %v3509
      %v3607 = vunpack.c.l.b16 %v3510
      %v3608 = vunpack.c.h.b16 %v3510
      %v3609 = vunpack.c.l.b16 %v3511
      %v3610 = vunpack.c.h.b16 %v3511
      %v3611 = vunpack.c.l.b16 %v3512
      %v3612 = vunpack.c.h.b16 %v3512
      %v3613 = vunpack.c.l.b16 %v3513
      %v3614 = vunpack.c.h.b16 %v3513
      %v3615 = vunpack.c.l.b16 %v3514
      %v3616 = vunpack.c.h.b16 %v3514
      %v3617 = vunpack.c.l.b16 %v3515
      %v3618 = vunpack.c.h.b16 %v3515
      %v3619 = vunpack.c.l.b16 %v3516
      %v3620 = vunpack.c.h.b16 %v3516
      %v3621 = vunpack.c.l.b16 %v3517
      %v3622 = vunpack.c.h.b16 %v3517
      %v3623 = vunpack.c.l.b16 %v3518
      %v3624 = vunpack.c.h.b16 %v3518
      %v3625 = vpack.c.b16 %v3565, %v3561
      %v3626 = vpack.c.b16 %v3566, %v3562
      %v3627 = vpack.c.b16 %v3567, %v3563
      %v3628 = vpack.c.b16 %v3568, %v3564
      %v3629 = vpack.c.b16 %v3573, %v3569
      %v3630 = vpack.c.b16 %v3574, %v3570
      %v3631 = vpack.c.b16 %v3575, %v3571
      %v3632 = vpack.c.b16 %v3576, %v3572
      %v3633 = vpack.c.b16 %v3581, %v3577
      %v3634 = vpack.c.b16 %v3582, %v3578
      %v3635 = vpack.c.b16 %v3583, %v3579
      %v3636 = vpack.c.b16 %v3584, %v3580
      %v3637 = vpack.c.b16 %v3589, %v3585
      %v3638 = vpack.c.b16 %v3590, %v3586
      %v3639 = vpack.c.b16 %v3591, %v3587
      %v3640 = vpack.c.b16 %v3592, %v3588
      %v3641 = vpack.c.b16 %v3597, %v3593
      %v3642 = vpack.c.b16 %v3598, %v3594
      %v3643 = vpack.c.b16 %v3599, %v3595
      %v3644 = vpack.c.b16 %v3600, %v3596
      %v3645 = vpack.c.b16 %v3605, %v3601
      %v3646 = vpack.c.b16 %v3606, %v3602
      %v3647 = vpack.c.b16 %v3607, %v3603
      %v3648 = vpack.c.b16 %v3608, %v3604
      %v3649 = vpack.c.b16 %v3613, %v3609
      %v3650 = vpack.c.b16 %v3614, %v3610
      %v3651 = vpack.c.b16 %v3615, %v3611
      %v3652 = vpack.c.b16 %v3616, %v3612
      %v3653 = vpack.c.b16 %v3621, %v3617
      %v3654 = vpack.c.b16 %v3622, %v3618
      %v3655 = vpack.c.b16 %v3623, %v3619
      %v3656 = vpack.c.b16 %v3624, %v3620
      %3689 = vmatpush.bf16.msra.mxu0 %v3653
      %3690 = vmatpush.bf16.msra.mxu0 %v3649
      %3691 = vmatpush.bf16.msra.mxu0 %v3645
      %3692 = vmatpush.bf16.msra.mxu0 %v3641
      %3693 = vmatpush.bf16.msra.mxu0 %v3637
      %3694 = vmatpush.bf16.msra.mxu0 %v3633
      %3695 = vmatpush.bf16.msra.mxu0 %v3629
      %3696 = vmatpush.bf16.msra.mxu0 %v3625
      %3697 = vmatmul.bf16.gmra.mxu0 %v3479
      %v3698 = vpop.f32.mrf.mxu0
      %v3699 = vadd.f32 %v3521, %v3698
      %v3700 = vpop.f32.mrf.mxu0
      %v3701 = vadd.f32 %v3521, %v3700
      %3702 = vmatmul.bf16.gmra.mxu0 %v3480
      %v3703 = vpop.f32.mrf.mxu0
      %v3704 = vadd.f32 %v3521, %v3703
      %v3705 = vpop.f32.mrf.mxu0
      %v3706 = vadd.f32 %v3521, %v3705
      %3707 = vmatmul.bf16.gmra.mxu0 %v3481
      %v3708 = vpop.f32.mrf.mxu0
      %v3709 = vadd.f32 %v3521, %v3708
      %v3710 = vpop.f32.mrf.mxu0
      %v3711 = vadd.f32 %v3521, %v3710
      %3712 = vmatmul.bf16.gmra.mxu0 %v3482
      %v3713 = vpop.f32.mrf.mxu0
      %v3714 = vadd.f32 %v3521, %v3713
      %v3715 = vpop.f32.mrf.mxu0
      %v3716 = vadd.f32 %v3521, %v3715
      %3717 = vmatmul.bf16.gmra.mxu0 %v3483
      %v3718 = vpop.f32.mrf.mxu0
      %v3719 = vadd.f32 %v3521, %v3718
      %v3720 = vpop.f32.mrf.mxu0
      %v3721 = vadd.f32 %v3521, %v3720
      %3722 = vmatmul.bf16.gmra.mxu0 %v3484
      %v3723 = vpop.f32.mrf.mxu0
      %v3724 = vadd.f32 %v3521, %v3723
      %v3725 = vpop.f32.mrf.mxu0
      %v3726 = vadd.f32 %v3521, %v3725
      %3727 = vmatmul.bf16.gmra.mxu0 %v3485
      %v3728 = vpop.f32.mrf.mxu0
      %v3729 = vadd.f32 %v3521, %v3728
      %v3730 = vpop.f32.mrf.mxu0
      %v3731 = vadd.f32 %v3521, %v3730
      %3732 = vmatmul.bf16.gmra.mxu0 %v3486
      %v3733 = vpop.f32.mrf.mxu0
      %v3734 = vadd.f32 %v3521, %v3733
      %v3735 = vpop.f32.mrf.mxu0
      %v3736 = vadd.f32 %v3521, %v3735
      %3737 = vdwg.mxu0
      %3738 = vmatpush.bf16.msra.mxu0 %v3654
      %3739 = vmatpush.bf16.msra.mxu0 %v3650
      %3740 = vmatpush.bf16.msra.mxu0 %v3646
      %3741 = vmatpush.bf16.msra.mxu0 %v3642
      %3742 = vmatpush.bf16.msra.mxu0 %v3638
      %3743 = vmatpush.bf16.msra.mxu0 %v3634
      %3744 = vmatpush.bf16.msra.mxu0 %v3630
      %3745 = vmatpush.bf16.msra.mxu0 %v3626
      %3746 = vmatmul.bf16.gmra.mxu0 %v3479
      %v3747 = vpop.f32.mrf.mxu0
      %v3748 = vadd.f32 %v3522, %v3747
      %v3749 = vpop.f32.mrf.mxu0
      %v3750 = vadd.f32 %v3522, %v3749
      %3751 = vmatmul.bf16.gmra.mxu0 %v3480
      %v3752 = vpop.f32.mrf.mxu0
      %v3753 = vadd.f32 %v3522, %v3752
      %v3754 = vpop.f32.mrf.mxu0
      %v3755 = vadd.f32 %v3522, %v3754
      %3756 = vmatmul.bf16.gmra.mxu0 %v3481
      %v3757 = vpop.f32.mrf.mxu0
      %v3758 = vadd.f32 %v3522, %v3757
      %v3759 = vpop.f32.mrf.mxu0
      %v3760 = vadd.f32 %v3522, %v3759
      %3761 = vmatmul.bf16.gmra.mxu0 %v3482
      %v3762 = vpop.f32.mrf.mxu0
      %v3763 = vadd.f32 %v3522, %v3762
      %v3764 = vpop.f32.mrf.mxu0
      %v3765 = vadd.f32 %v3522, %v3764
      %3766 = vmatmul.bf16.gmra.mxu0 %v3483
      %v3767 = vpop.f32.mrf.mxu0
      %v3768 = vadd.f32 %v3522, %v3767
      %v3769 = vpop.f32.mrf.mxu0
      %v3770 = vadd.f32 %v3522, %v3769
      %3771 = vmatmul.bf16.gmra.mxu0 %v3484
      %v3772 = vpop.f32.mrf.mxu0
      %v3773 = vadd.f32 %v3522, %v3772
      %v3774 = vpop.f32.mrf.mxu0
      %v3775 = vadd.f32 %v3522, %v3774
      %3776 = vmatmul.bf16.gmra.mxu0 %v3485
      %v3777 = vpop.f32.mrf.mxu0
      %v3778 = vadd.f32 %v3522, %v3777
      %v3779 = vpop.f32.mrf.mxu0
      %v3780 = vadd.f32 %v3522, %v3779
      %3781 = vmatmul.bf16.gmra.mxu0 %v3486
      %v3782 = vpop.f32.mrf.mxu0
      %v3783 = vadd.f32 %v3522, %v3782
      %v3784 = vpop.f32.mrf.mxu0
      %v3785 = vadd.f32 %v3522, %v3784
      %3786 = vdwg.mxu0
      %3787 = vmatpush.bf16.msra.mxu0 %v3655
      %3788 = vmatpush.bf16.msra.mxu0 %v3651
      %3789 = vmatpush.bf16.msra.mxu0 %v3647
      %3790 = vmatpush.bf16.msra.mxu0 %v3643
      %3791 = vmatpush.bf16.msra.mxu0 %v3639
      %3792 = vmatpush.bf16.msra.mxu0 %v3635
      %3793 = vmatpush.bf16.msra.mxu0 %v3631
      %3794 = vmatpush.bf16.msra.mxu0 %v3627
      %3795 = vmatmul.bf16.gmra.mxu0 %v3479
      %v3796 = vpop.f32.mrf.mxu0
      %v3797 = vadd.f32 %v3523, %v3796
      %v3798 = vpop.f32.mrf.mxu0
      %v3799 = vadd.f32 %v3523, %v3798
      %3800 = vmatmul.bf16.gmra.mxu0 %v3480
      %v3801 = vpop.f32.mrf.mxu0
      %v3802 = vadd.f32 %v3523, %v3801
      %v3803 = vpop.f32.mrf.mxu0
      %v3804 = vadd.f32 %v3523, %v3803
      %3805 = vmatmul.bf16.gmra.mxu0 %v3481
      %v3806 = vpop.f32.mrf.mxu0
      %v3807 = vadd.f32 %v3523, %v3806
      %v3808 = vpop.f32.mrf.mxu0
      %v3809 = vadd.f32 %v3523, %v3808
      %3810 = vmatmul.bf16.gmra.mxu0 %v3482
      %v3811 = vpop.f32.mrf.mxu0
      %v3812 = vadd.f32 %v3523, %v3811
      %v3813 = vpop.f32.mrf.mxu0
      %v3814 = vadd.f32 %v3523, %v3813
      %3815 = vmatmul.bf16.gmra.mxu0 %v3483
      %v3816 = vpop.f32.mrf.mxu0
      %v3817 = vadd.f32 %v3523, %v3816
      %v3818 = vpop.f32.mrf.mxu0
      %v3819 = vadd.f32 %v3523, %v3818
      %3820 = vmatmul.bf16.gmra.mxu0 %v3484
      %v3821 = vpop.f32.mrf.mxu0
      %v3822 = vadd.f32 %v3523, %v3821
      %v3823 = vpop.f32.mrf.mxu0
      %v3824 = vadd.f32 %v3523, %v3823
      %3825 = vmatmul.bf16.gmra.mxu0 %v3485
      %v3826 = vpop.f32.mrf.mxu0
      %v3827 = vadd.f32 %v3523, %v3826
      %v3828 = vpop.f32.mrf.mxu0
      %v3829 = vadd.f32 %v3523, %v3828
      %3830 = vmatmul.bf16.gmra.mxu0 %v3486
      %v3831 = vpop.f32.mrf.mxu0
      %v3832 = vadd.f32 %v3523, %v3831
      %v3833 = vpop.f32.mrf.mxu0
      %v3834 = vadd.f32 %v3523, %v3833
      %3835 = vdwg.mxu0
      %3836 = vmatpush.bf16.msra.mxu0 %v3656
      %3837 = vmatpush.bf16.msra.mxu0 %v3652
      %3838 = vmatpush.bf16.msra.mxu0 %v3648
      %3839 = vmatpush.bf16.msra.mxu0 %v3644
      %3840 = vmatpush.bf16.msra.mxu0 %v3640
      %3841 = vmatpush.bf16.msra.mxu0 %v3636
      %3842 = vmatpush.bf16.msra.mxu0 %v3632
      %3843 = vmatpush.bf16.msra.mxu0 %v3628
      %3844 = vmatmul.bf16.gmra.mxu0 %v3479
      %v3845 = vpop.f32.mrf.mxu0
      %v3846 = vadd.f32 %v3524, %v3845
      %v3847 = vpop.f32.mrf.mxu0
      %v3848 = vadd.f32 %v3524, %v3847
      %3849 = vmatmul.bf16.gmra.mxu0 %v3480
      %v3850 = vpop.f32.mrf.mxu0
      %v3851 = vadd.f32 %v3524, %v3850
      %v3852 = vpop.f32.mrf.mxu0
      %v3853 = vadd.f32 %v3524, %v3852
      %3854 = vmatmul.bf16.gmra.mxu0 %v3481
      %v3855 = vpop.f32.mrf.mxu0
      %v3856 = vadd.f32 %v3524, %v3855
      %v3857 = vpop.f32.mrf.mxu0
      %v3858 = vadd.f32 %v3524, %v3857
      %3859 = vmatmul.bf16.gmra.mxu0 %v3482
      %v3860 = vpop.f32.mrf.mxu0
      %v3861 = vadd.f32 %v3524, %v3860
      %v3862 = vpop.f32.mrf.mxu0
      %v3863 = vadd.f32 %v3524, %v3862
      %3864 = vmatmul.bf16.gmra.mxu0 %v3483
      %v3865 = vpop.f32.mrf.mxu0
      %v3866 = vadd.f32 %v3524, %v3865
      %v3867 = vpop.f32.mrf.mxu0
      %v3868 = vadd.f32 %v3524, %v3867
      %3869 = vmatmul.bf16.gmra.mxu0 %v3484
      %v3870 = vpop.f32.mrf.mxu0
      %v3871 = vadd.f32 %v3524, %v3870
      %v3872 = vpop.f32.mrf.mxu0
      %v3873 = vadd.f32 %v3524, %v3872
      %3874 = vmatmul.bf16.gmra.mxu0 %v3485
      %v3875 = vpop.f32.mrf.mxu0
      %v3876 = vadd.f32 %v3524, %v3875
      %v3877 = vpop.f32.mrf.mxu0
      %v3878 = vadd.f32 %v3524, %v3877
      %3879 = vmatmul.bf16.gmra.mxu0 %v3486
      %v3880 = vpop.f32.mrf.mxu0
      %v3881 = vadd.f32 %v3524, %v3880
      %v3882 = vpop.f32.mrf.mxu0
      %v3883 = vadd.f32 %v3524, %v3882
      %3884 = vdwg.mxu0
      %v3885 = vmul.f32 %v3699, 0.5
      %v3886 = vmul.f32 %v3748, 0.5
      %v3887 = vmul.f32 %v3797, 0.5
      %v3888 = vmul.f32 %v3846, 0.5
      %v3889 = vmul.f32 %v3701, 0.5
      %v3890 = vmul.f32 %v3750, 0.5
      %v3891 = vmul.f32 %v3799, 0.5
      %v3892 = vmul.f32 %v3848, 0.5
      %v3893 = vmul.f32 %v3704, 0.5
      %v3894 = vmul.f32 %v3753, 0.5
      %v3895 = vmul.f32 %v3802, 0.5
      %v3896 = vmul.f32 %v3851, 0.5
      %v3897 = vmul.f32 %v3706, 0.5
      %v3898 = vmul.f32 %v3755, 0.5
      %v3899 = vmul.f32 %v3804, 0.5
      %v3900 = vmul.f32 %v3853, 0.5
      %v3901 = vmul.f32 %v3709, 0.5
      %v3902 = vmul.f32 %v3758, 0.5
      %v3903 = vmul.f32 %v3807, 0.5
      %v3904 = vmul.f32 %v3856, 0.5
      %v3905 = vmul.f32 %v3711, 0.5
      %v3906 = vmul.f32 %v3760, 0.5
      %v3907 = vmul.f32 %v3809, 0.5
      %v3908 = vmul.f32 %v3858, 0.5
      %v3909 = vmul.f32 %v3714, 0.5
      %v3910 = vmul.f32 %v3763, 0.5
      %v3911 = vmul.f32 %v3812, 0.5
      %v3912 = vmul.f32 %v3861, 0.5
      %v3913 = vmul.f32 %v3716, 0.5
      %v3914 = vmul.f32 %v3765, 0.5
      %v3915 = vmul.f32 %v3814, 0.5
      %v3916 = vmul.f32 %v3863, 0.5
      %v3917 = vmul.f32 %v3719, 0.5
      %v3918 = vmul.f32 %v3768, 0.5
      %v3919 = vmul.f32 %v3817, 0.5
      %v3920 = vmul.f32 %v3866, 0.5
      %v3921 = vmul.f32 %v3721, 0.5
      %v3922 = vmul.f32 %v3770, 0.5
      %v3923 = vmul.f32 %v3819, 0.5
      %v3924 = vmul.f32 %v3868, 0.5
      %v3925 = vmul.f32 %v3724, 0.5
      %v3926 = vmul.f32 %v3773, 0.5
      %v3927 = vmul.f32 %v3822, 0.5
      %v3928 = vmul.f32 %v3871, 0.5
      %v3929 = vmul.f32 %v3726, 0.5
      %v3930 = vmul.f32 %v3775, 0.5
      %v3931 = vmul.f32 %v3824, 0.5
      %v3932 = vmul.f32 %v3873, 0.5
      %v3933 = vmul.f32 %v3729, 0.5
      %v3934 = vmul.f32 %v3778, 0.5
      %v3935 = vmul.f32 %v3827, 0.5
      %v3936 = vmul.f32 %v3876, 0.5
      %v3937 = vmul.f32 %v3731, 0.5
      %v3938 = vmul.f32 %v3780, 0.5
      %v3939 = vmul.f32 %v3829, 0.5
      %v3940 = vmul.f32 %v3878, 0.5
      %v3941 = vmul.f32 %v3734, 0.5
      %v3942 = vmul.f32 %v3783, 0.5
      %v3943 = vmul.f32 %v3832, 0.5
      %v3944 = vmul.f32 %v3881, 0.5
      %v3945 = vmul.f32 %v3736, 0.5
      %v3946 = vmul.f32 %v3785, 0.5
      %v3947 = vmul.f32 %v3834, 0.5
      %v3948 = vmul.f32 %v3883, 0.5
      %v3949 = vmul.f32 %v3699, 0.044715
      %v3950 = vmul.f32 %v3748, 0.044715
      %v3951 = vmul.f32 %v3797, 0.044715
      %v3952 = vmul.f32 %v3846, 0.044715
      %v3953 = vmul.f32 %v3701, 0.044715
      %v3954 = vmul.f32 %v3750, 0.044715
      %v3955 = vmul.f32 %v3799, 0.044715
      %v3956 = vmul.f32 %v3848, 0.044715
      %v3957 = vmul.f32 %v3704, 0.044715
      %v3958 = vmul.f32 %v3753, 0.044715
      %v3959 = vmul.f32 %v3802, 0.044715
      %v3960 = vmul.f32 %v3851, 0.044715
      %v3961 = vmul.f32 %v3706, 0.044715
      %v3962 = vmul.f32 %v3755, 0.044715
      %v3963 = vmul.f32 %v3804, 0.044715
      %v3964 = vmul.f32 %v3853, 0.044715
      %v3965 = vmul.f32 %v3709, 0.044715
      %v3966 = vmul.f32 %v3758, 0.044715
      %v3967 = vmul.f32 %v3807, 0.044715
      %v3968 = vmul.f32 %v3856, 0.044715
      %v3969 = vmul.f32 %v3711, 0.044715
      %v3970 = vmul.f32 %v3760, 0.044715
      %v3971 = vmul.f32 %v3809, 0.044715
      %v3972 = vmul.f32 %v3858, 0.044715
      %v3973 = vmul.f32 %v3714, 0.044715
      %v3974 = vmul.f32 %v3763, 0.044715
      %v3975 = vmul.f32 %v3812, 0.044715
      %v3976 = vmul.f32 %v3861, 0.044715
      %v3977 = vmul.f32 %v3716, 0.044715
      %v3978 = vmul.f32 %v3765, 0.044715
      %v3979 = vmul.f32 %v3814, 0.044715
      %v3980 = vmul.f32 %v3863, 0.044715
      %v3981 = vmul.f32 %v3719, 0.044715
      %v3982 = vmul.f32 %v3768, 0.044715
      %v3983 = vmul.f32 %v3817, 0.044715
      %v3984 = vmul.f32 %v3866, 0.044715
      %v3985 = vmul.f32 %v3721, 0.044715
      %v3986 = vmul.f32 %v3770, 0.044715
      %v3987 = vmul.f32 %v3819, 0.044715
      %v3988 = vmul.f32 %v3868, 0.044715
      %v3989 = vmul.f32 %v3724, 0.044715
      %v3990 = vmul.f32 %v3773, 0.044715
      %v3991 = vmul.f32 %v3822, 0.044715
      %v3992 = vmul.f32 %v3871, 0.044715
      %v3993 = vmul.f32 %v3726, 0.044715
      %v3994 = vmul.f32 %v3775, 0.044715
      %v3995 = vmul.f32 %v3824, 0.044715
      %v3996 = vmul.f32 %v3873, 0.044715
      %v3997 = vmul.f32 %v3729, 0.044715
      %v3998 = vmul.f32 %v3778, 0.044715
      %v3999 = vmul.f32 %v3827, 0.044715
      %v4000 = vmul.f32 %v3876, 0.044715
      %v4001 = vmul.f32 %v3731, 0.044715
      %v4002 = vmul.f32 %v3780, 0.044715
      %v4003 = vmul.f32 %v3829, 0.044715
      %v4004 = vmul.f32 %v3878, 0.044715
      %v4005 = vmul.f32 %v3734, 0.044715
      %v4006 = vmul.f32 %v3783, 0.044715
      %v4007 = vmul.f32 %v3832, 0.044715
      %v4008 = vmul.f32 %v3881, 0.044715
      %v4009 = vmul.f32 %v3736, 0.044715
      %v4010 = vmul.f32 %v3785, 0.044715
      %v4011 = vmul.f32 %v3834, 0.044715
      %v4012 = vmul.f32 %v3883, 0.044715
      %v4013 = vmul.f32 %v3949, %v3699
      %v4014 = vmul.f32 %v3950, %v3748
      %v4015 = vmul.f32 %v3951, %v3797
      %v4016 = vmul.f32 %v3952, %v3846
      %v4017 = vmul.f32 %v3953, %v3701
      %v4018 = vmul.f32 %v3954, %v3750
      %v4019 = vmul.f32 %v3955, %v3799
      %v4020 = vmul.f32 %v3956, %v3848
      %v4021 = vmul.f32 %v3957, %v3704
      %v4022 = vmul.f32 %v3958, %v3753
      %v4023 = vmul.f32 %v3959, %v3802
      %v4024 = vmul.f32 %v3960, %v3851
      %v4025 = vmul.f32 %v3961, %v3706
      %v4026 = vmul.f32 %v3962, %v3755
      %v4027 = vmul.f32 %v3963, %v3804
      %v4028 = vmul.f32 %v3964, %v3853
      %v4029 = vmul.f32 %v3965, %v3709
      %v4030 = vmul.f32 %v3966, %v3758
      %v4031 = vmul.f32 %v3967, %v3807
      %v4032 = vmul.f32 %v3968, %v3856
      %v4033 = vmul.f32 %v3969, %v3711
      %v4034 = vmul.f32 %v3970, %v3760
      %v4035 = vmul.f32 %v3971, %v3809
      %v4036 = vmul.f32 %v3972, %v3858
      %v4037 = vmul.f32 %v3973, %v3714
      %v4038 = vmul.f32 %v3974, %v3763
      %v4039 = vmul.f32 %v3975, %v3812
      %v4040 = vmul.f32 %v3976, %v3861
      %v4041 = vmul.f32 %v3977, %v3716
      %v4042 = vmul.f32 %v3978, %v3765
      %v4043 = vmul.f32 %v3979, %v3814
      %v4044 = vmul.f32 %v3980, %v3863
      %v4045 = vmul.f32 %v3981, %v3719
      %v4046 = vmul.f32 %v3982, %v3768
      %v4047 = vmul.f32 %v3983, %v3817
      %v4048 = vmul.f32 %v3984, %v3866
      %v4049 = vmul.f32 %v3985, %v3721
      %v4050 = vmul.f32 %v3986, %v3770
      %v4051 = vmul.f32 %v3987, %v3819
      %v4052 = vmul.f32 %v3988, %v3868
      %v4053 = vmul.f32 %v3989, %v3724
      %v4054 = vmul.f32 %v3990, %v3773
      %v4055 = vmul.f32 %v3991, %v3822
      %v4056 = vmul.f32 %v3992, %v3871
      %v4057 = vmul.f32 %v3993, %v3726
      %v4058 = vmul.f32 %v3994, %v3775
      %v4059 = vmul.f32 %v3995, %v3824
      %v4060 = vmul.f32 %v3996, %v3873
      %v4061 = vmul.f32 %v3997, %v3729
      %v4062 = vmul.f32 %v3998, %v3778
      %v4063 = vmul.f32 %v3999, %v3827
      %v4064 = vmul.f32 %v4000, %v3876
      %v4065 = vmul.f32 %v4001, %v3731
      %v4066 = vmul.f32 %v4002, %v3780
      %v4067 = vmul.f32 %v4003, %v3829
      %v4068 = vmul.f32 %v4004, %v3878
      %v4069 = vmul.f32 %v4005, %v3734
      %v4070 = vmul.f32 %v4006, %v3783
      %v4071 = vmul.f32 %v4007, %v3832
      %v4072 = vmul.f32 %v4008, %v3881
      %v4073 = vmul.f32 %v4009, %v3736
      %v4074 = vmul.f32 %v4010, %v3785
      %v4075 = vmul.f32 %v4011, %v3834
      %v4076 = vmul.f32 %v4012, %v3883
      %v4077 = vmul.f32 %v4013, %v3699
      %v4078 = vmul.f32 %v4014, %v3748
      %v4079 = vmul.f32 %v4015, %v3797
      %v4080 = vmul.f32 %v4016, %v3846
      %v4081 = vmul.f32 %v4017, %v3701
      %v4082 = vmul.f32 %v4018, %v3750
      %v4083 = vmul.f32 %v4019, %v3799
      %v4084 = vmul.f32 %v4020, %v3848
      %v4085 = vmul.f32 %v4021, %v3704
      %v4086 = vmul.f32 %v4022, %v3753
      %v4087 = vmul.f32 %v4023, %v3802
      %v4088 = vmul.f32 %v4024, %v3851
      %v4089 = vmul.f32 %v4025, %v3706
      %v4090 = vmul.f32 %v4026, %v3755
      %v4091 = vmul.f32 %v4027, %v3804
      %v4092 = vmul.f32 %v4028, %v3853
      %v4093 = vmul.f32 %v4029, %v3709
      %v4094 = vmul.f32 %v4030, %v3758
      %v4095 = vmul.f32 %v4031, %v3807
      %v4096 = vmul.f32 %v4032, %v3856
      %v4097 = vmul.f32 %v4033, %v3711
      %v4098 = vmul.f32 %v4034, %v3760
      %v4099 = vmul.f32 %v4035, %v3809
      %v4100 = vmul.f32 %v4036, %v3858
      %v4101 = vmul.f32 %v4037, %v3714
      %v4102 = vmul.f32 %v4038, %v3763
      %v4103 = vmul.f32 %v4039, %v3812
      %v4104 = vmul.f32 %v4040, %v3861
      %v4105 = vmul.f32 %v4041, %v3716
      %v4106 = vmul.f32 %v4042, %v3765
      %v4107 = vmul.f32 %v4043, %v3814
      %v4108 = vmul.f32 %v4044, %v3863
      %v4109 = vmul.f32 %v4045, %v3719
      %v4110 = vmul.f32 %v4046, %v3768
      %v4111 = vmul.f32 %v4047, %v3817
      %v4112 = vmul.f32 %v4048, %v3866
      %v4113 = vmul.f32 %v4049, %v3721
      %v4114 = vmul.f32 %v4050, %v3770
      %v4115 = vmul.f32 %v4051, %v3819
      %v4116 = vmul.f32 %v4052, %v3868
      %v4117 = vmul.f32 %v4053, %v3724
      %v4118 = vmul.f32 %v4054, %v3773
      %v4119 = vmul.f32 %v4055, %v3822
      %v4120 = vmul.f32 %v4056, %v3871
      %v4121 = vmul.f32 %v4057, %v3726
      %v4122 = vmul.f32 %v4058, %v3775
      %v4123 = vmul.f32 %v4059, %v3824
      %v4124 = vmul.f32 %v4060, %v3873
      %v4125 = vmul.f32 %v4061, %v3729
      %v4126 = vmul.f32 %v4062, %v3778
      %v4127 = vmul.f32 %v4063, %v3827
      %v4128 = vmul.f32 %v4064, %v3876
      %v4129 = vmul.f32 %v4065, %v3731
      %v4130 = vmul.f32 %v4066, %v3780
      %v4131 = vmul.f32 %v4067, %v3829
      %v4132 = vmul.f32 %v4068, %v3878
      %v4133 = vmul.f32 %v4069, %v3734
      %v4134 = vmul.f32 %v4070, %v3783
      %v4135 = vmul.f32 %v4071, %v3832
      %v4136 = vmul.f32 %v4072, %v3881
      %v4137 = vmul.f32 %v4073, %v3736
      %v4138 = vmul.f32 %v4074, %v3785
      %v4139 = vmul.f32 %v4075, %v3834
      %v4140 = vmul.f32 %v4076, %v3883
      %v4141 = vadd.f32 %v3699, %v4077
      %v4142 = vadd.f32 %v3748, %v4078
      %v4143 = vadd.f32 %v3797, %v4079
      %v4144 = vadd.f32 %v3846, %v4080
      %v4145 = vadd.f32 %v3701, %v4081
      %v4146 = vadd.f32 %v3750, %v4082
      %v4147 = vadd.f32 %v3799, %v4083
      %v4148 = vadd.f32 %v3848, %v4084
      %v4149 = vadd.f32 %v3704, %v4085
      %v4150 = vadd.f32 %v3753, %v4086
      %v4151 = vadd.f32 %v3802, %v4087
      %v4152 = vadd.f32 %v3851, %v4088
      %v4153 = vadd.f32 %v3706, %v4089
      %v4154 = vadd.f32 %v3755, %v4090
      %v4155 = vadd.f32 %v3804, %v4091
      %v4156 = vadd.f32 %v3853, %v4092
      %v4157 = vadd.f32 %v3709, %v4093
      %v4158 = vadd.f32 %v3758, %v4094
      %v4159 = vadd.f32 %v3807, %v4095
      %v4160 = vadd.f32 %v3856, %v4096
      %v4161 = vadd.f32 %v3711, %v4097
      %v4162 = vadd.f32 %v3760, %v4098
      %v4163 = vadd.f32 %v3809, %v4099
      %v4164 = vadd.f32 %v3858, %v4100
      %v4165 = vadd.f32 %v3714, %v4101
      %v4166 = vadd.f32 %v3763, %v4102
      %v4167 = vadd.f32 %v3812, %v4103
      %v4168 = vadd.f32 %v3861, %v4104
      %v4169 = vadd.f32 %v3716, %v4105
      %v4170 = vadd.f32 %v3765, %v4106
      %v4171 = vadd.f32 %v3814, %v4107
      %v4172 = vadd.f32 %v3863, %v4108
      %v4173 = vadd.f32 %v3719, %v4109
      %v4174 = vadd.f32 %v3768, %v4110
      %v4175 = vadd.f32 %v3817, %v4111
      %v4176 = vadd.f32 %v3866, %v4112
      %v4177 = vadd.f32 %v3721, %v4113
      %v4178 = vadd.f32 %v3770, %v4114
      %v4179 = vadd.f32 %v3819, %v4115
      %v4180 = vadd.f32 %v3868, %v4116
      %v4181 = vadd.f32 %v3724, %v4117
      %v4182 = vadd.f32 %v3773, %v4118
      %v4183 = vadd.f32 %v3822, %v4119
      %v4184 = vadd.f32 %v3871, %v4120
      %v4185 = vadd.f32 %v3726, %v4121
      %v4186 = vadd.f32 %v3775, %v4122
      %v4187 = vadd.f32 %v3824, %v4123
      %v4188 = vadd.f32 %v3873, %v4124
      %v4189 = vadd.f32 %v3729, %v4125
      %v4190 = vadd.f32 %v3778, %v4126
      %v4191 = vadd.f32 %v3827, %v4127
      %v4192 = vadd.f32 %v3876, %v4128
      %v4193 = vadd.f32 %v3731, %v4129
      %v4194 = vadd.f32 %v3780, %v4130
      %v4195 = vadd.f32 %v3829, %v4131
      %v4196 = vadd.f32 %v3878, %v4132
      %v4197 = vadd.f32 %v3734, %v4133
      %v4198 = vadd.f32 %v3783, %v4134
      %v4199 = vadd.f32 %v3832, %v4135
      %v4200 = vadd.f32 %v3881, %v4136
      %v4201 = vadd.f32 %v3736, %v4137
      %v4202 = vadd.f32 %v3785, %v4138
      %v4203 = vadd.f32 %v3834, %v4139
      %v4204 = vadd.f32 %v3883, %v4140
      %v4205 = vmul.f32 %v4141, 0.7978846
      %v4206 = vmul.f32 %v4142, 0.7978846
      %v4207 = vmul.f32 %v4143, 0.7978846
      %v4208 = vmul.f32 %v4144, 0.7978846
      %v4209 = vmul.f32 %v4145, 0.7978846
      %v4210 = vmul.f32 %v4146, 0.7978846
      %v4211 = vmul.f32 %v4147, 0.7978846
      %v4212 = vmul.f32 %v4148, 0.7978846
      %v4213 = vmul.f32 %v4149, 0.7978846
      %v4214 = vmul.f32 %v4150, 0.7978846
      %v4215 = vmul.f32 %v4151, 0.7978846
      %v4216 = vmul.f32 %v4152, 0.7978846
      %v4217 = vmul.f32 %v4153, 0.7978846
      %v4218 = vmul.f32 %v4154, 0.7978846
      %v4219 = vmul.f32 %v4155, 0.7978846
      %v4220 = vmul.f32 %v4156, 0.7978846
      %v4221 = vmul.f32 %v4157, 0.7978846
      %v4222 = vmul.f32 %v4158, 0.7978846
      %v4223 = vmul.f32 %v4159, 0.7978846
      %v4224 = vmul.f32 %v4160, 0.7978846
      %v4225 = vmul.f32 %v4161, 0.7978846
      %v4226 = vmul.f32 %v4162, 0.7978846
      %v4227 = vmul.f32 %v4163, 0.7978846
      %v4228 = vmul.f32 %v4164, 0.7978846
      %v4229 = vmul.f32 %v4165, 0.7978846
      %v4230 = vmul.f32 %v4166, 0.7978846
      %v4231 = vmul.f32 %v4167, 0.7978846
      %v4232 = vmul.f32 %v4168, 0.7978846
      %v4233 = vmul.f32 %v4169, 0.7978846
      %v4234 = vmul.f32 %v4170, 0.7978846
      %v4235 = vmul.f32 %v4171, 0.7978846
      %v4236 = vmul.f32 %v4172, 0.7978846
      %v4237 = vmul.f32 %v4173, 0.7978846
      %v4238 = vmul.f32 %v4174, 0.7978846
      %v4239 = vmul.f32 %v4175, 0.7978846
      %v4240 = vmul.f32 %v4176, 0.7978846
      %v4241 = vmul.f32 %v4177, 0.7978846
      %v4242 = vmul.f32 %v4178, 0.7978846
      %v4243 = vmul.f32 %v4179, 0.7978846
      %v4244 = vmul.f32 %v4180, 0.7978846
      %v4245 = vmul.f32 %v4181, 0.7978846
      %v4246 = vmul.f32 %v4182, 0.7978846
      %v4247 = vmul.f32 %v4183, 0.7978846
      %v4248 = vmul.f32 %v4184, 0.7978846
      %v4249 = vmul.f32 %v4185, 0.7978846
      %v4250 = vmul.f32 %v4186, 0.7978846
      %v4251 = vmul.f32 %v4187, 0.7978846
      %v4252 = vmul.f32 %v4188, 0.7978846
      %v4253 = vmul.f32 %v4189, 0.7978846
      %v4254 = vmul.f32 %v4190, 0.7978846
      %v4255 = vmul.f32 %v4191, 0.7978846
      %v4256 = vmul.f32 %v4192, 0.7978846
      %v4257 = vmul.f32 %v4193, 0.7978846
      %v4258 = vmul.f32 %v4194, 0.7978846
      %v4259 = vmul.f32 %v4195, 0.7978846
      %v4260 = vmul.f32 %v4196, 0.7978846
      %v4261 = vmul.f32 %v4197, 0.7978846
      %v4262 = vmul.f32 %v4198, 0.7978846
      %v4263 = vmul.f32 %v4199, 0.7978846
      %v4264 = vmul.f32 %v4200, 0.7978846
      %v4265 = vmul.f32 %v4201, 0.7978846
      %v4266 = vmul.f32 %v4202, 0.7978846
      %v4267 = vmul.f32 %v4203, 0.7978846
      %v4268 = vmul.f32 %v4204, 0.7978846
      %v4269 = vtanh.pop %v4205
      %v4270 = vtanh.pop %v4206
      %v4271 = vtanh.pop %v4207
      %v4272 = vtanh.pop %v4208
      %v4273 = vtanh.pop %v4209
      %v4274 = vtanh.pop %v4210
      %v4275 = vtanh.pop %v4211
      %v4276 = vtanh.pop %v4212
      %v4277 = vtanh.pop %v4213
      %v4278 = vtanh.pop %v4214
      %v4279 = vtanh.pop %v4215
      %v4280 = vtanh.pop %v4216
      %v4281 = vtanh.pop %v4217
      %v4282 = vtanh.pop %v4218
      %v4283 = vtanh.pop %v4219
      %v4284 = vtanh.pop %v4220
      %v4285 = vtanh.pop %v4221
      %v4286 = vtanh.pop %v4222
      %v4287 = vtanh.pop %v4223
      %v4288 = vtanh.pop %v4224
      %v4289 = vtanh.pop %v4225
      %v4290 = vtanh.pop %v4226
      %v4291 = vtanh.pop %v4227
      %v4292 = vtanh.pop %v4228
      %v4293 = vtanh.pop %v4229
      %v4294 = vtanh.pop %v4230
      %v4295 = vtanh.pop %v4231
      %v4296 = vtanh.pop %v4232
      %v4297 = vtanh.pop %v4233
      %v4298 = vtanh.pop %v4234
      %v4299 = vtanh.pop %v4235
      %v4300 = vtanh.pop %v4236
      %v4301 = vtanh.pop %v4237
      %v4302 = vtanh.pop %v4238
      %v4303 = vtanh.pop %v4239
      %v4304 = vtanh.pop %v4240
      %v4305 = vtanh.pop %v4241
      %v4306 = vtanh.pop %v4242
      %v4307 = vtanh.pop %v4243
      %v4308 = vtanh.pop %v4244
      %v4309 = vtanh.pop %v4245
      %v4310 = vtanh.pop %v4246
      %v4311 = vtanh.pop %v4247
      %v4312 = vtanh.pop %v4248
      %v4313 = vtanh.pop %v4249
      %v4314 = vtanh.pop %v4250
      %v4315 = vtanh.pop %v4251
      %v4316 = vtanh.pop %v4252
      %v4317 = vtanh.pop %v4253
      %v4318 = vtanh.pop %v4254
      %v4319 = vtanh.pop %v4255
      %v4320 = vtanh.pop %v4256
      %v4321 = vtanh.pop %v4257
      %v4322 = vtanh.pop %v4258
      %v4323 = vtanh.pop %v4259
      %v4324 = vtanh.pop %v4260
      %v4325 = vtanh.pop %v4261
      %v4326 = vtanh.pop %v4262
      %v4327 = vtanh.pop %v4263
      %v4328 = vtanh.pop %v4264
      %v4329 = vtanh.pop %v4265
      %v4330 = vtanh.pop %v4266
      %v4331 = vtanh.pop %v4267
      %v4332 = vtanh.pop %v4268
      %v4333 = vadd.f32 %v4269, 1.0
      %v4334 = vadd.f32 %v4270, 1.0
      %v4335 = vadd.f32 %v4271, 1.0
      %v4336 = vadd.f32 %v4272, 1.0
      %v4337 = vadd.f32 %v4273, 1.0
      %v4338 = vadd.f32 %v4274, 1.0
      %v4339 = vadd.f32 %v4275, 1.0
      %v4340 = vadd.f32 %v4276, 1.0
      %v4341 = vadd.f32 %v4277, 1.0
      %v4342 = vadd.f32 %v4278, 1.0
      %v4343 = vadd.f32 %v4279, 1.0
      %v4344 = vadd.f32 %v4280, 1.0
      %v4345 = vadd.f32 %v4281, 1.0
      %v4346 = vadd.f32 %v4282, 1.0
      %v4347 = vadd.f32 %v4283, 1.0
      %v4348 = vadd.f32 %v4284, 1.0
      %v4349 = vadd.f32 %v4285, 1.0
      %v4350 = vadd.f32 %v4286, 1.0
      %v4351 = vadd.f32 %v4287, 1.0
      %v4352 = vadd.f32 %v4288, 1.0
      %v4353 = vadd.f32 %v4289, 1.0
      %v4354 = vadd.f32 %v4290, 1.0
      %v4355 = vadd.f32 %v4291, 1.0
      %v4356 = vadd.f32 %v4292, 1.0
      %v4357 = vadd.f32 %v4293, 1.0
      %v4358 = vadd.f32 %v4294, 1.0
      %v4359 = vadd.f32 %v4295, 1.0
      %v4360 = vadd.f32 %v4296, 1.0
      %v4361 = vadd.f32 %v4297, 1.0
      %v4362 = vadd.f32 %v4298, 1.0
      %v4363 = vadd.f32 %v4299, 1.0
      %v4364 = vadd.f32 %v4300, 1.0
      %v4365 = vadd.f32 %v4301, 1.0
      %v4366 = vadd.f32 %v4302, 1.0
      %v4367 = vadd.f32 %v4303, 1.0
      %v4368 = vadd.f32 %v4304, 1.0
      %v4369 = vadd.f32 %v4305, 1.0
      %v4370 = vadd.f32 %v4306, 1.0
      %v4371 = vadd.f32 %v4307, 1.0
      %v4372 = vadd.f32 %v4308, 1.0
      %v4373 = vadd.f32 %v4309, 1.0
      %v4374 = vadd.f32 %v4310, 1.0
      %v4375 = vadd.f32 %v4311, 1.0
      %v4376 = vadd.f32 %v4312, 1.0
      %v4377 = vadd.f32 %v4313, 1.0
      %v4378 = vadd.f32 %v4314, 1.0
      %v4379 = vadd.f32 %v4315, 1.0
      %v4380 = vadd.f32 %v4316, 1.0
      %v4381 = vadd.f32 %v4317, 1.0
      %v4382 = vadd.f32 %v4318, 1.0
      %v4383 = vadd.f32 %v4319, 1.0
      %v4384 = vadd.f32 %v4320, 1.0
      %v4385 = vadd.f32 %v4321, 1.0
      %v4386 = vadd.f32 %v4322, 1.0
      %v4387 = vadd.f32 %v4323, 1.0
      %v4388 = vadd.f32 %v4324, 1.0
      %v4389 = vadd.f32 %v4325, 1.0
      %v4390 = vadd.f32 %v4326, 1.0
      %v4391 = vadd.f32 %v4327, 1.0
      %v4392 = vadd.f32 %v4328, 1.0
      %v4393 = vadd.f32 %v4329, 1.0
      %v4394 = vadd.f32 %v4330, 1.0
      %v4395 = vadd.f32 %v4331, 1.0
      %v4396 = vadd.f32 %v4332, 1.0
      %v4397 = vmul.f32 %v3885, %v4333
      %v4398 = vmul.f32 %v3886, %v4334
      %v4399 = vmul.f32 %v3887, %v4335
      %v4400 = vmul.f32 %v3888, %v4336
      %v4401 = vmul.f32 %v3889, %v4337
      %v4402 = vmul.f32 %v3890, %v4338
      %v4403 = vmul.f32 %v3891, %v4339
      %v4404 = vmul.f32 %v3892, %v4340
      %v4405 = vmul.f32 %v3893, %v4341
      %v4406 = vmul.f32 %v3894, %v4342
      %v4407 = vmul.f32 %v3895, %v4343
      %v4408 = vmul.f32 %v3896, %v4344
      %v4409 = vmul.f32 %v3897, %v4345
      %v4410 = vmul.f32 %v3898, %v4346
      %v4411 = vmul.f32 %v3899, %v4347
      %v4412 = vmul.f32 %v3900, %v4348
      %v4413 = vmul.f32 %v3901, %v4349
      %v4414 = vmul.f32 %v3902, %v4350
      %v4415 = vmul.f32 %v3903, %v4351
      %v4416 = vmul.f32 %v3904, %v4352
      %v4417 = vmul.f32 %v3905, %v4353
      %v4418 = vmul.f32 %v3906, %v4354
      %v4419 = vmul.f32 %v3907, %v4355
      %v4420 = vmul.f32 %v3908, %v4356
      %v4421 = vmul.f32 %v3909, %v4357
      %v4422 = vmul.f32 %v3910, %v4358
      %v4423 = vmul.f32 %v3911, %v4359
      %v4424 = vmul.f32 %v3912, %v4360
      %v4425 = vmul.f32 %v3913, %v4361
      %v4426 = vmul.f32 %v3914, %v4362
      %v4427 = vmul.f32 %v3915, %v4363
      %v4428 = vmul.f32 %v3916, %v4364
      %v4429 = vmul.f32 %v3917, %v4365
      %v4430 = vmul.f32 %v3918, %v4366
      %v4431 = vmul.f32 %v3919, %v4367
      %v4432 = vmul.f32 %v3920, %v4368
      %v4433 = vmul.f32 %v3921, %v4369
      %v4434 = vmul.f32 %v3922, %v4370
      %v4435 = vmul.f32 %v3923, %v4371
      %v4436 = vmul.f32 %v3924, %v4372
      %v4437 = vmul.f32 %v3925, %v4373
      %v4438 = vmul.f32 %v3926, %v4374
      %v4439 = vmul.f32 %v3927, %v4375
      %v4440 = vmul.f32 %v3928, %v4376
      %v4441 = vmul.f32 %v3929, %v4377
      %v4442 = vmul.f32 %v3930, %v4378
      %v4443 = vmul.f32 %v3931, %v4379
      %v4444 = vmul.f32 %v3932, %v4380
      %v4445 = vmul.f32 %v3933, %v4381
      %v4446 = vmul.f32 %v3934, %v4382
      %v4447 = vmul.f32 %v3935, %v4383
      %v4448 = vmul.f32 %v3936, %v4384
      %v4449 = vmul.f32 %v3937, %v4385
      %v4450 = vmul.f32 %v3938, %v4386
      %v4451 = vmul.f32 %v3939, %v4387
      %v4452 = vmul.f32 %v3940, %v4388
      %v4453 = vmul.f32 %v3941, %v4389
      %v4454 = vmul.f32 %v3942, %v4390
      %v4455 = vmul.f32 %v3943, %v4391
      %v4456 = vmul.f32 %v3944, %v4392
      %v4457 = vmul.f32 %v3945, %v4393
      %v4458 = vmul.f32 %v3946, %v4394
      %v4459 = vmul.f32 %v3947, %v4395
      %v4460 = vmul.f32 %v3948, %v4396
      %v4461 = vpack.c.bf16 %v4401, %v4397
      %v4462 = vpack.c.bf16 %v4402, %v4398
      %v4463 = vpack.c.bf16 %v4403, %v4399
      %v4464 = vpack.c.bf16 %v4404, %v4400
      %v4465 = vpack.c.bf16 %v4409, %v4405
      %v4466 = vpack.c.bf16 %v4410, %v4406
      %v4467 = vpack.c.bf16 %v4411, %v4407
      %v4468 = vpack.c.bf16 %v4412, %v4408
      %v4469 = vpack.c.bf16 %v4417, %v4413
      %v4470 = vpack.c.bf16 %v4418, %v4414
      %v4471 = vpack.c.bf16 %v4419, %v4415
      %v4472 = vpack.c.bf16 %v4420, %v4416
      %v4473 = vpack.c.bf16 %v4425, %v4421
      %v4474 = vpack.c.bf16 %v4426, %v4422
      %v4475 = vpack.c.bf16 %v4427, %v4423
      %v4476 = vpack.c.bf16 %v4428, %v4424
      %v4477 = vpack.c.bf16 %v4433, %v4429
      %v4478 = vpack.c.bf16 %v4434, %v4430
      %v4479 = vpack.c.bf16 %v4435, %v4431
      %v4480 = vpack.c.bf16 %v4436, %v4432
      %v4481 = vpack.c.bf16 %v4441, %v4437
      %v4482 = vpack.c.bf16 %v4442, %v4438
      %v4483 = vpack.c.bf16 %v4443, %v4439
      %v4484 = vpack.c.bf16 %v4444, %v4440
      %v4485 = vpack.c.bf16 %v4449, %v4445
      %v4486 = vpack.c.bf16 %v4450, %v4446
      %v4487 = vpack.c.bf16 %v4451, %v4447
      %v4488 = vpack.c.bf16 %v4452, %v4448
      %v4489 = vpack.c.bf16 %v4457, %v4453
      %v4490 = vpack.c.bf16 %v4458, %v4454
      %v4491 = vpack.c.bf16 %v4459, %v4455
      %v4492 = vpack.c.bf16 %v4460, %v4456
      %v4493 = vld [vmem:[%s11] sm:$0xf]
      %v4494 = vld [vmem:[%s11 + $0x4] sm:$0xf]
      %v4495 = vld [vmem:[%s11 + $0x8] sm:$0xf]
      %v4496 = vld [vmem:[%s11 + $0xc] sm:$0xf]
      %v4497 = vld [vmem:[%s11 + $0x10] sm:$0xf]
      %v4498 = vld [vmem:[%s11 + $0x14] sm:$0xf]
      %v4499 = vld [vmem:[%s11 + $0x18] sm:$0xf]
      %v4500 = vld [vmem:[%s11 + $0x1c] sm:$0xf]
      %v4501 = vld [vmem:[%s11 + $0x20] sm:$0xf]
      %v4502 = vld [vmem:[%s11 + $0x24] sm:$0xf]
      %v4503 = vld [vmem:[%s11 + $0x28] sm:$0xf]
      %v4504 = vld [vmem:[%s11 + $0x2c] sm:$0xf]
      %v4505 = vld [vmem:[%s11 + $0x30] sm:$0xf]
      %v4506 = vld [vmem:[%s11 + $0x34] sm:$0xf]
      %v4507 = vld [vmem:[%s11 + $0x38] sm:$0xf]
      %v4508 = vld [vmem:[%s11 + $0x3c] sm:$0xf]
      %v4509 = vld [vmem:[%s11 + $0x40] sm:$0xf]
      %v4510 = vld [vmem:[%s11 + $0x44] sm:$0xf]
      %v4511 = vld [vmem:[%s11 + $0x48] sm:$0xf]
      %v4512 = vld [vmem:[%s11 + $0x4c] sm:$0xf]
      %v4513 = vld [vmem:[%s11 + $0x50] sm:$0xf]
      %v4514 = vld [vmem:[%s11 + $0x54] sm:$0xf]
      %v4515 = vld [vmem:[%s11 + $0x58] sm:$0xf]
      %v4516 = vld [vmem:[%s11 + $0x5c] sm:$0xf]
      %v4517 = vld [vmem:[%s11 + $0x60] sm:$0xf]
      %v4518 = vld [vmem:[%s11 + $0x64] sm:$0xf]
      %v4519 = vld [vmem:[%s11 + $0x68] sm:$0xf]
      %v4520 = vld [vmem:[%s11 + $0x6c] sm:$0xf]
      %v4521 = vld [vmem:[%s11 + $0x70] sm:$0xf]
      %v4522 = vld [vmem:[%s11 + $0x74] sm:$0xf]
      %v4523 = vld [vmem:[%s11 + $0x78] sm:$0xf]
      %v4524 = vld [vmem:[%s11 + $0x7c] sm:$0xf]
      %v4525 = vld [vmem:[%s11 + $0x80] sm:$0xf]
      %v4526 = vld [vmem:[%s11 + $0x84] sm:$0xf]
      %v4527 = vld [vmem:[%s11 + $0x88] sm:$0xf]
      %v4528 = vld [vmem:[%s11 + $0x8c] sm:$0xf]
      %v4529 = vld [vmem:[%s11 + $0x90] sm:$0xf]
      %v4530 = vld [vmem:[%s11 + $0x94] sm:$0xf]
      %v4531 = vld [vmem:[%s11 + $0x98] sm:$0xf]
      %v4532 = vld [vmem:[%s11 + $0x9c] sm:$0xf]
      %v4533 = vld [vmem:[%s11 + $0xa0] sm:$0xf]
      %v4534 = vld [vmem:[%s11 + $0xa4] sm:$0xf]
      %v4535 = vld [vmem:[%s11 + $0xa8] sm:$0xf]
      %v4536 = vld [vmem:[%s11 + $0xac] sm:$0xf]
      %v4537 = vld [vmem:[%s11 + $0xb0] sm:$0xf]
      %v4538 = vld [vmem:[%s11 + $0xb4] sm:$0xf]
      %v4539 = vld [vmem:[%s11 + $0xb8] sm:$0xf]
      %v4540 = vld [vmem:[%s11 + $0xbc] sm:$0xf]
      %v4541 = vld [vmem:[%s11 + $0xc0] sm:$0xf]
      %v4542 = vld [vmem:[%s11 + $0xc4] sm:$0xf]
      %v4543 = vld [vmem:[%s11 + $0xc8] sm:$0xf]
      %v4544 = vld [vmem:[%s11 + $0xcc] sm:$0xf]
      %v4545 = vld [vmem:[%s11 + $0xd0] sm:$0xf]
      %v4546 = vld [vmem:[%s11 + $0xd4] sm:$0xf]
      %v4547 = vld [vmem:[%s11 + $0xd8] sm:$0xf]
      %v4548 = vld [vmem:[%s11 + $0xdc] sm:$0xf]
      %v4549 = vld [vmem:[%s11 + $0xe0] sm:$0xf]
      %v4550 = vld [vmem:[%s11 + $0xe4] sm:$0xf]
      %v4551 = vld [vmem:[%s11 + $0xe8] sm:$0xf]
      %v4552 = vld [vmem:[%s11 + $0xec] sm:$0xf]
      %v4553 = vld [vmem:[%s11 + $0xf0] sm:$0xf]
      %v4554 = vld [vmem:[%s11 + $0xf4] sm:$0xf]
      %v4555 = vld [vmem:[%s11 + $0xf8] sm:$0xf]
      %v4556 = vld [vmem:[%s11 + $0xfc] sm:$0xf]
      %v4621 = vunpack.c.l.b16 %v4493
      %v4622 = vunpack.c.l.b16 %v4494
      %v4623 = vunpack.c.l.b16 %v4495
      %v4624 = vunpack.c.l.b16 %v4496
      %v4625 = vunpack.c.l.b16 %v4497
      %v4626 = vunpack.c.l.b16 %v4498
      %v4627 = vunpack.c.l.b16 %v4499
      %v4628 = vunpack.c.l.b16 %v4500
      %v4629 = vunpack.c.l.b16 %v4501
      %v4630 = vunpack.c.l.b16 %v4502
      %v4631 = vunpack.c.l.b16 %v4503
      %v4632 = vunpack.c.l.b16 %v4504
      %v4633 = vunpack.c.l.b16 %v4505
      %v4634 = vunpack.c.l.b16 %v4506
      %v4635 = vunpack.c.l.b16 %v4507
      %v4636 = vunpack.c.l.b16 %v4508
      %v4637 = vunpack.c.l.b16 %v4509
      %v4638 = vunpack.c.l.b16 %v4510
      %v4639 = vunpack.c.l.b16 %v4511
      %v4640 = vunpack.c.l.b16 %v4512
      %v4641 = vunpack.c.l.b16 %v4513
      %v4642 = vunpack.c.l.b16 %v4514
      %v4643 = vunpack.c.l.b16 %v4515
      %v4644 = vunpack.c.l.b16 %v4516
      %v4645 = vunpack.c.l.b16 %v4517
      %v4646 = vunpack.c.l.b16 %v4518
      %v4647 = vunpack.c.l.b16 %v4519
      %v4648 = vunpack.c.l.b16 %v4520
      %v4649 = vunpack.c.l.b16 %v4521
      %v4650 = vunpack.c.l.b16 %v4522
      %v4651 = vunpack.c.l.b16 %v4523
      %v4652 = vunpack.c.l.b16 %v4524
      %v4653 = vunpack.c.l.b16 %v4525
      %v4654 = vunpack.c.l.b16 %v4526
      %v4655 = vunpack.c.l.b16 %v4527
      %v4656 = vunpack.c.l.b16 %v4528
      %v4657 = vunpack.c.l.b16 %v4529
      %v4658 = vunpack.c.l.b16 %v4530
      %v4659 = vunpack.c.l.b16 %v4531
      %v4660 = vunpack.c.l.b16 %v4532
      %v4661 = vunpack.c.l.b16 %v4533
      %v4662 = vunpack.c.l.b16 %v4534
      %v4663 = vunpack.c.l.b16 %v4535
      %v4664 = vunpack.c.l.b16 %v4536
      %v4665 = vunpack.c.l.b16 %v4537
      %v4666 = vunpack.c.l.b16 %v4538
      %v4667 = vunpack.c.l.b16 %v4539
      %v4668 = vunpack.c.l.b16 %v4540
      %v4669 = vunpack.c.l.b16 %v4541
      %v4670 = vunpack.c.l.b16 %v4542
      %v4671 = vunpack.c.l.b16 %v4543
      %v4672 = vunpack.c.l.b16 %v4544
      %v4673 = vunpack.c.l.b16 %v4545
      %v4674 = vunpack.c.l.b16 %v4546
      %v4675 = vunpack.c.l.b16 %v4547
      %v4676 = vunpack.c.l.b16 %v4548
      %v4677 = vunpack.c.l.b16 %v4549
      %v4678 = vunpack.c.l.b16 %v4550
      %v4679 = vunpack.c.l.b16 %v4551
      %v4680 = vunpack.c.l.b16 %v4552
      %v4681 = vunpack.c.l.b16 %v4553
      %v4682 = vunpack.c.l.b16 %v4554
      %v4683 = vunpack.c.l.b16 %v4555
      %v4684 = vunpack.c.l.b16 %v4556
      %v4685 = vpack.c.b16 %v4622, %v4621
      %v4686 = vpack.c.b16 %v4624, %v4623
      %v4687 = vpack.c.b16 %v4626, %v4625
      %v4688 = vpack.c.b16 %v4628, %v4627
      %v4689 = vpack.c.b16 %v4630, %v4629
      %v4690 = vpack.c.b16 %v4632, %v4631
      %v4691 = vpack.c.b16 %v4634, %v4633
      %v4692 = vpack.c.b16 %v4636, %v4635
      %v4693 = vpack.c.b16 %v4638, %v4637
      %v4694 = vpack.c.b16 %v4640, %v4639
      %v4695 = vpack.c.b16 %v4642, %v4641
      %v4696 = vpack.c.b16 %v4644, %v4643
      %v4697 = vpack.c.b16 %v4646, %v4645
      %v4698 = vpack.c.b16 %v4648, %v4647
      %v4699 = vpack.c.b16 %v4650, %v4649
      %v4700 = vpack.c.b16 %v4652, %v4651
      %v4701 = vpack.c.b16 %v4654, %v4653
      %v4702 = vpack.c.b16 %v4656, %v4655
      %v4703 = vpack.c.b16 %v4658, %v4657
      %v4704 = vpack.c.b16 %v4660, %v4659
      %v4705 = vpack.c.b16 %v4662, %v4661
      %v4706 = vpack.c.b16 %v4664, %v4663
      %v4707 = vpack.c.b16 %v4666, %v4665
      %v4708 = vpack.c.b16 %v4668, %v4667
      %v4709 = vpack.c.b16 %v4670, %v4669
      %v4710 = vpack.c.b16 %v4672, %v4671
      %v4711 = vpack.c.b16 %v4674, %v4673
      %v4712 = vpack.c.b16 %v4676, %v4675
      %v4713 = vpack.c.b16 %v4678, %v4677
      %v4714 = vpack.c.b16 %v4680, %v4679
      %v4715 = vpack.c.b16 %v4682, %v4681
      %v4716 = vpack.c.b16 %v4684, %v4683
      %4749 = vmatpush.bf16.msra.mxu0 %v4692
      %4750 = vmatpush.bf16.msra.mxu0 %v4691
      %4751 = vmatpush.bf16.msra.mxu0 %v4690
      %4752 = vmatpush.bf16.msra.mxu0 %v4689
      %4753 = vmatpush.bf16.msra.mxu0 %v4688
      %4754 = vmatpush.bf16.msra.mxu0 %v4687
      %4755 = vmatpush.bf16.msra.mxu0 %v4686
      %4756 = vmatpush.bf16.msra.mxu0 %v4685
      %4757 = vmatmul.bf16.gmra.mxu0 %v4461
      %v4758 = vpop.f32.mrf.mxu0
      %v4759 = vadd.f32 0.0, %v4758
      %v4760 = vpop.f32.mrf.mxu0
      %v4761 = vadd.f32 0.0, %v4760
      %4762 = vmatmul.bf16.gmra.mxu0 %v4465
      %v4763 = vpop.f32.mrf.mxu0
      %v4764 = vadd.f32 0.0, %v4763
      %v4765 = vpop.f32.mrf.mxu0
      %v4766 = vadd.f32 0.0, %v4765
      %4767 = vmatmul.bf16.gmra.mxu0 %v4469
      %v4768 = vpop.f32.mrf.mxu0
      %v4769 = vadd.f32 0.0, %v4768
      %v4770 = vpop.f32.mrf.mxu0
      %v4771 = vadd.f32 0.0, %v4770
      %4772 = vmatmul.bf16.gmra.mxu0 %v4473
      %v4773 = vpop.f32.mrf.mxu0
      %v4774 = vadd.f32 0.0, %v4773
      %v4775 = vpop.f32.mrf.mxu0
      %v4776 = vadd.f32 0.0, %v4775
      %4777 = vmatmul.bf16.gmra.mxu0 %v4477
      %v4778 = vpop.f32.mrf.mxu0
      %v4779 = vadd.f32 0.0, %v4778
      %v4780 = vpop.f32.mrf.mxu0
      %v4781 = vadd.f32 0.0, %v4780
      %4782 = vmatmul.bf16.gmra.mxu0 %v4481
      %v4783 = vpop.f32.mrf.mxu0
      %v4784 = vadd.f32 0.0, %v4783
      %v4785 = vpop.f32.mrf.mxu0
      %v4786 = vadd.f32 0.0, %v4785
      %4787 = vmatmul.bf16.gmra.mxu0 %v4485
      %v4788 = vpop.f32.mrf.mxu0
      %v4789 = vadd.f32 0.0, %v4788
      %v4790 = vpop.f32.mrf.mxu0
      %v4791 = vadd.f32 0.0, %v4790
      %4792 = vmatmul.bf16.gmra.mxu0 %v4489
      %v4793 = vpop.f32.mrf.mxu0
      %v4794 = vadd.f32 0.0, %v4793
      %v4795 = vpop.f32.mrf.mxu0
      %v4796 = vadd.f32 0.0, %v4795
      %4797 = vdwg.mxu0
      %4798 = vmatpush.bf16.msra.mxu0 %v4700
      %4799 = vmatpush.bf16.msra.mxu0 %v4699
      %4800 = vmatpush.bf16.msra.mxu0 %v4698
      %4801 = vmatpush.bf16.msra.mxu0 %v4697
      %4802 = vmatpush.bf16.msra.mxu0 %v4696
      %4803 = vmatpush.bf16.msra.mxu0 %v4695
      %4804 = vmatpush.bf16.msra.mxu0 %v4694
      %4805 = vmatpush.bf16.msra.mxu0 %v4693
      %4806 = vmatmul.bf16.gmra.mxu0 %v4462
      %v4807 = vpop.f32.mrf.mxu0
      %v4808 = vadd.f32 %v4759, %v4807
      %v4809 = vpop.f32.mrf.mxu0
      %v4810 = vadd.f32 %v4761, %v4809
      %4811 = vmatmul.bf16.gmra.mxu0 %v4466
      %v4812 = vpop.f32.mrf.mxu0
      %v4813 = vadd.f32 %v4764, %v4812
      %v4814 = vpop.f32.mrf.mxu0
      %v4815 = vadd.f32 %v4766, %v4814
      %4816 = vmatmul.bf16.gmra.mxu0 %v4470
      %v4817 = vpop.f32.mrf.mxu0
      %v4818 = vadd.f32 %v4769, %v4817
      %v4819 = vpop.f32.mrf.mxu0
      %v4820 = vadd.f32 %v4771, %v4819
      %4821 = vmatmul.bf16.gmra.mxu0 %v4474
      %v4822 = vpop.f32.mrf.mxu0
      %v4823 = vadd.f32 %v4774, %v4822
      %v4824 = vpop.f32.mrf.mxu0
      %v4825 = vadd.f32 %v4776, %v4824
      %4826 = vmatmul.bf16.gmra.mxu0 %v4478
      %v4827 = vpop.f32.mrf.mxu0
      %v4828 = vadd.f32 %v4779, %v4827
      %v4829 = vpop.f32.mrf.mxu0
      %v4830 = vadd.f32 %v4781, %v4829
      %4831 = vmatmul.bf16.gmra.mxu0 %v4482
      %v4832 = vpop.f32.mrf.mxu0
      %v4833 = vadd.f32 %v4784, %v4832
      %v4834 = vpop.f32.mrf.mxu0
      %v4835 = vadd.f32 %v4786, %v4834
      %4836 = vmatmul.bf16.gmra.mxu0 %v4486
      %v4837 = vpop.f32.mrf.mxu0
      %v4838 = vadd.f32 %v4789, %v4837
      %v4839 = vpop.f32.mrf.mxu0
      %v4840 = vadd.f32 %v4791, %v4839
      %4841 = vmatmul.bf16.gmra.mxu0 %v4490
      %v4842 = vpop.f32.mrf.mxu0
      %v4843 = vadd.f32 %v4794, %v4842
      %v4844 = vpop.f32.mrf.mxu0
      %v4845 = vadd.f32 %v4796, %v4844
      %4846 = vdwg.mxu0
      %4847 = vmatpush.bf16.msra.mxu0 %v4708
      %4848 = vmatpush.bf16.msra.mxu0 %v4707
      %4849 = vmatpush.bf16.msra.mxu0 %v4706
      %4850 = vmatpush.bf16.msra.mxu0 %v4705
      %4851 = vmatpush.bf16.msra.mxu0 %v4704
      %4852 = vmatpush.bf16.msra.mxu0 %v4703
      %4853 = vmatpush.bf16.msra.mxu0 %v4702
      %4854 = vmatpush.bf16.msra.mxu0 %v4701
      %4855 = vmatmul.bf16.gmra.mxu0 %v4463
      %v4856 = vpop.f32.mrf.mxu0
      %v4857 = vadd.f32 %v4808, %v4856
      %v4858 = vpop.f32.mrf.mxu0
      %v4859 = vadd.f32 %v4810, %v4858
      %4860 = vmatmul.bf16.gmra.mxu0 %v4467
      %v4861 = vpop.f32.mrf.mxu0
      %v4862 = vadd.f32 %v4813, %v4861
      %v4863 = vpop.f32.mrf.mxu0
      %v4864 = vadd.f32 %v4815, %v4863
      %4865 = vmatmul.bf16.gmra.mxu0 %v4471
      %v4866 = vpop.f32.mrf.mxu0
      %v4867 = vadd.f32 %v4818, %v4866
      %v4868 = vpop.f32.mrf.mxu0
      %v4869 = vadd.f32 %v4820, %v4868
      %4870 = vmatmul.bf16.gmra.mxu0 %v4475
      %v4871 = vpop.f32.mrf.mxu0
      %v4872 = vadd.f32 %v4823, %v4871
      %v4873 = vpop.f32.mrf.mxu0
      %v4874 = vadd.f32 %v4825, %v4873
      %4875 = vmatmul.bf16.gmra.mxu0 %v4479
      %v4876 = vpop.f32.mrf.mxu0
      %v4877 = vadd.f32 %v4828, %v4876
      %v4878 = vpop.f32.mrf.mxu0
      %v4879 = vadd.f32 %v4830, %v4878
      %4880 = vmatmul.bf16.gmra.mxu0 %v4483
      %v4881 = vpop.f32.mrf.mxu0
      %v4882 = vadd.f32 %v4833, %v4881
      %v4883 = vpop.f32.mrf.mxu0
      %v4884 = vadd.f32 %v4835, %v4883
      %4885 = vmatmul.bf16.gmra.mxu0 %v4487
      %v4886 = vpop.f32.mrf.mxu0
      %v4887 = vadd.f32 %v4838, %v4886
      %v4888 = vpop.f32.mrf.mxu0
      %v4889 = vadd.f32 %v4840, %v4888
      %4890 = vmatmul.bf16.gmra.mxu0 %v4491
      %v4891 = vpop.f32.mrf.mxu0
      %v4892 = vadd.f32 %v4843, %v4891
      %v4893 = vpop.f32.mrf.mxu0
      %v4894 = vadd.f32 %v4845, %v4893
      %4895 = vdwg.mxu0
      %4896 = vmatpush.bf16.msra.mxu0 %v4716
      %4897 = vmatpush.bf16.msra.mxu0 %v4715
      %4898 = vmatpush.bf16.msra.mxu0 %v4714
      %4899 = vmatpush.bf16.msra.mxu0 %v4713
      %4900 = vmatpush.bf16.msra.mxu0 %v4712
      %4901 = vmatpush.bf16.msra.mxu0 %v4711
      %4902 = vmatpush.bf16.msra.mxu0 %v4710
      %4903 = vmatpush.bf16.msra.mxu0 %v4709
      %4904 = vmatmul.bf16.gmra.mxu0 %v4464
      %v4905 = vpop.f32.mrf.mxu0
      %v4906 = vadd.f32 %v4857, %v4905
      %v4907 = vpop.f32.mrf.mxu0
      %v4908 = vadd.f32 %v4859, %v4907
      %4909 = vmatmul.bf16.gmra.mxu0 %v4468
      %v4910 = vpop.f32.mrf.mxu0
      %v4911 = vadd.f32 %v4862, %v4910
      %v4912 = vpop.f32.mrf.mxu0
      %v4913 = vadd.f32 %v4864, %v4912
      %4914 = vmatmul.bf16.gmra.mxu0 %v4472
      %v4915 = vpop.f32.mrf.mxu0
      %v4916 = vadd.f32 %v4867, %v4915
      %v4917 = vpop.f32.mrf.mxu0
      %v4918 = vadd.f32 %v4869, %v4917
      %4919 = vmatmul.bf16.gmra.mxu0 %v4476
      %v4920 = vpop.f32.mrf.mxu0
      %v4921 = vadd.f32 %v4872, %v4920
      %v4922 = vpop.f32.mrf.mxu0
      %v4923 = vadd.f32 %v4874, %v4922
      %4924 = vmatmul.bf16.gmra.mxu0 %v4480
      %v4925 = vpop.f32.mrf.mxu0
      %v4926 = vadd.f32 %v4877, %v4925
      %v4927 = vpop.f32.mrf.mxu0
      %v4928 = vadd.f32 %v4879, %v4927
      %4929 = vmatmul.bf16.gmra.mxu0 %v4484
      %v4930 = vpop.f32.mrf.mxu0
      %v4931 = vadd.f32 %v4882, %v4930
      %v4932 = vpop.f32.mrf.mxu0
      %v4933 = vadd.f32 %v4884, %v4932
      %4934 = vmatmul.bf16.gmra.mxu0 %v4488
      %v4935 = vpop.f32.mrf.mxu0
      %v4936 = vadd.f32 %v4887, %v4935
      %v4937 = vpop.f32.mrf.mxu0
      %v4938 = vadd.f32 %v4889, %v4937
      %4939 = vmatmul.bf16.gmra.mxu0 %v4492
      %v4940 = vpop.f32.mrf.mxu0
      %v4941 = vadd.f32 %v4892, %v4940
      %v4942 = vpop.f32.mrf.mxu0
      %v4943 = vadd.f32 %v4894, %v4942
      %4944 = vdwg.mxu0
      %v4945 = vadd.f32 %v3103, %v4906
      %v4946 = vadd.f32 %v3104, %v4908
      %v4947 = vadd.f32 %v3105, %v4911
      %v4948 = vadd.f32 %v3106, %v4913
      %v4949 = vadd.f32 %v3107, %v4916
      %v4950 = vadd.f32 %v3108, %v4918
      %v4951 = vadd.f32 %v3109, %v4921
      %v4952 = vadd.f32 %v3110, %v4923
      %v4953 = vadd.f32 %v3111, %v4926
      %v4954 = vadd.f32 %v3112, %v4928
      %v4955 = vadd.f32 %v3113, %v4931
      %v4956 = vadd.f32 %v3114, %v4933
      %v4957 = vadd.f32 %v3115, %v4936
      %v4958 = vadd.f32 %v3116, %v4938
      %v4959 = vadd.f32 %v3117, %v4941
      %v4960 = vadd.f32 %v3118, %v4943
      %v4961 = vld [vmem:[%s12] sm:$0x1]
      %v4963 = vperm.slane %v4961, 0
      %v4965 = vadd.f32 %v4945, %v4963
      %v4966 = vadd.f32 %v4946, %v4963
      %v4967 = vadd.f32 %v4947, %v4963
      %v4968 = vadd.f32 %v4948, %v4963
      %v4969 = vadd.f32 %v4949, %v4963
      %v4970 = vadd.f32 %v4950, %v4963
      %v4971 = vadd.f32 %v4951, %v4963
      %v4972 = vadd.f32 %v4952, %v4963
      %v4973 = vadd.f32 %v4953, %v4963
      %v4974 = vadd.f32 %v4954, %v4963
      %v4975 = vadd.f32 %v4955, %v4963
      %v4976 = vadd.f32 %v4956, %v4963
      %v4977 = vadd.f32 %v4957, %v4963
      %v4978 = vadd.f32 %v4958, %v4963
      %v4979 = vadd.f32 %v4959, %v4963
      %v4980 = vadd.f32 %v4960, %v4963
      %4981 = vst [vmem:[%s440] sm:$0xff] %v4965
      %4982 = vst [vmem:[%s440 + $0x8] sm:$0xff] %v4966
      %4983 = vst [vmem:[%s440 + $0x10] sm:$0xff] %v4967
      %4984 = vst [vmem:[%s440 + $0x18] sm:$0xff] %v4968
      %4985 = vst [vmem:[%s440 + $0x20] sm:$0xff] %v4969
      %4986 = vst [vmem:[%s440 + $0x28] sm:$0xff] %v4970
      %4987 = vst [vmem:[%s440 + $0x30] sm:$0xff] %v4971
      %4988 = vst [vmem:[%s440 + $0x38] sm:$0xff] %v4972
      %4989 = vst [vmem:[%s440 + $0x40] sm:$0xff] %v4973
      %4990 = vst [vmem:[%s440 + $0x48] sm:$0xff] %v4974
      %4991 = vst [vmem:[%s440 + $0x50] sm:$0xff] %v4975
      %4992 = vst [vmem:[%s440 + $0x58] sm:$0xff] %v4976
      %4993 = vst [vmem:[%s440 + $0x60] sm:$0xff] %v4977
      %4994 = vst [vmem:[%s440 + $0x68] sm:$0xff] %v4978
      %4995 = vst [vmem:[%s440 + $0x70] sm:$0xff] %v4979
      %4996 = vst [vmem:[%s440 + $0x78] sm:$0xff] %v4980
      %p4997 = scmp.lt.s32.totalorder %s24, 1
      %s4998 = scalar_select %p4997, %s24, 1
      %s4999 = smul.addr %s4998, 16
      %s5000 = smul.addr %s4999, 8
      %s5001 = scalar_lea.vmem %s13, %s5000
      // Predicated region
      $region73: #{vit_forward.5} parent=71 // pred_check
        %p5002 = pneg %p320
      $region74: #{vit_forward.5} parent=71 // pred_check_branch
        %5004 = sbr.rel (%p5002) target = $region76
      $region75: #{vit_forward.5} parent=71 // pred_region
        _
      $region76: #{vit_forward.5} parent=71 // pred_fallthru
        _
    $region72: #{vit_forward.5} parent=5 // pred_fallthru
      _
    %p5005 = scmp.le.s32.totalorder 2, %s19
    // Predicated region
    $region77: #{vit_forward.5} parent=5 // pred_check
      %p5006 = pneg %p5005
    $region78: #{vit_forward.5} parent=5 // pred_check_branch
      %5008 = sbr.rel (%p5006) target = $region80
    $region79: #{vit_forward.5} parent=5 // pred_region
      %s5009 = ssub.s32 %s19, 2
      // Predicated region
      $region81: #{vit_forward.5} parent=79 // pred_check
        %p5010 = pneg %p326
      $region82: #{vit_forward.5} parent=79 // pred_check_branch
        %5012 = sbr.rel (%p5010) target = $region84
      $region83: #{vit_forward.5} parent=79 // pred_region
        %p5013 = scmp.lt.s32.totalorder %s25, 1
        %s5014 = scalar_select %p5013, %s25, 1
        %s5015 = smul.addr %s5014, 16
        %s5016 = smul.addr %s5015, 8
        %s5017 = scalar_lea.vmem %s13, %s5016
      $region84: #{vit_forward.5} parent=79 // pred_fallthru
        _
    $region80: #{vit_forward.5} parent=5 // pred_fallthru
      _
  $region6: #{vit_forward.5} parent=0 // loop_footer
    %s23 = sadd.s32 1, %s19
  $region7: #{vit_forward.5} parent=0 // loop_footer_branch
    %18 = sbr.rel target = $region3
  $region8: #{vit_forward.5} parent=0 // loop_exit
    _

</llo_original>
